<compile_context>
chip_gen: v7x
topology: tpu7x:2x2x1
jax: 0.10.0
libtpu: 0.0.40
codegen_flags: <defaults>
</compile_context>

<pallas_src>
import functools

import jax
import jax.numpy as jnp
from jax.experimental import pallas as pl
from jax.experimental.pallas import tpu as pltpu


def _repeat_lanes_kernel(x_ref, o_ref, *, scale):
    """x_ref: (TR, TL); o_ref: (TR, scale*TL); out[r, j] = x[r, j // scale]."""
    x = x_ref[...]
    # Nearest-neighbour repeat along the lane axis: broadcast a trailing
    # size-`scale` axis and collapse it back onto the (lane-dense) lane axis.
    # TODO(synk): audit this lowering with pl.lower_as_mlir on a production
    # shape; if Mosaic materializes a relayout / VMEM round-trip here, switch
    # to a dtype-specific pack (pltpu.pack_elementwise / pltpu.bitcast for
    # 16/8-bit dtypes, S in {2,4}) or strided lane stores once verified.
    y = jnp.broadcast_to(x[..., None], x.shape + (scale,))
    o_ref[...] = y.reshape(o_ref.shape).astype(o_ref.dtype)


def _round_up(x, m):
    return ((x + m - 1) // m) * m


def _vmem_capacity_bytes():
    """Physical VMEM of the local TPU; conservative (v7x, 64 MiB) fallback."""
    try:
        info = pltpu.get_tpu_info()
        cap = getattr(info, "vmem_capacity_bytes", None)
        if cap:
            return int(cap)
    except Exception:
        pass
    return 64 * 1024 * 1024


def _lane_fold(D, W):
    """Divisor g of D folded onto the lane axis.

    Preference:
      1. g*W a multiple of 128 (unmasked full-width vector loads/stores),
         as close to ~512 input lanes as possible (fewer, longer DMAs),
      2. smallest g with g*W >= 128 (at least lane-dense output),
      3. g = D (tiny inputs; handled by full-extent blocks / lane tiling).
    """
    divisors = [g for g in range(1, D + 1) if D % g == 0]
    mult128 = [g for g in divisors if (g * W) % 128 == 0]
    if mult128:
        return min(mult128, key=lambda g: (abs(g * W - 512), g))
    wide = [g for g in divisors if g * W >= 128]
    if wide:
        return wide[0]
    return D


def _tiles(rows, lanes, scale, itemsize, budget):
    """(row_tile, lane_tile) for the 2-D grid.

    Footprint per (row, input-lane) element: 2x double-buffered input,
    2x double-buffered (scale x wider) output, plus one output-sized slab of
    headroom for the in-register expand/relayout.
    """
    per_elem = itemsize * (2 * (1 + scale) + scale)

    # Lane tile: full fold width unless that would squeeze the row tile below
    # 32 rows; then tile the lane axis in multiples of 128. This keeps very
    # wide folds (prime D, huge D*W) within the scoped VMEM limit.
    max_lane = max(budget // (32 * per_elem), 128)
    if lanes > max_lane:
        tl = max((max_lane // 128) * 128, 128)
    else:
        tl = lanes

    # Row tile: as large as the budget allows, rounded to a multiple of 32,
    # but clamped so the row axis keeps >= ~4 grid steps (double-buffer
    # overlap + both TensorCores on v7x).
    tr = max(budget // (per_elem * tl), 1)
    if rows >= 64:
        tr = min(tr, _round_up(-(-rows // 4), 32))
        tr = max((tr // 32) * 32, 32)
        tr = min(tr, rows)
    else:
        tr = rows  # tiny case: block equals full row extent (still legal tiling)
    return int(tr), int(tl)


def anisotropic_upsample_2d(x, scale_factor):
    """x: (N, C, D, W) -> (N, C, D, scale_factor * W), nearest upsample on W."""
    N, C, D, W = x.shape
    S = int(scale_factor)
    if S == 1:
        return x

    itemsize = x.dtype.itemsize
    g = _lane_fold(D, W)             # how much of D to fold onto the lane axis
    rows = N * C * (D // g)          # row / outer grid axis
    lanes = g * W                    # input lane width; output is S * lanes

    # Generation-aware budgets: v5e/v6e have 128 MiB physical VMEM, v7x 64 MiB.
    phys_vmem = _vmem_capacity_bytes()
    if phys_vmem >= 96 * 1024 * 1024:          # v5e / v6e
        budget = 28 * 1024 * 1024
        limit_cap = 96 * 1024 * 1024
    else:                                      # v7x
        budget = 14 * 1024 * 1024
        limit_cap = 44 * 1024 * 1024

    tr, tl = _tiles(rows, lanes, S, itemsize, budget)
    vmem_limit = int(min(limit_cap, max(32 * 1024 * 1024, 2 * budget)))

    x2 = x.reshape(rows, lanes)      # contiguous: metadata-only reshape

    grid = (pl.cdiv(rows, tr), pl.cdiv(lanes, tl))

    out2 = pl.pallas_call(
        functools.partial(_repeat_lanes_kernel, scale=S),
        out_shape=jax.ShapeDtypeStruct((rows, S * lanes), x.dtype),
        grid_spec=pl.GridSpec(
            grid=grid,
            in_specs=[pl.BlockSpec((tr, tl), lambda i, j: (i, j))],
            out_specs=pl.BlockSpec((tr, S * tl), lambda i, j: (i, j)),
        ),
        compiler_params=pltpu.CompilerParams(
            # Both grid axes are fully independent -> pipeline freely and
            # shard across both TensorCores on v7x.
            dimension_semantics=("parallel", "parallel"),
            # Derived from the actual double-buffered tile footprint; larger
            # on 128-MiB chips, headroom-preserving on v7x's 64 MiB.
            vmem_limit_bytes=vmem_limit,
        ),
        # Pure data movement: tell XLA's scheduler this call is bandwidth-bound.
        cost_estimate=pl.CostEstimate(
            flops=0,
            transcendentals=0,
            bytes_accessed=int((1 + S) * rows * lanes * itemsize),
        ),
    )(x2)

    return out2.reshape(N, C, D, S * W)   # contiguous: metadata-only reshape


if __name__ == "__main__":
    key = jax.random.PRNGKey(0)
    N, C, D, W = 2, 4, 16, 16
    scale_factor = 2

    x = jax.random.normal(key, (N, C, D, W), dtype=jnp.float32)

    out = anisotropic_upsample_2d(x, scale_factor)
    out = jax.block_until_ready(out)

    # Reference: nearest-neighbour repeat along W (matches nn.Upsample on 3D input).
    ref = jnp.repeat(x, scale_factor, axis=-1)
    assert out.shape == (N, C, D, scale_factor * W), out.shape
    assert out.dtype == x.dtype
    assert bool(jnp.allclose(out, ref)), "mismatch vs reference"

    print("KERNEL_OK")
</pallas_src>

<mosaic_0001>
module attributes {stable_mosaic.version = 11 : i64} {
  func.func @_repeat_lanes_kernel(%arg0: i32, %arg1: i32, %arg2: memref<8x256xf32, #tpu.memory_space<vmem>>, %arg3: memref<8x512xf32, #tpu.memory_space<vmem>>) attributes {dimension_semantics = [#tpu.dimension_semantics<parallel>, #tpu.dimension_semantics<parallel>], iteration_bounds = array<i64: 1, 1>, scalar_prefetch = 0 : i64, scratch_operands = 0 : i64, tpu.core_type = #tpu.core_type<tc>, window_params = [{transform_indices = @transform_0, window_bounds = array<i64: 8, 256>}, {transform_indices = @transform_1, window_bounds = array<i64: 8, 512>}]} {
    %c0 = arith.constant 0 : index
    %c0_0 = arith.constant 0 : index
    %0 = vector.load %arg2[%c0, %c0_0] : memref<8x256xf32, #tpu.memory_space<vmem>>, vector<8x256xf32>
    %1 = vector.shape_cast %0 : vector<8x256xf32> to vector<8x256x1xf32>
    %2 = vector.shape_cast %1 : vector<8x256x1xf32> to vector<8x256x1xf32>
    %3 = vector.broadcast %2 : vector<8x256x1xf32> to vector<8x256x2xf32>
    %4 = vector.shape_cast %3 : vector<8x256x2xf32> to vector<8x512xf32>
    %c0_1 = arith.constant 0 : index
    %c0_2 = arith.constant 0 : index
    %5 = vector.load %arg3[%c0_1, %c0_2] : memref<8x512xf32, #tpu.memory_space<vmem>>, vector<8x512xf32>
    tpu.vector_store %arg3[%c0_1, %c0_2], %4 {strides = array<i32>} : memref<8x512xf32, #tpu.memory_space<vmem>>, vector<8x512xf32>,
    return
  }
  func.func @transform_0(%arg0: i32, %arg1: i32) -> (i32, i32) {
    %c0_i32 = arith.constant 0 : i32
    return %arg0, %arg1 : i32, i32
  }
  func.func @transform_1(%arg0: i32, %arg1: i32) -> (i32, i32) {
    %c0_i32 = arith.constant 0 : i32
    return %arg0, %arg1 : i32, i32
  }
}

</mosaic_0001>

<llo_original>
// kernel: tpu_custom_call.1
$region0: #{tpu_custom_call.1}
  #allocation0 [shape = 'u32[]', space=smem, size = 0x4, offset = 0x4, fixed_abs, tag = 'smem constant byte address 0x4 - core index']
  #allocation1 [shape = 'u32[144,128]{1,0:T(1,128)}', space=vmem, size = 0x12000, scoped, tag = 'internal scratch']
  %s0 = inlined_call_operand.hbm [shape: f32[8,256], index: 0, kind: input, shape index: {}]
  %s1 = inlined_call_operand.hbm [shape: f32[8,512], index: 1, kind: output, shape index: {}]
  %s2 = sld [smem:[#allocation0]]
  $region18: #{tpu_custom_call.1} parent=0
    _
  %s4 = ssub.s32 1, %s2
  %s5 = scalar_select 0, %s4, %s2
  $region1: #{tpu_custom_call.1} parent=0
    #allocation2 [shape = 'u8[8192]{0}', space=vmem, size = 0x2000, scoped, tag = 'input window, operand 0, single buffered']
    #allocation3 [shape = 's32[1]{0}', space=sflag, size = 0x4, scoped, tag = 'scoped memory for tpu_custom_call.1']
    #allocation4 [shape = 's32[1]{0}', space=sflag, size = 0x4, scoped, tag = 'scoped memory for tpu_custom_call.1']
    #allocation5 [shape = 'u8[16384]{0}', space=vmem, size = 0x4000, scoped, tag = 'output window, operand 0, single buffered']
    %6 = vsyncpa [#allocation3], 0
    %7 = vsyncpa [#allocation4], 0
    // Predicated region
    $region2: #{tpu_custom_call.1} parent=1 // pred_check
      _
    $region3: #{tpu_custom_call.1} parent=1 // pred_check_branch
      %9 = sbr.rel (0) target = $region5
    $region4: #{tpu_custom_call.1} parent=1 // pred_region
      %s11 = ssub.s32 256, 256
      %12 = vsyncadd [#allocation3], %s11
      %s14 = sshll.u32 [#allocation2], 4
      %s15 = int_to_ptr.vmem [resolvable:$true] %s14
      %17 = dma.hbm_to_vmem [thread:$0]  %s0, 256, %s15, [#allocation3]
    $region5: #{tpu_custom_call.1} parent=1 // pred_fallthru
      _
    // Predicated region
    $region6: #{tpu_custom_call.1} parent=1 // pred_check
      _
    $region7: #{tpu_custom_call.1} parent=1 // pred_check_branch
      %19 = sbr.rel (0) target = $region9
    $region8: #{tpu_custom_call.1} parent=1 // pred_region
      %20 = dma.done [#allocation3], 256
    $region9: #{tpu_custom_call.1} parent=1 // pred_fallthru
      _
    %v21 = vld [vmem:[#allocation2] sm:$0xff]
    %v22 = vld [vmem:[#allocation2 + $0x8] sm:$0xff]
    %v23 = vlaneseq
    %v24 = vshrl.u32 %v23, 7
    %v25 = vsub.s32 0, %v24
    %v26 = vrot.slane %v21, %v25
    %28 = vbcast.lane.b32.xlu0 %v26, 256
    %v29 = vpop.permute.xlu0 %28
    %s31 = sor.u32 256, 8
    %32 = vbcast.lane.b32.xlu0 %v26, %s31
    %v33 = vpop.permute.xlu0 %32
    %s35 = sor.u32 256, 16
    %36 = vbcast.lane.b32.xlu0 %v26, %s35
    %v37 = vpop.permute.xlu0 %36
    %s39 = sor.u32 256, 24
    %40 = vbcast.lane.b32.xlu0 %v26, %s39
    %v41 = vpop.permute.xlu0 %40
    %s43 = sor.u32 256, 32
    %44 = vbcast.lane.b32.xlu0 %v26, %s43
    %v45 = vpop.permute.xlu0 %44
    %s47 = sor.u32 256, 40
    %48 = vbcast.lane.b32.xlu0 %v26, %s47
    %v49 = vpop.permute.xlu0 %48
    %s51 = sor.u32 256, 48
    %52 = vbcast.lane.b32.xlu0 %v26, %s51
    %v53 = vpop.permute.xlu0 %52
    %s55 = sor.u32 256, 56
    %56 = vbcast.lane.b32.xlu0 %v26, %s55
    %v57 = vpop.permute.xlu0 %56
    %s59 = sor.u32 256, 64
    %60 = vbcast.lane.b32.xlu0 %v26, %s59
    %v61 = vpop.permute.xlu0 %60
    %s63 = sor.u32 256, 72
    %64 = vbcast.lane.b32.xlu0 %v26, %s63
    %v65 = vpop.permute.xlu0 %64
    %s67 = sor.u32 256, 80
    %68 = vbcast.lane.b32.xlu0 %v26, %s67
    %v69 = vpop.permute.xlu0 %68
    %s71 = sor.u32 256, 88
    %72 = vbcast.lane.b32.xlu0 %v26, %s71
    %v73 = vpop.permute.xlu0 %72
    %s75 = sor.u32 256, 96
    %76 = vbcast.lane.b32.xlu0 %v26, %s75
    %v77 = vpop.permute.xlu0 %76
    %s79 = sor.u32 256, 104
    %80 = vbcast.lane.b32.xlu0 %v26, %s79
    %v81 = vpop.permute.xlu0 %80
    %s83 = sor.u32 256, 112
    %84 = vbcast.lane.b32.xlu0 %v26, %s83
    %v85 = vpop.permute.xlu0 %84
    %s87 = sor.u32 256, 120
    %88 = vbcast.lane.b32.xlu0 %v26, %s87
    %v89 = vpop.permute.xlu0 %88
    %v90 = vlaneseq
    %v91 = vshrl.u32 %v90, 7
    %v92 = vsub.s32 0, %v91
    %v93 = vrot.slane %v22, %v92
    %95 = vbcast.lane.b32.xlu0 %v93, 256
    %v96 = vpop.permute.xlu0 %95
    %s98 = sor.u32 256, 8
    %99 = vbcast.lane.b32.xlu0 %v93, %s98
    %v100 = vpop.permute.xlu0 %99
    %s102 = sor.u32 256, 16
    %103 = vbcast.lane.b32.xlu0 %v93, %s102
    %v104 = vpop.permute.xlu0 %103
    %s106 = sor.u32 256, 24
    %107 = vbcast.lane.b32.xlu0 %v93, %s106
    %v108 = vpop.permute.xlu0 %107
    %s110 = sor.u32 256, 32
    %111 = vbcast.lane.b32.xlu0 %v93, %s110
    %v112 = vpop.permute.xlu0 %111
    %s114 = sor.u32 256, 40
    %115 = vbcast.lane.b32.xlu0 %v93, %s114
    %v116 = vpop.permute.xlu0 %115
    %s118 = sor.u32 256, 48
    %119 = vbcast.lane.b32.xlu0 %v93, %s118
    %v120 = vpop.permute.xlu0 %119
    %s122 = sor.u32 256, 56
    %123 = vbcast.lane.b32.xlu0 %v93, %s122
    %v124 = vpop.permute.xlu0 %123
    %s126 = sor.u32 256, 64
    %127 = vbcast.lane.b32.xlu0 %v93, %s126
    %v128 = vpop.permute.xlu0 %127
    %s130 = sor.u32 256, 72
    %131 = vbcast.lane.b32.xlu0 %v93, %s130
    %v132 = vpop.permute.xlu0 %131
    %s134 = sor.u32 256, 80
    %135 = vbcast.lane.b32.xlu0 %v93, %s134
    %v136 = vpop.permute.xlu0 %135
    %s138 = sor.u32 256, 88
    %139 = vbcast.lane.b32.xlu0 %v93, %s138
    %v140 = vpop.permute.xlu0 %139
    %s142 = sor.u32 256, 96
    %143 = vbcast.lane.b32.xlu0 %v93, %s142
    %v144 = vpop.permute.xlu0 %143
    %s146 = sor.u32 256, 104
    %147 = vbcast.lane.b32.xlu0 %v93, %s146
    %v148 = vpop.permute.xlu0 %147
    %s150 = sor.u32 256, 112
    %151 = vbcast.lane.b32.xlu0 %v93, %s150
    %v152 = vpop.permute.xlu0 %151
    %s154 = sor.u32 256, 120
    %155 = vbcast.lane.b32.xlu0 %v93, %s154
    %v156 = vpop.permute.xlu0 %155
    %v157 = vlaneseq
    %v158 = vshrl.u32 %v157, 7
    %v159 = vsub.s32 1, %v158
    %v160 = vrot.slane %v21, %v159
    %162 = vbcast.lane.b32.xlu0 %v160, 256
    %v163 = vpop.permute.xlu0 %162
    %s165 = sor.u32 256, 8
    %166 = vbcast.lane.b32.xlu0 %v160, %s165
    %v167 = vpop.permute.xlu0 %166
    %s169 = sor.u32 256, 16
    %170 = vbcast.lane.b32.xlu0 %v160, %s169
    %v171 = vpop.permute.xlu0 %170
    %s173 = sor.u32 256, 24
    %174 = vbcast.lane.b32.xlu0 %v160, %s173
    %v175 = vpop.permute.xlu0 %174
    %s177 = sor.u32 256, 32
    %178 = vbcast.lane.b32.xlu0 %v160, %s177
    %v179 = vpop.permute.xlu0 %178
    %s181 = sor.u32 256, 40
    %182 = vbcast.lane.b32.xlu0 %v160, %s181
    %v183 = vpop.permute.xlu0 %182
    %s185 = sor.u32 256, 48
    %186 = vbcast.lane.b32.xlu0 %v160, %s185
    %v187 = vpop.permute.xlu0 %186
    %s189 = sor.u32 256, 56
    %190 = vbcast.lane.b32.xlu0 %v160, %s189
    %v191 = vpop.permute.xlu0 %190
    %s193 = sor.u32 256, 64
    %194 = vbcast.lane.b32.xlu0 %v160, %s193
    %v195 = vpop.permute.xlu0 %194
    %s197 = sor.u32 256, 72
    %198 = vbcast.lane.b32.xlu0 %v160, %s197
    %v199 = vpop.permute.xlu0 %198
    %s201 = sor.u32 256, 80
    %202 = vbcast.lane.b32.xlu0 %v160, %s201
    %v203 = vpop.permute.xlu0 %202
    %s205 = sor.u32 256, 88
    %206 = vbcast.lane.b32.xlu0 %v160, %s205
    %v207 = vpop.permute.xlu0 %206
    %s209 = sor.u32 256, 96
    %210 = vbcast.lane.b32.xlu0 %v160, %s209
    %v211 = vpop.permute.xlu0 %210
    %s213 = sor.u32 256, 104
    %214 = vbcast.lane.b32.xlu0 %v160, %s213
    %v215 = vpop.permute.xlu0 %214
    %s217 = sor.u32 256, 112
    %218 = vbcast.lane.b32.xlu0 %v160, %s217
    %v219 = vpop.permute.xlu0 %218
    %s221 = sor.u32 256, 120
    %222 = vbcast.lane.b32.xlu0 %v160, %s221
    %v223 = vpop.permute.xlu0 %222
    %v224 = vlaneseq
    %v225 = vshrl.u32 %v224, 7
    %v226 = vsub.s32 1, %v225
    %v227 = vrot.slane %v22, %v226
    %229 = vbcast.lane.b32.xlu0 %v227, 256
    %v230 = vpop.permute.xlu0 %229
    %s232 = sor.u32 256, 8
    %233 = vbcast.lane.b32.xlu0 %v227, %s232
    %v234 = vpop.permute.xlu0 %233
    %s236 = sor.u32 256, 16
    %237 = vbcast.lane.b32.xlu0 %v227, %s236
    %v238 = vpop.permute.xlu0 %237
    %s240 = sor.u32 256, 24
    %241 = vbcast.lane.b32.xlu0 %v227, %s240
    %v242 = vpop.permute.xlu0 %241
    %s244 = sor.u32 256, 32
    %245 = vbcast.lane.b32.xlu0 %v227, %s244
    %v246 = vpop.permute.xlu0 %245
    %s248 = sor.u32 256, 40
    %249 = vbcast.lane.b32.xlu0 %v227, %s248
    %v250 = vpop.permute.xlu0 %249
    %s252 = sor.u32 256, 48
    %253 = vbcast.lane.b32.xlu0 %v227, %s252
    %v254 = vpop.permute.xlu0 %253
    %s256 = sor.u32 256, 56
    %257 = vbcast.lane.b32.xlu0 %v227, %s256
    %v258 = vpop.permute.xlu0 %257
    %s260 = sor.u32 256, 64
    %261 = vbcast.lane.b32.xlu0 %v227, %s260
    %v262 = vpop.permute.xlu0 %261
    %s264 = sor.u32 256, 72
    %265 = vbcast.lane.b32.xlu0 %v227, %s264
    %v266 = vpop.permute.xlu0 %265
    %s268 = sor.u32 256, 80
    %269 = vbcast.lane.b32.xlu0 %v227, %s268
    %v270 = vpop.permute.xlu0 %269
    %s272 = sor.u32 256, 88
    %273 = vbcast.lane.b32.xlu0 %v227, %s272
    %v274 = vpop.permute.xlu0 %273
    %s276 = sor.u32 256, 96
    %277 = vbcast.lane.b32.xlu0 %v227, %s276
    %v278 = vpop.permute.xlu0 %277
    %s280 = sor.u32 256, 104
    %281 = vbcast.lane.b32.xlu0 %v227, %s280
    %v282 = vpop.permute.xlu0 %281
    %s284 = sor.u32 256, 112
    %285 = vbcast.lane.b32.xlu0 %v227, %s284
    %v286 = vpop.permute.xlu0 %285
    %s288 = sor.u32 256, 120
    %289 = vbcast.lane.b32.xlu0 %v227, %s288
    %v290 = vpop.permute.xlu0 %289
    %v291 = vlaneseq
    %v292 = vshrl.u32 %v291, 7
    %v293 = vsub.s32 2, %v292
    %v294 = vrot.slane %v21, %v293
    %296 = vbcast.lane.b32.xlu0 %v294, 256
    %v297 = vpop.permute.xlu0 %296
    %s299 = sor.u32 256, 8
    %300 = vbcast.lane.b32.xlu0 %v294, %s299
    %v301 = vpop.permute.xlu0 %300
    %s303 = sor.u32 256, 16
    %304 = vbcast.lane.b32.xlu0 %v294, %s303
    %v305 = vpop.permute.xlu0 %304
    %s307 = sor.u32 256, 24
    %308 = vbcast.lane.b32.xlu0 %v294, %s307
    %v309 = vpop.permute.xlu0 %308
    %s311 = sor.u32 256, 32
    %312 = vbcast.lane.b32.xlu0 %v294, %s311
    %v313 = vpop.permute.xlu0 %312
    %s315 = sor.u32 256, 40
    %316 = vbcast.lane.b32.xlu0 %v294, %s315
    %v317 = vpop.permute.xlu0 %316
    %s319 = sor.u32 256, 48
    %320 = vbcast.lane.b32.xlu0 %v294, %s319
    %v321 = vpop.permute.xlu0 %320
    %s323 = sor.u32 256, 56
    %324 = vbcast.lane.b32.xlu0 %v294, %s323
    %v325 = vpop.permute.xlu0 %324
    %s327 = sor.u32 256, 64
    %328 = vbcast.lane.b32.xlu0 %v294, %s327
    %v329 = vpop.permute.xlu0 %328
    %s331 = sor.u32 256, 72
    %332 = vbcast.lane.b32.xlu0 %v294, %s331
    %v333 = vpop.permute.xlu0 %332
    %s335 = sor.u32 256, 80
    %336 = vbcast.lane.b32.xlu0 %v294, %s335
    %v337 = vpop.permute.xlu0 %336
    %s339 = sor.u32 256, 88
    %340 = vbcast.lane.b32.xlu0 %v294, %s339
    %v341 = vpop.permute.xlu0 %340
    %s343 = sor.u32 256, 96
    %344 = vbcast.lane.b32.xlu0 %v294, %s343
    %v345 = vpop.permute.xlu0 %344
    %s347 = sor.u32 256, 104
    %348 = vbcast.lane.b32.xlu0 %v294, %s347
    %v349 = vpop.permute.xlu0 %348
    %s351 = sor.u32 256, 112
    %352 = vbcast.lane.b32.xlu0 %v294, %s351
    %v353 = vpop.permute.xlu0 %352
    %s355 = sor.u32 256, 120
    %356 = vbcast.lane.b32.xlu0 %v294, %s355
    %v357 = vpop.permute.xlu0 %356
    %v358 = vlaneseq
    %v359 = vshrl.u32 %v358, 7
    %v360 = vsub.s32 2, %v359
    %v361 = vrot.slane %v22, %v360
    %363 = vbcast.lane.b32.xlu0 %v361, 256
    %v364 = vpop.permute.xlu0 %363
    %s366 = sor.u32 256, 8
    %367 = vbcast.lane.b32.xlu0 %v361, %s366
    %v368 = vpop.permute.xlu0 %367
    %s370 = sor.u32 256, 16
    %371 = vbcast.lane.b32.xlu0 %v361, %s370
    %v372 = vpop.permute.xlu0 %371
    %s374 = sor.u32 256, 24
    %375 = vbcast.lane.b32.xlu0 %v361, %s374
    %v376 = vpop.permute.xlu0 %375
    %s378 = sor.u32 256, 32
    %379 = vbcast.lane.b32.xlu0 %v361, %s378
    %v380 = vpop.permute.xlu0 %379
    %s382 = sor.u32 256, 40
    %383 = vbcast.lane.b32.xlu0 %v361, %s382
    %v384 = vpop.permute.xlu0 %383
    %s386 = sor.u32 256, 48
    %387 = vbcast.lane.b32.xlu0 %v361, %s386
    %v388 = vpop.permute.xlu0 %387
    %s390 = sor.u32 256, 56
    %391 = vbcast.lane.b32.xlu0 %v361, %s390
    %v392 = vpop.permute.xlu0 %391
    %s394 = sor.u32 256, 64
    %395 = vbcast.lane.b32.xlu0 %v361, %s394
    %v396 = vpop.permute.xlu0 %395
    %s398 = sor.u32 256, 72
    %399 = vbcast.lane.b32.xlu0 %v361, %s398
    %v400 = vpop.permute.xlu0 %399
    %s402 = sor.u32 256, 80
    %403 = vbcast.lane.b32.xlu0 %v361, %s402
    %v404 = vpop.permute.xlu0 %403
    %s406 = sor.u32 256, 88
    %407 = vbcast.lane.b32.xlu0 %v361, %s406
    %v408 = vpop.permute.xlu0 %407
    %s410 = sor.u32 256, 96
    %411 = vbcast.lane.b32.xlu0 %v361, %s410
    %v412 = vpop.permute.xlu0 %411
    %s414 = sor.u32 256, 104
    %415 = vbcast.lane.b32.xlu0 %v361, %s414
    %v416 = vpop.permute.xlu0 %415
    %s418 = sor.u32 256, 112
    %419 = vbcast.lane.b32.xlu0 %v361, %s418
    %v420 = vpop.permute.xlu0 %419
    %s422 = sor.u32 256, 120
    %423 = vbcast.lane.b32.xlu0 %v361, %s422
    %v424 = vpop.permute.xlu0 %423
    %v425 = vlaneseq
    %v426 = vshrl.u32 %v425, 7
    %v427 = vsub.s32 3, %v426
    %v428 = vrot.slane %v21, %v427
    %430 = vbcast.lane.b32.xlu0 %v428, 256
    %v431 = vpop.permute.xlu0 %430
    %s433 = sor.u32 256, 8
    %434 = vbcast.lane.b32.xlu0 %v428, %s433
    %v435 = vpop.permute.xlu0 %434
    %s437 = sor.u32 256, 16
    %438 = vbcast.lane.b32.xlu0 %v428, %s437
    %v439 = vpop.permute.xlu0 %438
    %s441 = sor.u32 256, 24
    %442 = vbcast.lane.b32.xlu0 %v428, %s441
    %v443 = vpop.permute.xlu0 %442
    %s445 = sor.u32 256, 32
    %446 = vbcast.lane.b32.xlu0 %v428, %s445
    %v447 = vpop.permute.xlu0 %446
    %s449 = sor.u32 256, 40
    %450 = vbcast.lane.b32.xlu0 %v428, %s449
    %v451 = vpop.permute.xlu0 %450
    %s453 = sor.u32 256, 48
    %454 = vbcast.lane.b32.xlu0 %v428, %s453
    %v455 = vpop.permute.xlu0 %454
    %s457 = sor.u32 256, 56
    %458 = vbcast.lane.b32.xlu0 %v428, %s457
    %v459 = vpop.permute.xlu0 %458
    %s461 = sor.u32 256, 64
    %462 = vbcast.lane.b32.xlu0 %v428, %s461
    %v463 = vpop.permute.xlu0 %462
    %s465 = sor.u32 256, 72
    %466 = vbcast.lane.b32.xlu0 %v428, %s465
    %v467 = vpop.permute.xlu0 %466
    %s469 = sor.u32 256, 80
    %470 = vbcast.lane.b32.xlu0 %v428, %s469
    %v471 = vpop.permute.xlu0 %470
    %s473 = sor.u32 256, 88
    %474 = vbcast.lane.b32.xlu0 %v428, %s473
    %v475 = vpop.permute.xlu0 %474
    %s477 = sor.u32 256, 96
    %478 = vbcast.lane.b32.xlu0 %v428, %s477
    %v479 = vpop.permute.xlu0 %478
    %s481 = sor.u32 256, 104
    %482 = vbcast.lane.b32.xlu0 %v428, %s481
    %v483 = vpop.permute.xlu0 %482
    %s485 = sor.u32 256, 112
    %486 = vbcast.lane.b32.xlu0 %v428, %s485
    %v487 = vpop.permute.xlu0 %486
    %s489 = sor.u32 256, 120
    %490 = vbcast.lane.b32.xlu0 %v428, %s489
    %v491 = vpop.permute.xlu0 %490
    %v492 = vlaneseq
    %v493 = vshrl.u32 %v492, 7
    %v494 = vsub.s32 3, %v493
    %v495 = vrot.slane %v22, %v494
    %497 = vbcast.lane.b32.xlu0 %v495, 256
    %v498 = vpop.permute.xlu0 %497
    %s500 = sor.u32 256, 8
    %501 = vbcast.lane.b32.xlu0 %v495, %s500
    %v502 = vpop.permute.xlu0 %501
    %s504 = sor.u32 256, 16
    %505 = vbcast.lane.b32.xlu0 %v495, %s504
    %v506 = vpop.permute.xlu0 %505
    %s508 = sor.u32 256, 24
    %509 = vbcast.lane.b32.xlu0 %v495, %s508
    %v510 = vpop.permute.xlu0 %509
    %s512 = sor.u32 256, 32
    %513 = vbcast.lane.b32.xlu0 %v495, %s512
    %v514 = vpop.permute.xlu0 %513
    %s516 = sor.u32 256, 40
    %517 = vbcast.lane.b32.xlu0 %v495, %s516
    %v518 = vpop.permute.xlu0 %517
    %s520 = sor.u32 256, 48
    %521 = vbcast.lane.b32.xlu0 %v495, %s520
    %v522 = vpop.permute.xlu0 %521
    %s524 = sor.u32 256, 56
    %525 = vbcast.lane.b32.xlu0 %v495, %s524
    %v526 = vpop.permute.xlu0 %525
    %s528 = sor.u32 256, 64
    %529 = vbcast.lane.b32.xlu0 %v495, %s528
    %v530 = vpop.permute.xlu0 %529
    %s532 = sor.u32 256, 72
    %533 = vbcast.lane.b32.xlu0 %v495, %s532
    %v534 = vpop.permute.xlu0 %533
    %s536 = sor.u32 256, 80
    %537 = vbcast.lane.b32.xlu0 %v495, %s536
    %v538 = vpop.permute.xlu0 %537
    %s540 = sor.u32 256, 88
    %541 = vbcast.lane.b32.xlu0 %v495, %s540
    %v542 = vpop.permute.xlu0 %541
    %s544 = sor.u32 256, 96
    %545 = vbcast.lane.b32.xlu0 %v495, %s544
    %v546 = vpop.permute.xlu0 %545
    %s548 = sor.u32 256, 104
    %549 = vbcast.lane.b32.xlu0 %v495, %s548
    %v550 = vpop.permute.xlu0 %549
    %s552 = sor.u32 256, 112
    %553 = vbcast.lane.b32.xlu0 %v495, %s552
    %v554 = vpop.permute.xlu0 %553
    %s556 = sor.u32 256, 120
    %557 = vbcast.lane.b32.xlu0 %v495, %s556
    %v558 = vpop.permute.xlu0 %557
    %v559 = vlaneseq
    %v560 = vshrl.u32 %v559, 7
    %v561 = vsub.s32 4, %v560
    %v562 = vrot.slane %v21, %v561
    %564 = vbcast.lane.b32.xlu0 %v562, 256
    %v565 = vpop.permute.xlu0 %564
    %s567 = sor.u32 256, 8
    %568 = vbcast.lane.b32.xlu0 %v562, %s567
    %v569 = vpop.permute.xlu0 %568
    %s571 = sor.u32 256, 16
    %572 = vbcast.lane.b32.xlu0 %v562, %s571
    %v573 = vpop.permute.xlu0 %572
    %s575 = sor.u32 256, 24
    %576 = vbcast.lane.b32.xlu0 %v562, %s575
    %v577 = vpop.permute.xlu0 %576
    %s579 = sor.u32 256, 32
    %580 = vbcast.lane.b32.xlu0 %v562, %s579
    %v581 = vpop.permute.xlu0 %580
    %s583 = sor.u32 256, 40
    %584 = vbcast.lane.b32.xlu0 %v562, %s583
    %v585 = vpop.permute.xlu0 %584
    %s587 = sor.u32 256, 48
    %588 = vbcast.lane.b32.xlu0 %v562, %s587
    %v589 = vpop.permute.xlu0 %588
    %s591 = sor.u32 256, 56
    %592 = vbcast.lane.b32.xlu0 %v562, %s591
    %v593 = vpop.permute.xlu0 %592
    %s595 = sor.u32 256, 64
    %596 = vbcast.lane.b32.xlu0 %v562, %s595
    %v597 = vpop.permute.xlu0 %596
    %s599 = sor.u32 256, 72
    %600 = vbcast.lane.b32.xlu0 %v562, %s599
    %v601 = vpop.permute.xlu0 %600
    %s603 = sor.u32 256, 80
    %604 = vbcast.lane.b32.xlu0 %v562, %s603
    %v605 = vpop.permute.xlu0 %604
    %s607 = sor.u32 256, 88
    %608 = vbcast.lane.b32.xlu0 %v562, %s607
    %v609 = vpop.permute.xlu0 %608
    %s611 = sor.u32 256, 96
    %612 = vbcast.lane.b32.xlu0 %v562, %s611
    %v613 = vpop.permute.xlu0 %612
    %s615 = sor.u32 256, 104
    %616 = vbcast.lane.b32.xlu0 %v562, %s615
    %v617 = vpop.permute.xlu0 %616
    %s619 = sor.u32 256, 112
    %620 = vbcast.lane.b32.xlu0 %v562, %s619
    %v621 = vpop.permute.xlu0 %620
    %s623 = sor.u32 256, 120
    %624 = vbcast.lane.b32.xlu0 %v562, %s623
    %v625 = vpop.permute.xlu0 %624
    %v626 = vlaneseq
    %v627 = vshrl.u32 %v626, 7
    %v628 = vsub.s32 4, %v627
    %v629 = vrot.slane %v22, %v628
    %631 = vbcast.lane.b32.xlu0 %v629, 256
    %v632 = vpop.permute.xlu0 %631
    %s634 = sor.u32 256, 8
    %635 = vbcast.lane.b32.xlu0 %v629, %s634
    %v636 = vpop.permute.xlu0 %635
    %s638 = sor.u32 256, 16
    %639 = vbcast.lane.b32.xlu0 %v629, %s638
    %v640 = vpop.permute.xlu0 %639
    %s642 = sor.u32 256, 24
    %643 = vbcast.lane.b32.xlu0 %v629, %s642
    %v644 = vpop.permute.xlu0 %643
    %s646 = sor.u32 256, 32
    %647 = vbcast.lane.b32.xlu0 %v629, %s646
    %v648 = vpop.permute.xlu0 %647
    %s650 = sor.u32 256, 40
    %651 = vbcast.lane.b32.xlu0 %v629, %s650
    %v652 = vpop.permute.xlu0 %651
    %s654 = sor.u32 256, 48
    %655 = vbcast.lane.b32.xlu0 %v629, %s654
    %v656 = vpop.permute.xlu0 %655
    %s658 = sor.u32 256, 56
    %659 = vbcast.lane.b32.xlu0 %v629, %s658
    %v660 = vpop.permute.xlu0 %659
    %s662 = sor.u32 256, 64
    %663 = vbcast.lane.b32.xlu0 %v629, %s662
    %v664 = vpop.permute.xlu0 %663
    %s666 = sor.u32 256, 72
    %667 = vbcast.lane.b32.xlu0 %v629, %s666
    %v668 = vpop.permute.xlu0 %667
    %s670 = sor.u32 256, 80
    %671 = vbcast.lane.b32.xlu0 %v629, %s670
    %v672 = vpop.permute.xlu0 %671
    %s674 = sor.u32 256, 88
    %675 = vbcast.lane.b32.xlu0 %v629, %s674
    %v676 = vpop.permute.xlu0 %675
    %s678 = sor.u32 256, 96
    %679 = vbcast.lane.b32.xlu0 %v629, %s678
    %v680 = vpop.permute.xlu0 %679
    %s682 = sor.u32 256, 104
    %683 = vbcast.lane.b32.xlu0 %v629, %s682
    %v684 = vpop.permute.xlu0 %683
    %s686 = sor.u32 256, 112
    %687 = vbcast.lane.b32.xlu0 %v629, %s686
    %v688 = vpop.permute.xlu0 %687
    %s690 = sor.u32 256, 120
    %691 = vbcast.lane.b32.xlu0 %v629, %s690
    %v692 = vpop.permute.xlu0 %691
    %v693 = vlaneseq
    %v694 = vshrl.u32 %v693, 7
    %v695 = vsub.s32 5, %v694
    %v696 = vrot.slane %v21, %v695
    %698 = vbcast.lane.b32.xlu0 %v696, 256
    %v699 = vpop.permute.xlu0 %698
    %s701 = sor.u32 256, 8
    %702 = vbcast.lane.b32.xlu0 %v696, %s701
    %v703 = vpop.permute.xlu0 %702
    %s705 = sor.u32 256, 16
    %706 = vbcast.lane.b32.xlu0 %v696, %s705
    %v707 = vpop.permute.xlu0 %706
    %s709 = sor.u32 256, 24
    %710 = vbcast.lane.b32.xlu0 %v696, %s709
    %v711 = vpop.permute.xlu0 %710
    %s713 = sor.u32 256, 32
    %714 = vbcast.lane.b32.xlu0 %v696, %s713
    %v715 = vpop.permute.xlu0 %714
    %s717 = sor.u32 256, 40
    %718 = vbcast.lane.b32.xlu0 %v696, %s717
    %v719 = vpop.permute.xlu0 %718
    %s721 = sor.u32 256, 48
    %722 = vbcast.lane.b32.xlu0 %v696, %s721
    %v723 = vpop.permute.xlu0 %722
    %s725 = sor.u32 256, 56
    %726 = vbcast.lane.b32.xlu0 %v696, %s725
    %v727 = vpop.permute.xlu0 %726
    %s729 = sor.u32 256, 64
    %730 = vbcast.lane.b32.xlu0 %v696, %s729
    %v731 = vpop.permute.xlu0 %730
    %s733 = sor.u32 256, 72
    %734 = vbcast.lane.b32.xlu0 %v696, %s733
    %v735 = vpop.permute.xlu0 %734
    %s737 = sor.u32 256, 80
    %738 = vbcast.lane.b32.xlu0 %v696, %s737
    %v739 = vpop.permute.xlu0 %738
    %s741 = sor.u32 256, 88
    %742 = vbcast.lane.b32.xlu0 %v696, %s741
    %v743 = vpop.permute.xlu0 %742
    %s745 = sor.u32 256, 96
    %746 = vbcast.lane.b32.xlu0 %v696, %s745
    %v747 = vpop.permute.xlu0 %746
    %s749 = sor.u32 256, 104
    %750 = vbcast.lane.b32.xlu0 %v696, %s749
    %v751 = vpop.permute.xlu0 %750
    %s753 = sor.u32 256, 112
    %754 = vbcast.lane.b32.xlu0 %v696, %s753
    %v755 = vpop.permute.xlu0 %754
    %s757 = sor.u32 256, 120
    %758 = vbcast.lane.b32.xlu0 %v696, %s757
    %v759 = vpop.permute.xlu0 %758
    %v760 = vlaneseq
    %v761 = vshrl.u32 %v760, 7
    %v762 = vsub.s32 5, %v761
    %v763 = vrot.slane %v22, %v762
    %765 = vbcast.lane.b32.xlu0 %v763, 256
    %v766 = vpop.permute.xlu0 %765
    %s768 = sor.u32 256, 8
    %769 = vbcast.lane.b32.xlu0 %v763, %s768
    %v770 = vpop.permute.xlu0 %769
    %s772 = sor.u32 256, 16
    %773 = vbcast.lane.b32.xlu0 %v763, %s772
    %v774 = vpop.permute.xlu0 %773
    %s776 = sor.u32 256, 24
    %777 = vbcast.lane.b32.xlu0 %v763, %s776
    %v778 = vpop.permute.xlu0 %777
    %s780 = sor.u32 256, 32
    %781 = vbcast.lane.b32.xlu0 %v763, %s780
    %v782 = vpop.permute.xlu0 %781
    %s784 = sor.u32 256, 40
    %785 = vbcast.lane.b32.xlu0 %v763, %s784
    %v786 = vpop.permute.xlu0 %785
    %s788 = sor.u32 256, 48
    %789 = vbcast.lane.b32.xlu0 %v763, %s788
    %v790 = vpop.permute.xlu0 %789
    %s792 = sor.u32 256, 56
    %793 = vbcast.lane.b32.xlu0 %v763, %s792
    %v794 = vpop.permute.xlu0 %793
    %s796 = sor.u32 256, 64
    %797 = vbcast.lane.b32.xlu0 %v763, %s796
    %v798 = vpop.permute.xlu0 %797
    %s800 = sor.u32 256, 72
    %801 = vbcast.lane.b32.xlu0 %v763, %s800
    %v802 = vpop.permute.xlu0 %801
    %s804 = sor.u32 256, 80
    %805 = vbcast.lane.b32.xlu0 %v763, %s804
    %v806 = vpop.permute.xlu0 %805
    %s808 = sor.u32 256, 88
    %809 = vbcast.lane.b32.xlu0 %v763, %s808
    %v810 = vpop.permute.xlu0 %809
    %s812 = sor.u32 256, 96
    %813 = vbcast.lane.b32.xlu0 %v763, %s812
    %v814 = vpop.permute.xlu0 %813
    %s816 = sor.u32 256, 104
    %817 = vbcast.lane.b32.xlu0 %v763, %s816
    %v818 = vpop.permute.xlu0 %817
    %s820 = sor.u32 256, 112
    %821 = vbcast.lane.b32.xlu0 %v763, %s820
    %v822 = vpop.permute.xlu0 %821
    %s824 = sor.u32 256, 120
    %825 = vbcast.lane.b32.xlu0 %v763, %s824
    %v826 = vpop.permute.xlu0 %825
    %v827 = vlaneseq
    %v828 = vshrl.u32 %v827, 7
    %v829 = vsub.s32 6, %v828
    %v830 = vrot.slane %v21, %v829
    %832 = vbcast.lane.b32.xlu0 %v830, 256
    %v833 = vpop.permute.xlu0 %832
    %s835 = sor.u32 256, 8
    %836 = vbcast.lane.b32.xlu0 %v830, %s835
    %v837 = vpop.permute.xlu0 %836
    %s839 = sor.u32 256, 16
    %840 = vbcast.lane.b32.xlu0 %v830, %s839
    %v841 = vpop.permute.xlu0 %840
    %s843 = sor.u32 256, 24
    %844 = vbcast.lane.b32.xlu0 %v830, %s843
    %v845 = vpop.permute.xlu0 %844
    %s847 = sor.u32 256, 32
    %848 = vbcast.lane.b32.xlu0 %v830, %s847
    %v849 = vpop.permute.xlu0 %848
    %s851 = sor.u32 256, 40
    %852 = vbcast.lane.b32.xlu0 %v830, %s851
    %v853 = vpop.permute.xlu0 %852
    %s855 = sor.u32 256, 48
    %856 = vbcast.lane.b32.xlu0 %v830, %s855
    %v857 = vpop.permute.xlu0 %856
    %s859 = sor.u32 256, 56
    %860 = vbcast.lane.b32.xlu0 %v830, %s859
    %v861 = vpop.permute.xlu0 %860
    %s863 = sor.u32 256, 64
    %864 = vbcast.lane.b32.xlu0 %v830, %s863
    %v865 = vpop.permute.xlu0 %864
    %s867 = sor.u32 256, 72
    %868 = vbcast.lane.b32.xlu0 %v830, %s867
    %v869 = vpop.permute.xlu0 %868
    %s871 = sor.u32 256, 80
    %872 = vbcast.lane.b32.xlu0 %v830, %s871
    %v873 = vpop.permute.xlu0 %872
    %s875 = sor.u32 256, 88
    %876 = vbcast.lane.b32.xlu0 %v830, %s875
    %v877 = vpop.permute.xlu0 %876
    %s879 = sor.u32 256, 96
    %880 = vbcast.lane.b32.xlu0 %v830, %s879
    %v881 = vpop.permute.xlu0 %880
    %s883 = sor.u32 256, 104
    %884 = vbcast.lane.b32.xlu0 %v830, %s883
    %v885 = vpop.permute.xlu0 %884
    %s887 = sor.u32 256, 112
    %888 = vbcast.lane.b32.xlu0 %v830, %s887
    %v889 = vpop.permute.xlu0 %888
    %s891 = sor.u32 256, 120
    %892 = vbcast.lane.b32.xlu0 %v830, %s891
    %v893 = vpop.permute.xlu0 %892
    %v894 = vlaneseq
    %v895 = vshrl.u32 %v894, 7
    %v896 = vsub.s32 6, %v895
    %v897 = vrot.slane %v22, %v896
    %899 = vbcast.lane.b32.xlu0 %v897, 256
    %v900 = vpop.permute.xlu0 %899
    %s902 = sor.u32 256, 8
    %903 = vbcast.lane.b32.xlu0 %v897, %s902
    %v904 = vpop.permute.xlu0 %903
    %s906 = sor.u32 256, 16
    %907 = vbcast.lane.b32.xlu0 %v897, %s906
    %v908 = vpop.permute.xlu0 %907
    %s910 = sor.u32 256, 24
    %911 = vbcast.lane.b32.xlu0 %v897, %s910
    %v912 = vpop.permute.xlu0 %911
    %s914 = sor.u32 256, 32
    %915 = vbcast.lane.b32.xlu0 %v897, %s914
    %v916 = vpop.permute.xlu0 %915
    %s918 = sor.u32 256, 40
    %919 = vbcast.lane.b32.xlu0 %v897, %s918
    %v920 = vpop.permute.xlu0 %919
    %s922 = sor.u32 256, 48
    %923 = vbcast.lane.b32.xlu0 %v897, %s922
    %v924 = vpop.permute.xlu0 %923
    %s926 = sor.u32 256, 56
    %927 = vbcast.lane.b32.xlu0 %v897, %s926
    %v928 = vpop.permute.xlu0 %927
    %s930 = sor.u32 256, 64
    %931 = vbcast.lane.b32.xlu0 %v897, %s930
    %v932 = vpop.permute.xlu0 %931
    %s934 = sor.u32 256, 72
    %935 = vbcast.lane.b32.xlu0 %v897, %s934
    %v936 = vpop.permute.xlu0 %935
    %s938 = sor.u32 256, 80
    %939 = vbcast.lane.b32.xlu0 %v897, %s938
    %v940 = vpop.permute.xlu0 %939
    %s942 = sor.u32 256, 88
    %943 = vbcast.lane.b32.xlu0 %v897, %s942
    %v944 = vpop.permute.xlu0 %943
    %s946 = sor.u32 256, 96
    %947 = vbcast.lane.b32.xlu0 %v897, %s946
    %v948 = vpop.permute.xlu0 %947
    %s950 = sor.u32 256, 104
    %951 = vbcast.lane.b32.xlu0 %v897, %s950
    %v952 = vpop.permute.xlu0 %951
    %s954 = sor.u32 256, 112
    %955 = vbcast.lane.b32.xlu0 %v897, %s954
    %v956 = vpop.permute.xlu0 %955
    %s958 = sor.u32 256, 120
    %959 = vbcast.lane.b32.xlu0 %v897, %s958
    %v960 = vpop.permute.xlu0 %959
    %v961 = vlaneseq
    %v962 = vshrl.u32 %v961, 7
    %v963 = vsub.s32 7, %v962
    %v964 = vrot.slane %v21, %v963
    %966 = vbcast.lane.b32.xlu0 %v964, 256
    %v967 = vpop.permute.xlu0 %966
    %s969 = sor.u32 256, 8
    %970 = vbcast.lane.b32.xlu0 %v964, %s969
    %v971 = vpop.permute.xlu0 %970
    %s973 = sor.u32 256, 16
    %974 = vbcast.lane.b32.xlu0 %v964, %s973
    %v975 = vpop.permute.xlu0 %974
    %s977 = sor.u32 256, 24
    %978 = vbcast.lane.b32.xlu0 %v964, %s977
    %v979 = vpop.permute.xlu0 %978
    %s981 = sor.u32 256, 32
    %982 = vbcast.lane.b32.xlu0 %v964, %s981
    %v983 = vpop.permute.xlu0 %982
    %s985 = sor.u32 256, 40
    %986 = vbcast.lane.b32.xlu0 %v964, %s985
    %v987 = vpop.permute.xlu0 %986
    %s989 = sor.u32 256, 48
    %990 = vbcast.lane.b32.xlu0 %v964, %s989
    %v991 = vpop.permute.xlu0 %990
    %s993 = sor.u32 256, 56
    %994 = vbcast.lane.b32.xlu0 %v964, %s993
    %v995 = vpop.permute.xlu0 %994
    %s997 = sor.u32 256, 64
    %998 = vbcast.lane.b32.xlu0 %v964, %s997
    %v999 = vpop.permute.xlu0 %998
    %s1001 = sor.u32 256, 72
    %1002 = vbcast.lane.b32.xlu0 %v964, %s1001
    %v1003 = vpop.permute.xlu0 %1002
    %s1005 = sor.u32 256, 80
    %1006 = vbcast.lane.b32.xlu0 %v964, %s1005
    %v1007 = vpop.permute.xlu0 %1006
    %s1009 = sor.u32 256, 88
    %1010 = vbcast.lane.b32.xlu0 %v964, %s1009
    %v1011 = vpop.permute.xlu0 %1010
    %s1013 = sor.u32 256, 96
    %1014 = vbcast.lane.b32.xlu0 %v964, %s1013
    %v1015 = vpop.permute.xlu0 %1014
    %s1017 = sor.u32 256, 104
    %1018 = vbcast.lane.b32.xlu0 %v964, %s1017
    %v1019 = vpop.permute.xlu0 %1018
    %s1021 = sor.u32 256, 112
    %1022 = vbcast.lane.b32.xlu0 %v964, %s1021
    %v1023 = vpop.permute.xlu0 %1022
    %s1025 = sor.u32 256, 120
    %1026 = vbcast.lane.b32.xlu0 %v964, %s1025
    %v1027 = vpop.permute.xlu0 %1026
    %v1028 = vlaneseq
    %v1029 = vshrl.u32 %v1028, 7
    %v1030 = vsub.s32 7, %v1029
    %v1031 = vrot.slane %v22, %v1030
    %1033 = vbcast.lane.b32.xlu0 %v1031, 256
    %v1034 = vpop.permute.xlu0 %1033
    %s1036 = sor.u32 256, 8
    %1037 = vbcast.lane.b32.xlu0 %v1031, %s1036
    %v1038 = vpop.permute.xlu0 %1037
    %s1040 = sor.u32 256, 16
    %1041 = vbcast.lane.b32.xlu0 %v1031, %s1040
    %v1042 = vpop.permute.xlu0 %1041
    %s1044 = sor.u32 256, 24
    %1045 = vbcast.lane.b32.xlu0 %v1031, %s1044
    %v1046 = vpop.permute.xlu0 %1045
    %s1048 = sor.u32 256, 32
    %1049 = vbcast.lane.b32.xlu0 %v1031, %s1048
    %v1050 = vpop.permute.xlu0 %1049
    %s1052 = sor.u32 256, 40
    %1053 = vbcast.lane.b32.xlu0 %v1031, %s1052
    %v1054 = vpop.permute.xlu0 %1053
    %s1056 = sor.u32 256, 48
    %1057 = vbcast.lane.b32.xlu0 %v1031, %s1056
    %v1058 = vpop.permute.xlu0 %1057
    %s1060 = sor.u32 256, 56
    %1061 = vbcast.lane.b32.xlu0 %v1031, %s1060
    %v1062 = vpop.permute.xlu0 %1061
    %s1064 = sor.u32 256, 64
    %1065 = vbcast.lane.b32.xlu0 %v1031, %s1064
    %v1066 = vpop.permute.xlu0 %1065
    %s1068 = sor.u32 256, 72
    %1069 = vbcast.lane.b32.xlu0 %v1031, %s1068
    %v1070 = vpop.permute.xlu0 %1069
    %s1072 = sor.u32 256, 80
    %1073 = vbcast.lane.b32.xlu0 %v1031, %s1072
    %v1074 = vpop.permute.xlu0 %1073
    %s1076 = sor.u32 256, 88
    %1077 = vbcast.lane.b32.xlu0 %v1031, %s1076
    %v1078 = vpop.permute.xlu0 %1077
    %s1080 = sor.u32 256, 96
    %1081 = vbcast.lane.b32.xlu0 %v1031, %s1080
    %v1082 = vpop.permute.xlu0 %1081
    %s1084 = sor.u32 256, 104
    %1085 = vbcast.lane.b32.xlu0 %v1031, %s1084
    %v1086 = vpop.permute.xlu0 %1085
    %s1088 = sor.u32 256, 112
    %1089 = vbcast.lane.b32.xlu0 %v1031, %s1088
    %v1090 = vpop.permute.xlu0 %1089
    %s1092 = sor.u32 256, 120
    %1093 = vbcast.lane.b32.xlu0 %v1031, %s1092
    %v1094 = vpop.permute.xlu0 %1093
    %v1095 = vcombine.low %v29, %v297
    %v1096 = vcombine.high %v29, %v297
    %v1098 = vunpack.c.l.s4 1983009808
    %v1099 = vunpack.c.0.s8 %v1098
    %v1100 = vlaneseq
    %v1101 = vshrl.u32 %v1100, 7
    %v1102 = vsub.s32 %v1099, %v1101
    %v1103 = vrot.slane %v1095, %v1102
    %v1105 = vunpack.c.l.s4 1983009808
    %v1106 = vunpack.c.0.s8 %v1105
    %v1107 = vlaneseq
    %v1108 = vshrl.u32 %v1107, 7
    %v1109 = vsub.s32 %v1106, %v1108
    %v1110 = vrot.slane %v1096, %v1109
    %v1111 = vcombine.low %v163, %v431
    %v1112 = vcombine.high %v163, %v431
    %v1114 = vunpack.c.l.s4 1983009808
    %v1115 = vunpack.c.0.s8 %v1114
    %v1116 = vlaneseq
    %v1117 = vshrl.u32 %v1116, 7
    %v1118 = vsub.s32 %v1115, %v1117
    %v1119 = vrot.slane %v1111, %v1118
    %v1121 = vunpack.c.l.s4 1983009808
    %v1122 = vunpack.c.0.s8 %v1121
    %v1123 = vlaneseq
    %v1124 = vshrl.u32 %v1123, 7
    %v1125 = vsub.s32 %v1122, %v1124
    %v1126 = vrot.slane %v1112, %v1125
    %v1127 = vcombine.low %v565, %v833
    %v1128 = vcombine.high %v565, %v833
    %v1130 = vunpack.c.l.s4 1983009808
    %v1131 = vunpack.c.0.s8 %v1130
    %v1132 = vlaneseq
    %v1133 = vshrl.u32 %v1132, 7
    %v1134 = vsub.s32 %v1131, %v1133
    %v1135 = vrot.slane %v1127, %v1134
    %v1137 = vunpack.c.l.s4 1983009808
    %v1138 = vunpack.c.0.s8 %v1137
    %v1139 = vlaneseq
    %v1140 = vshrl.u32 %v1139, 7
    %v1141 = vsub.s32 %v1138, %v1140
    %v1142 = vrot.slane %v1128, %v1141
    %v1143 = vcombine.low %v699, %v967
    %v1144 = vcombine.high %v699, %v967
    %v1146 = vunpack.c.l.s4 1983009808
    %v1147 = vunpack.c.0.s8 %v1146
    %v1148 = vlaneseq
    %v1149 = vshrl.u32 %v1148, 7
    %v1150 = vsub.s32 %v1147, %v1149
    %v1151 = vrot.slane %v1143, %v1150
    %v1153 = vunpack.c.l.s4 1983009808
    %v1154 = vunpack.c.0.s8 %v1153
    %v1155 = vlaneseq
    %v1156 = vshrl.u32 %v1155, 7
    %v1157 = vsub.s32 %v1154, %v1156
    %v1158 = vrot.slane %v1144, %v1157
    %v1159 = vcombine.low %v1103, %v1119
    %v1160 = vcombine.high %v1103, %v1119
    %v1162 = vunpack.c.l.s4 1934713408
    %v1163 = vunpack.c.0.s8 %v1162
    %v1164 = vlaneseq
    %v1165 = vshrl.u32 %v1164, 7
    %v1166 = vsub.s32 %v1163, %v1165
    %v1167 = vrot.slane %v1159, %v1166
    %v1169 = vunpack.c.l.s4 1934713408
    %v1170 = vunpack.c.0.s8 %v1169
    %v1171 = vlaneseq
    %v1172 = vshrl.u32 %v1171, 7
    %v1173 = vsub.s32 %v1170, %v1172
    %v1174 = vrot.slane %v1160, %v1173
    %v1175 = vcombine.low %v1110, %v1126
    %v1176 = vcombine.high %v1110, %v1126
    %v1178 = vunpack.c.l.s4 1934713408
    %v1179 = vunpack.c.0.s8 %v1178
    %v1180 = vlaneseq
    %v1181 = vshrl.u32 %v1180, 7
    %v1182 = vsub.s32 %v1179, %v1181
    %v1183 = vrot.slane %v1175, %v1182
    %v1185 = vunpack.c.l.s4 1934713408
    %v1186 = vunpack.c.0.s8 %v1185
    %v1187 = vlaneseq
    %v1188 = vshrl.u32 %v1187, 7
    %v1189 = vsub.s32 %v1186, %v1188
    %v1190 = vrot.slane %v1176, %v1189
    %v1191 = vcombine.low %v1135, %v1151
    %v1192 = vcombine.high %v1135, %v1151
    %v1194 = vunpack.c.l.s4 1934713408
    %v1195 = vunpack.c.0.s8 %v1194
    %v1196 = vlaneseq
    %v1197 = vshrl.u32 %v1196, 7
    %v1198 = vsub.s32 %v1195, %v1197
    %v1199 = vrot.slane %v1191, %v1198
    %v1201 = vunpack.c.l.s4 1934713408
    %v1202 = vunpack.c.0.s8 %v1201
    %v1203 = vlaneseq
    %v1204 = vshrl.u32 %v1203, 7
    %v1205 = vsub.s32 %v1202, %v1204
    %v1206 = vrot.slane %v1192, %v1205
    %v1207 = vcombine.low %v1142, %v1158
    %v1208 = vcombine.high %v1142, %v1158
    %v1210 = vunpack.c.l.s4 1934713408
    %v1211 = vunpack.c.0.s8 %v1210
    %v1212 = vlaneseq
    %v1213 = vshrl.u32 %v1212, 7
    %v1214 = vsub.s32 %v1211, %v1213
    %v1215 = vrot.slane %v1207, %v1214
    %v1217 = vunpack.c.l.s4 1934713408
    %v1218 = vunpack.c.0.s8 %v1217
    %v1219 = vlaneseq
    %v1220 = vshrl.u32 %v1219, 7
    %v1221 = vsub.s32 %v1218, %v1220
    %v1222 = vrot.slane %v1208, %v1221
    %v1223 = vcombine.low %v1167, %v1199
    %v1224 = vcombine.high %v1167, %v1199
    %v1225 = vcombine.low %v1174, %v1206
    %v1226 = vcombine.high %v1174, %v1206
    %v1227 = vcombine.low %v1183, %v1215
    %v1228 = vcombine.high %v1183, %v1215
    %v1229 = vcombine.low %v1190, %v1222
    %v1230 = vcombine.high %v1190, %v1222
    %v1231 = vcombine.low %v33, %v301
    %v1232 = vcombine.high %v33, %v301
    %v1234 = vunpack.c.l.s4 1983009808
    %v1235 = vunpack.c.0.s8 %v1234
    %v1236 = vlaneseq
    %v1237 = vshrl.u32 %v1236, 7
    %v1238 = vsub.s32 %v1235, %v1237
    %v1239 = vrot.slane %v1231, %v1238
    %v1241 = vunpack.c.l.s4 1983009808
    %v1242 = vunpack.c.0.s8 %v1241
    %v1243 = vlaneseq
    %v1244 = vshrl.u32 %v1243, 7
    %v1245 = vsub.s32 %v1242, %v1244
    %v1246 = vrot.slane %v1232, %v1245
    %v1247 = vcombine.low %v167, %v435
    %v1248 = vcombine.high %v167, %v435
    %v1250 = vunpack.c.l.s4 1983009808
    %v1251 = vunpack.c.0.s8 %v1250
    %v1252 = vlaneseq
    %v1253 = vshrl.u32 %v1252, 7
    %v1254 = vsub.s32 %v1251, %v1253
    %v1255 = vrot.slane %v1247, %v1254
    %v1257 = vunpack.c.l.s4 1983009808
    %v1258 = vunpack.c.0.s8 %v1257
    %v1259 = vlaneseq
    %v1260 = vshrl.u32 %v1259, 7
    %v1261 = vsub.s32 %v1258, %v1260
    %v1262 = vrot.slane %v1248, %v1261
    %v1263 = vcombine.low %v569, %v837
    %v1264 = vcombine.high %v569, %v837
    %v1266 = vunpack.c.l.s4 1983009808
    %v1267 = vunpack.c.0.s8 %v1266
    %v1268 = vlaneseq
    %v1269 = vshrl.u32 %v1268, 7
    %v1270 = vsub.s32 %v1267, %v1269
    %v1271 = vrot.slane %v1263, %v1270
    %v1273 = vunpack.c.l.s4 1983009808
    %v1274 = vunpack.c.0.s8 %v1273
    %v1275 = vlaneseq
    %v1276 = vshrl.u32 %v1275, 7
    %v1277 = vsub.s32 %v1274, %v1276
    %v1278 = vrot.slane %v1264, %v1277
    %v1279 = vcombine.low %v703, %v971
    %v1280 = vcombine.high %v703, %v971
    %v1282 = vunpack.c.l.s4 1983009808
    %v1283 = vunpack.c.0.s8 %v1282
    %v1284 = vlaneseq
    %v1285 = vshrl.u32 %v1284, 7
    %v1286 = vsub.s32 %v1283, %v1285
    %v1287 = vrot.slane %v1279, %v1286
    %v1289 = vunpack.c.l.s4 1983009808
    %v1290 = vunpack.c.0.s8 %v1289
    %v1291 = vlaneseq
    %v1292 = vshrl.u32 %v1291, 7
    %v1293 = vsub.s32 %v1290, %v1292
    %v1294 = vrot.slane %v1280, %v1293
    %v1295 = vcombine.low %v1239, %v1255
    %v1296 = vcombine.high %v1239, %v1255
    %v1298 = vunpack.c.l.s4 1934713408
    %v1299 = vunpack.c.0.s8 %v1298
    %v1300 = vlaneseq
    %v1301 = vshrl.u32 %v1300, 7
    %v1302 = vsub.s32 %v1299, %v1301
    %v1303 = vrot.slane %v1295, %v1302
    %v1305 = vunpack.c.l.s4 1934713408
    %v1306 = vunpack.c.0.s8 %v1305
    %v1307 = vlaneseq
    %v1308 = vshrl.u32 %v1307, 7
    %v1309 = vsub.s32 %v1306, %v1308
    %v1310 = vrot.slane %v1296, %v1309
    %v1311 = vcombine.low %v1246, %v1262
    %v1312 = vcombine.high %v1246, %v1262
    %v1314 = vunpack.c.l.s4 1934713408
    %v1315 = vunpack.c.0.s8 %v1314
    %v1316 = vlaneseq
    %v1317 = vshrl.u32 %v1316, 7
    %v1318 = vsub.s32 %v1315, %v1317
    %v1319 = vrot.slane %v1311, %v1318
    %v1321 = vunpack.c.l.s4 1934713408
    %v1322 = vunpack.c.0.s8 %v1321
    %v1323 = vlaneseq
    %v1324 = vshrl.u32 %v1323, 7
    %v1325 = vsub.s32 %v1322, %v1324
    %v1326 = vrot.slane %v1312, %v1325
    %v1327 = vcombine.low %v1271, %v1287
    %v1328 = vcombine.high %v1271, %v1287
    %v1330 = vunpack.c.l.s4 1934713408
    %v1331 = vunpack.c.0.s8 %v1330
    %v1332 = vlaneseq
    %v1333 = vshrl.u32 %v1332, 7
    %v1334 = vsub.s32 %v1331, %v1333
    %v1335 = vrot.slane %v1327, %v1334
    %v1337 = vunpack.c.l.s4 1934713408
    %v1338 = vunpack.c.0.s8 %v1337
    %v1339 = vlaneseq
    %v1340 = vshrl.u32 %v1339, 7
    %v1341 = vsub.s32 %v1338, %v1340
    %v1342 = vrot.slane %v1328, %v1341
    %v1343 = vcombine.low %v1278, %v1294
    %v1344 = vcombine.high %v1278, %v1294
    %v1346 = vunpack.c.l.s4 1934713408
    %v1347 = vunpack.c.0.s8 %v1346
    %v1348 = vlaneseq
    %v1349 = vshrl.u32 %v1348, 7
    %v1350 = vsub.s32 %v1347, %v1349
    %v1351 = vrot.slane %v1343, %v1350
    %v1353 = vunpack.c.l.s4 1934713408
    %v1354 = vunpack.c.0.s8 %v1353
    %v1355 = vlaneseq
    %v1356 = vshrl.u32 %v1355, 7
    %v1357 = vsub.s32 %v1354, %v1356
    %v1358 = vrot.slane %v1344, %v1357
    %v1359 = vcombine.low %v1303, %v1335
    %v1360 = vcombine.high %v1303, %v1335
    %v1361 = vcombine.low %v1310, %v1342
    %v1362 = vcombine.high %v1310, %v1342
    %v1363 = vcombine.low %v1319, %v1351
    %v1364 = vcombine.high %v1319, %v1351
    %v1365 = vcombine.low %v1326, %v1358
    %v1366 = vcombine.high %v1326, %v1358
    %v1367 = vcombine.low %v37, %v305
    %v1368 = vcombine.high %v37, %v305
    %v1370 = vunpack.c.l.s4 1983009808
    %v1371 = vunpack.c.0.s8 %v1370
    %v1372 = vlaneseq
    %v1373 = vshrl.u32 %v1372, 7
    %v1374 = vsub.s32 %v1371, %v1373
    %v1375 = vrot.slane %v1367, %v1374
    %v1377 = vunpack.c.l.s4 1983009808
    %v1378 = vunpack.c.0.s8 %v1377
    %v1379 = vlaneseq
    %v1380 = vshrl.u32 %v1379, 7
    %v1381 = vsub.s32 %v1378, %v1380
    %v1382 = vrot.slane %v1368, %v1381
    %v1383 = vcombine.low %v171, %v439
    %v1384 = vcombine.high %v171, %v439
    %v1386 = vunpack.c.l.s4 1983009808
    %v1387 = vunpack.c.0.s8 %v1386
    %v1388 = vlaneseq
    %v1389 = vshrl.u32 %v1388, 7
    %v1390 = vsub.s32 %v1387, %v1389
    %v1391 = vrot.slane %v1383, %v1390
    %v1393 = vunpack.c.l.s4 1983009808
    %v1394 = vunpack.c.0.s8 %v1393
    %v1395 = vlaneseq
    %v1396 = vshrl.u32 %v1395, 7
    %v1397 = vsub.s32 %v1394, %v1396
    %v1398 = vrot.slane %v1384, %v1397
    %v1399 = vcombine.low %v573, %v841
    %v1400 = vcombine.high %v573, %v841
    %v1402 = vunpack.c.l.s4 1983009808
    %v1403 = vunpack.c.0.s8 %v1402
    %v1404 = vlaneseq
    %v1405 = vshrl.u32 %v1404, 7
    %v1406 = vsub.s32 %v1403, %v1405
    %v1407 = vrot.slane %v1399, %v1406
    %v1409 = vunpack.c.l.s4 1983009808
    %v1410 = vunpack.c.0.s8 %v1409
    %v1411 = vlaneseq
    %v1412 = vshrl.u32 %v1411, 7
    %v1413 = vsub.s32 %v1410, %v1412
    %v1414 = vrot.slane %v1400, %v1413
    %v1415 = vcombine.low %v707, %v975
    %v1416 = vcombine.high %v707, %v975
    %v1418 = vunpack.c.l.s4 1983009808
    %v1419 = vunpack.c.0.s8 %v1418
    %v1420 = vlaneseq
    %v1421 = vshrl.u32 %v1420, 7
    %v1422 = vsub.s32 %v1419, %v1421
    %v1423 = vrot.slane %v1415, %v1422
    %v1425 = vunpack.c.l.s4 1983009808
    %v1426 = vunpack.c.0.s8 %v1425
    %v1427 = vlaneseq
    %v1428 = vshrl.u32 %v1427, 7
    %v1429 = vsub.s32 %v1426, %v1428
    %v1430 = vrot.slane %v1416, %v1429
    %v1431 = vcombine.low %v1375, %v1391
    %v1432 = vcombine.high %v1375, %v1391
    %v1434 = vunpack.c.l.s4 1934713408
    %v1435 = vunpack.c.0.s8 %v1434
    %v1436 = vlaneseq
    %v1437 = vshrl.u32 %v1436, 7
    %v1438 = vsub.s32 %v1435, %v1437
    %v1439 = vrot.slane %v1431, %v1438
    %v1441 = vunpack.c.l.s4 1934713408
    %v1442 = vunpack.c.0.s8 %v1441
    %v1443 = vlaneseq
    %v1444 = vshrl.u32 %v1443, 7
    %v1445 = vsub.s32 %v1442, %v1444
    %v1446 = vrot.slane %v1432, %v1445
    %v1447 = vcombine.low %v1382, %v1398
    %v1448 = vcombine.high %v1382, %v1398
    %v1450 = vunpack.c.l.s4 1934713408
    %v1451 = vunpack.c.0.s8 %v1450
    %v1452 = vlaneseq
    %v1453 = vshrl.u32 %v1452, 7
    %v1454 = vsub.s32 %v1451, %v1453
    %v1455 = vrot.slane %v1447, %v1454
    %v1457 = vunpack.c.l.s4 1934713408
    %v1458 = vunpack.c.0.s8 %v1457
    %v1459 = vlaneseq
    %v1460 = vshrl.u32 %v1459, 7
    %v1461 = vsub.s32 %v1458, %v1460
    %v1462 = vrot.slane %v1448, %v1461
    %v1463 = vcombine.low %v1407, %v1423
    %v1464 = vcombine.high %v1407, %v1423
    %v1466 = vunpack.c.l.s4 1934713408
    %v1467 = vunpack.c.0.s8 %v1466
    %v1468 = vlaneseq
    %v1469 = vshrl.u32 %v1468, 7
    %v1470 = vsub.s32 %v1467, %v1469
    %v1471 = vrot.slane %v1463, %v1470
    %v1473 = vunpack.c.l.s4 1934713408
    %v1474 = vunpack.c.0.s8 %v1473
    %v1475 = vlaneseq
    %v1476 = vshrl.u32 %v1475, 7
    %v1477 = vsub.s32 %v1474, %v1476
    %v1478 = vrot.slane %v1464, %v1477
    %v1479 = vcombine.low %v1414, %v1430
    %v1480 = vcombine.high %v1414, %v1430
    %v1482 = vunpack.c.l.s4 1934713408
    %v1483 = vunpack.c.0.s8 %v1482
    %v1484 = vlaneseq
    %v1485 = vshrl.u32 %v1484, 7
    %v1486 = vsub.s32 %v1483, %v1485
    %v1487 = vrot.slane %v1479, %v1486
    %v1489 = vunpack.c.l.s4 1934713408
    %v1490 = vunpack.c.0.s8 %v1489
    %v1491 = vlaneseq
    %v1492 = vshrl.u32 %v1491, 7
    %v1493 = vsub.s32 %v1490, %v1492
    %v1494 = vrot.slane %v1480, %v1493
    %v1495 = vcombine.low %v1439, %v1471
    %v1496 = vcombine.high %v1439, %v1471
    %v1497 = vcombine.low %v1446, %v1478
    %v1498 = vcombine.high %v1446, %v1478
    %v1499 = vcombine.low %v1455, %v1487
    %v1500 = vcombine.high %v1455, %v1487
    %v1501 = vcombine.low %v1462, %v1494
    %v1502 = vcombine.high %v1462, %v1494
    %v1503 = vcombine.low %v41, %v309
    %v1504 = vcombine.high %v41, %v309
    %v1506 = vunpack.c.l.s4 1983009808
    %v1507 = vunpack.c.0.s8 %v1506
    %v1508 = vlaneseq
    %v1509 = vshrl.u32 %v1508, 7
    %v1510 = vsub.s32 %v1507, %v1509
    %v1511 = vrot.slane %v1503, %v1510
    %v1513 = vunpack.c.l.s4 1983009808
    %v1514 = vunpack.c.0.s8 %v1513
    %v1515 = vlaneseq
    %v1516 = vshrl.u32 %v1515, 7
    %v1517 = vsub.s32 %v1514, %v1516
    %v1518 = vrot.slane %v1504, %v1517
    %v1519 = vcombine.low %v175, %v443
    %v1520 = vcombine.high %v175, %v443
    %v1522 = vunpack.c.l.s4 1983009808
    %v1523 = vunpack.c.0.s8 %v1522
    %v1524 = vlaneseq
    %v1525 = vshrl.u32 %v1524, 7
    %v1526 = vsub.s32 %v1523, %v1525
    %v1527 = vrot.slane %v1519, %v1526
    %v1529 = vunpack.c.l.s4 1983009808
    %v1530 = vunpack.c.0.s8 %v1529
    %v1531 = vlaneseq
    %v1532 = vshrl.u32 %v1531, 7
    %v1533 = vsub.s32 %v1530, %v1532
    %v1534 = vrot.slane %v1520, %v1533
    %v1535 = vcombine.low %v577, %v845
    %v1536 = vcombine.high %v577, %v845
    %v1538 = vunpack.c.l.s4 1983009808
    %v1539 = vunpack.c.0.s8 %v1538
    %v1540 = vlaneseq
    %v1541 = vshrl.u32 %v1540, 7
    %v1542 = vsub.s32 %v1539, %v1541
    %v1543 = vrot.slane %v1535, %v1542
    %v1545 = vunpack.c.l.s4 1983009808
    %v1546 = vunpack.c.0.s8 %v1545
    %v1547 = vlaneseq
    %v1548 = vshrl.u32 %v1547, 7
    %v1549 = vsub.s32 %v1546, %v1548
    %v1550 = vrot.slane %v1536, %v1549
    %v1551 = vcombine.low %v711, %v979
    %v1552 = vcombine.high %v711, %v979
    %v1554 = vunpack.c.l.s4 1983009808
    %v1555 = vunpack.c.0.s8 %v1554
    %v1556 = vlaneseq
    %v1557 = vshrl.u32 %v1556, 7
    %v1558 = vsub.s32 %v1555, %v1557
    %v1559 = vrot.slane %v1551, %v1558
    %v1561 = vunpack.c.l.s4 1983009808
    %v1562 = vunpack.c.0.s8 %v1561
    %v1563 = vlaneseq
    %v1564 = vshrl.u32 %v1563, 7
    %v1565 = vsub.s32 %v1562, %v1564
    %v1566 = vrot.slane %v1552, %v1565
    %v1567 = vcombine.low %v1511, %v1527
    %v1568 = vcombine.high %v1511, %v1527
    %v1570 = vunpack.c.l.s4 1934713408
    %v1571 = vunpack.c.0.s8 %v1570
    %v1572 = vlaneseq
    %v1573 = vshrl.u32 %v1572, 7
    %v1574 = vsub.s32 %v1571, %v1573
    %v1575 = vrot.slane %v1567, %v1574
    %v1577 = vunpack.c.l.s4 1934713408
    %v1578 = vunpack.c.0.s8 %v1577
    %v1579 = vlaneseq
    %v1580 = vshrl.u32 %v1579, 7
    %v1581 = vsub.s32 %v1578, %v1580
    %v1582 = vrot.slane %v1568, %v1581
    %v1583 = vcombine.low %v1518, %v1534
    %v1584 = vcombine.high %v1518, %v1534
    %v1586 = vunpack.c.l.s4 1934713408
    %v1587 = vunpack.c.0.s8 %v1586
    %v1588 = vlaneseq
    %v1589 = vshrl.u32 %v1588, 7
    %v1590 = vsub.s32 %v1587, %v1589
    %v1591 = vrot.slane %v1583, %v1590
    %v1593 = vunpack.c.l.s4 1934713408
    %v1594 = vunpack.c.0.s8 %v1593
    %v1595 = vlaneseq
    %v1596 = vshrl.u32 %v1595, 7
    %v1597 = vsub.s32 %v1594, %v1596
    %v1598 = vrot.slane %v1584, %v1597
    %v1599 = vcombine.low %v1543, %v1559
    %v1600 = vcombine.high %v1543, %v1559
    %v1602 = vunpack.c.l.s4 1934713408
    %v1603 = vunpack.c.0.s8 %v1602
    %v1604 = vlaneseq
    %v1605 = vshrl.u32 %v1604, 7
    %v1606 = vsub.s32 %v1603, %v1605
    %v1607 = vrot.slane %v1599, %v1606
    %v1609 = vunpack.c.l.s4 1934713408
    %v1610 = vunpack.c.0.s8 %v1609
    %v1611 = vlaneseq
    %v1612 = vshrl.u32 %v1611, 7
    %v1613 = vsub.s32 %v1610, %v1612
    %v1614 = vrot.slane %v1600, %v1613
    %v1615 = vcombine.low %v1550, %v1566
    %v1616 = vcombine.high %v1550, %v1566
    %v1618 = vunpack.c.l.s4 1934713408
    %v1619 = vunpack.c.0.s8 %v1618
    %v1620 = vlaneseq
    %v1621 = vshrl.u32 %v1620, 7
    %v1622 = vsub.s32 %v1619, %v1621
    %v1623 = vrot.slane %v1615, %v1622
    %v1625 = vunpack.c.l.s4 1934713408
    %v1626 = vunpack.c.0.s8 %v1625
    %v1627 = vlaneseq
    %v1628 = vshrl.u32 %v1627, 7
    %v1629 = vsub.s32 %v1626, %v1628
    %v1630 = vrot.slane %v1616, %v1629
    %v1631 = vcombine.low %v1575, %v1607
    %v1632 = vcombine.high %v1575, %v1607
    %v1633 = vcombine.low %v1582, %v1614
    %v1634 = vcombine.high %v1582, %v1614
    %v1635 = vcombine.low %v1591, %v1623
    %v1636 = vcombine.high %v1591, %v1623
    %v1637 = vcombine.low %v1598, %v1630
    %v1638 = vcombine.high %v1598, %v1630
    %v1639 = vcombine.low %v45, %v313
    %v1640 = vcombine.high %v45, %v313
    %v1642 = vunpack.c.l.s4 1983009808
    %v1643 = vunpack.c.0.s8 %v1642
    %v1644 = vlaneseq
    %v1645 = vshrl.u32 %v1644, 7
    %v1646 = vsub.s32 %v1643, %v1645
    %v1647 = vrot.slane %v1639, %v1646
    %v1649 = vunpack.c.l.s4 1983009808
    %v1650 = vunpack.c.0.s8 %v1649
    %v1651 = vlaneseq
    %v1652 = vshrl.u32 %v1651, 7
    %v1653 = vsub.s32 %v1650, %v1652
    %v1654 = vrot.slane %v1640, %v1653
    %v1655 = vcombine.low %v179, %v447
    %v1656 = vcombine.high %v179, %v447
    %v1658 = vunpack.c.l.s4 1983009808
    %v1659 = vunpack.c.0.s8 %v1658
    %v1660 = vlaneseq
    %v1661 = vshrl.u32 %v1660, 7
    %v1662 = vsub.s32 %v1659, %v1661
    %v1663 = vrot.slane %v1655, %v1662
    %v1665 = vunpack.c.l.s4 1983009808
    %v1666 = vunpack.c.0.s8 %v1665
    %v1667 = vlaneseq
    %v1668 = vshrl.u32 %v1667, 7
    %v1669 = vsub.s32 %v1666, %v1668
    %v1670 = vrot.slane %v1656, %v1669
    %v1671 = vcombine.low %v581, %v849
    %v1672 = vcombine.high %v581, %v849
    %v1674 = vunpack.c.l.s4 1983009808
    %v1675 = vunpack.c.0.s8 %v1674
    %v1676 = vlaneseq
    %v1677 = vshrl.u32 %v1676, 7
    %v1678 = vsub.s32 %v1675, %v1677
    %v1679 = vrot.slane %v1671, %v1678
    %v1681 = vunpack.c.l.s4 1983009808
    %v1682 = vunpack.c.0.s8 %v1681
    %v1683 = vlaneseq
    %v1684 = vshrl.u32 %v1683, 7
    %v1685 = vsub.s32 %v1682, %v1684
    %v1686 = vrot.slane %v1672, %v1685
    %v1687 = vcombine.low %v715, %v983
    %v1688 = vcombine.high %v715, %v983
    %v1690 = vunpack.c.l.s4 1983009808
    %v1691 = vunpack.c.0.s8 %v1690
    %v1692 = vlaneseq
    %v1693 = vshrl.u32 %v1692, 7
    %v1694 = vsub.s32 %v1691, %v1693
    %v1695 = vrot.slane %v1687, %v1694
    %v1697 = vunpack.c.l.s4 1983009808
    %v1698 = vunpack.c.0.s8 %v1697
    %v1699 = vlaneseq
    %v1700 = vshrl.u32 %v1699, 7
    %v1701 = vsub.s32 %v1698, %v1700
    %v1702 = vrot.slane %v1688, %v1701
    %v1703 = vcombine.low %v1647, %v1663
    %v1704 = vcombine.high %v1647, %v1663
    %v1706 = vunpack.c.l.s4 1934713408
    %v1707 = vunpack.c.0.s8 %v1706
    %v1708 = vlaneseq
    %v1709 = vshrl.u32 %v1708, 7
    %v1710 = vsub.s32 %v1707, %v1709
    %v1711 = vrot.slane %v1703, %v1710
    %v1713 = vunpack.c.l.s4 1934713408
    %v1714 = vunpack.c.0.s8 %v1713
    %v1715 = vlaneseq
    %v1716 = vshrl.u32 %v1715, 7
    %v1717 = vsub.s32 %v1714, %v1716
    %v1718 = vrot.slane %v1704, %v1717
    %v1719 = vcombine.low %v1654, %v1670
    %v1720 = vcombine.high %v1654, %v1670
    %v1722 = vunpack.c.l.s4 1934713408
    %v1723 = vunpack.c.0.s8 %v1722
    %v1724 = vlaneseq
    %v1725 = vshrl.u32 %v1724, 7
    %v1726 = vsub.s32 %v1723, %v1725
    %v1727 = vrot.slane %v1719, %v1726
    %v1729 = vunpack.c.l.s4 1934713408
    %v1730 = vunpack.c.0.s8 %v1729
    %v1731 = vlaneseq
    %v1732 = vshrl.u32 %v1731, 7
    %v1733 = vsub.s32 %v1730, %v1732
    %v1734 = vrot.slane %v1720, %v1733
    %v1735 = vcombine.low %v1679, %v1695
    %v1736 = vcombine.high %v1679, %v1695
    %v1738 = vunpack.c.l.s4 1934713408
    %v1739 = vunpack.c.0.s8 %v1738
    %v1740 = vlaneseq
    %v1741 = vshrl.u32 %v1740, 7
    %v1742 = vsub.s32 %v1739, %v1741
    %v1743 = vrot.slane %v1735, %v1742
    %v1745 = vunpack.c.l.s4 1934713408
    %v1746 = vunpack.c.0.s8 %v1745
    %v1747 = vlaneseq
    %v1748 = vshrl.u32 %v1747, 7
    %v1749 = vsub.s32 %v1746, %v1748
    %v1750 = vrot.slane %v1736, %v1749
    %v1751 = vcombine.low %v1686, %v1702
    %v1752 = vcombine.high %v1686, %v1702
    %v1754 = vunpack.c.l.s4 1934713408
    %v1755 = vunpack.c.0.s8 %v1754
    %v1756 = vlaneseq
    %v1757 = vshrl.u32 %v1756, 7
    %v1758 = vsub.s32 %v1755, %v1757
    %v1759 = vrot.slane %v1751, %v1758
    %v1761 = vunpack.c.l.s4 1934713408
    %v1762 = vunpack.c.0.s8 %v1761
    %v1763 = vlaneseq
    %v1764 = vshrl.u32 %v1763, 7
    %v1765 = vsub.s32 %v1762, %v1764
    %v1766 = vrot.slane %v1752, %v1765
    %v1767 = vcombine.low %v1711, %v1743
    %v1768 = vcombine.high %v1711, %v1743
    %v1769 = vcombine.low %v1718, %v1750
    %v1770 = vcombine.high %v1718, %v1750
    %v1771 = vcombine.low %v1727, %v1759
    %v1772 = vcombine.high %v1727, %v1759
    %v1773 = vcombine.low %v1734, %v1766
    %v1774 = vcombine.high %v1734, %v1766
    %v1775 = vcombine.low %v49, %v317
    %v1776 = vcombine.high %v49, %v317
    %v1778 = vunpack.c.l.s4 1983009808
    %v1779 = vunpack.c.0.s8 %v1778
    %v1780 = vlaneseq
    %v1781 = vshrl.u32 %v1780, 7
    %v1782 = vsub.s32 %v1779, %v1781
    %v1783 = vrot.slane %v1775, %v1782
    %v1785 = vunpack.c.l.s4 1983009808
    %v1786 = vunpack.c.0.s8 %v1785
    %v1787 = vlaneseq
    %v1788 = vshrl.u32 %v1787, 7
    %v1789 = vsub.s32 %v1786, %v1788
    %v1790 = vrot.slane %v1776, %v1789
    %v1791 = vcombine.low %v183, %v451
    %v1792 = vcombine.high %v183, %v451
    %v1794 = vunpack.c.l.s4 1983009808
    %v1795 = vunpack.c.0.s8 %v1794
    %v1796 = vlaneseq
    %v1797 = vshrl.u32 %v1796, 7
    %v1798 = vsub.s32 %v1795, %v1797
    %v1799 = vrot.slane %v1791, %v1798
    %v1801 = vunpack.c.l.s4 1983009808
    %v1802 = vunpack.c.0.s8 %v1801
    %v1803 = vlaneseq
    %v1804 = vshrl.u32 %v1803, 7
    %v1805 = vsub.s32 %v1802, %v1804
    %v1806 = vrot.slane %v1792, %v1805
    %v1807 = vcombine.low %v585, %v853
    %v1808 = vcombine.high %v585, %v853
    %v1810 = vunpack.c.l.s4 1983009808
    %v1811 = vunpack.c.0.s8 %v1810
    %v1812 = vlaneseq
    %v1813 = vshrl.u32 %v1812, 7
    %v1814 = vsub.s32 %v1811, %v1813
    %v1815 = vrot.slane %v1807, %v1814
    %v1817 = vunpack.c.l.s4 1983009808
    %v1818 = vunpack.c.0.s8 %v1817
    %v1819 = vlaneseq
    %v1820 = vshrl.u32 %v1819, 7
    %v1821 = vsub.s32 %v1818, %v1820
    %v1822 = vrot.slane %v1808, %v1821
    %v1823 = vcombine.low %v719, %v987
    %v1824 = vcombine.high %v719, %v987
    %v1826 = vunpack.c.l.s4 1983009808
    %v1827 = vunpack.c.0.s8 %v1826
    %v1828 = vlaneseq
    %v1829 = vshrl.u32 %v1828, 7
    %v1830 = vsub.s32 %v1827, %v1829
    %v1831 = vrot.slane %v1823, %v1830
    %v1833 = vunpack.c.l.s4 1983009808
    %v1834 = vunpack.c.0.s8 %v1833
    %v1835 = vlaneseq
    %v1836 = vshrl.u32 %v1835, 7
    %v1837 = vsub.s32 %v1834, %v1836
    %v1838 = vrot.slane %v1824, %v1837
    %v1839 = vcombine.low %v1783, %v1799
    %v1840 = vcombine.high %v1783, %v1799
    %v1842 = vunpack.c.l.s4 1934713408
    %v1843 = vunpack.c.0.s8 %v1842
    %v1844 = vlaneseq
    %v1845 = vshrl.u32 %v1844, 7
    %v1846 = vsub.s32 %v1843, %v1845
    %v1847 = vrot.slane %v1839, %v1846
    %v1849 = vunpack.c.l.s4 1934713408
    %v1850 = vunpack.c.0.s8 %v1849
    %v1851 = vlaneseq
    %v1852 = vshrl.u32 %v1851, 7
    %v1853 = vsub.s32 %v1850, %v1852
    %v1854 = vrot.slane %v1840, %v1853
    %v1855 = vcombine.low %v1790, %v1806
    %v1856 = vcombine.high %v1790, %v1806
    %v1858 = vunpack.c.l.s4 1934713408
    %v1859 = vunpack.c.0.s8 %v1858
    %v1860 = vlaneseq
    %v1861 = vshrl.u32 %v1860, 7
    %v1862 = vsub.s32 %v1859, %v1861
    %v1863 = vrot.slane %v1855, %v1862
    %v1865 = vunpack.c.l.s4 1934713408
    %v1866 = vunpack.c.0.s8 %v1865
    %v1867 = vlaneseq
    %v1868 = vshrl.u32 %v1867, 7
    %v1869 = vsub.s32 %v1866, %v1868
    %v1870 = vrot.slane %v1856, %v1869
    %v1871 = vcombine.low %v1815, %v1831
    %v1872 = vcombine.high %v1815, %v1831
    %v1874 = vunpack.c.l.s4 1934713408
    %v1875 = vunpack.c.0.s8 %v1874
    %v1876 = vlaneseq
    %v1877 = vshrl.u32 %v1876, 7
    %v1878 = vsub.s32 %v1875, %v1877
    %v1879 = vrot.slane %v1871, %v1878
    %v1881 = vunpack.c.l.s4 1934713408
    %v1882 = vunpack.c.0.s8 %v1881
    %v1883 = vlaneseq
    %v1884 = vshrl.u32 %v1883, 7
    %v1885 = vsub.s32 %v1882, %v1884
    %v1886 = vrot.slane %v1872, %v1885
    %v1887 = vcombine.low %v1822, %v1838
    %v1888 = vcombine.high %v1822, %v1838
    %v1890 = vunpack.c.l.s4 1934713408
    %v1891 = vunpack.c.0.s8 %v1890
    %v1892 = vlaneseq
    %v1893 = vshrl.u32 %v1892, 7
    %v1894 = vsub.s32 %v1891, %v1893
    %v1895 = vrot.slane %v1887, %v1894
    %v1897 = vunpack.c.l.s4 1934713408
    %v1898 = vunpack.c.0.s8 %v1897
    %v1899 = vlaneseq
    %v1900 = vshrl.u32 %v1899, 7
    %v1901 = vsub.s32 %v1898, %v1900
    %v1902 = vrot.slane %v1888, %v1901
    %v1903 = vcombine.low %v1847, %v1879
    %v1904 = vcombine.high %v1847, %v1879
    %v1905 = vcombine.low %v1854, %v1886
    %v1906 = vcombine.high %v1854, %v1886
    %v1907 = vcombine.low %v1863, %v1895
    %v1908 = vcombine.high %v1863, %v1895
    %v1909 = vcombine.low %v1870, %v1902
    %v1910 = vcombine.high %v1870, %v1902
    %v1911 = vcombine.low %v53, %v321
    %v1912 = vcombine.high %v53, %v321
    %v1914 = vunpack.c.l.s4 1983009808
    %v1915 = vunpack.c.0.s8 %v1914
    %v1916 = vlaneseq
    %v1917 = vshrl.u32 %v1916, 7
    %v1918 = vsub.s32 %v1915, %v1917
    %v1919 = vrot.slane %v1911, %v1918
    %v1921 = vunpack.c.l.s4 1983009808
    %v1922 = vunpack.c.0.s8 %v1921
    %v1923 = vlaneseq
    %v1924 = vshrl.u32 %v1923, 7
    %v1925 = vsub.s32 %v1922, %v1924
    %v1926 = vrot.slane %v1912, %v1925
    %v1927 = vcombine.low %v187, %v455
    %v1928 = vcombine.high %v187, %v455
    %v1930 = vunpack.c.l.s4 1983009808
    %v1931 = vunpack.c.0.s8 %v1930
    %v1932 = vlaneseq
    %v1933 = vshrl.u32 %v1932, 7
    %v1934 = vsub.s32 %v1931, %v1933
    %v1935 = vrot.slane %v1927, %v1934
    %v1937 = vunpack.c.l.s4 1983009808
    %v1938 = vunpack.c.0.s8 %v1937
    %v1939 = vlaneseq
    %v1940 = vshrl.u32 %v1939, 7
    %v1941 = vsub.s32 %v1938, %v1940
    %v1942 = vrot.slane %v1928, %v1941
    %v1943 = vcombine.low %v589, %v857
    %v1944 = vcombine.high %v589, %v857
    %v1946 = vunpack.c.l.s4 1983009808
    %v1947 = vunpack.c.0.s8 %v1946
    %v1948 = vlaneseq
    %v1949 = vshrl.u32 %v1948, 7
    %v1950 = vsub.s32 %v1947, %v1949
    %v1951 = vrot.slane %v1943, %v1950
    %v1953 = vunpack.c.l.s4 1983009808
    %v1954 = vunpack.c.0.s8 %v1953
    %v1955 = vlaneseq
    %v1956 = vshrl.u32 %v1955, 7
    %v1957 = vsub.s32 %v1954, %v1956
    %v1958 = vrot.slane %v1944, %v1957
    %v1959 = vcombine.low %v723, %v991
    %v1960 = vcombine.high %v723, %v991
    %v1962 = vunpack.c.l.s4 1983009808
    %v1963 = vunpack.c.0.s8 %v1962
    %v1964 = vlaneseq
    %v1965 = vshrl.u32 %v1964, 7
    %v1966 = vsub.s32 %v1963, %v1965
    %v1967 = vrot.slane %v1959, %v1966
    %v1969 = vunpack.c.l.s4 1983009808
    %v1970 = vunpack.c.0.s8 %v1969
    %v1971 = vlaneseq
    %v1972 = vshrl.u32 %v1971, 7
    %v1973 = vsub.s32 %v1970, %v1972
    %v1974 = vrot.slane %v1960, %v1973
    %v1975 = vcombine.low %v1919, %v1935
    %v1976 = vcombine.high %v1919, %v1935
    %v1978 = vunpack.c.l.s4 1934713408
    %v1979 = vunpack.c.0.s8 %v1978
    %v1980 = vlaneseq
    %v1981 = vshrl.u32 %v1980, 7
    %v1982 = vsub.s32 %v1979, %v1981
    %v1983 = vrot.slane %v1975, %v1982
    %v1985 = vunpack.c.l.s4 1934713408
    %v1986 = vunpack.c.0.s8 %v1985
    %v1987 = vlaneseq
    %v1988 = vshrl.u32 %v1987, 7
    %v1989 = vsub.s32 %v1986, %v1988
    %v1990 = vrot.slane %v1976, %v1989
    %v1991 = vcombine.low %v1926, %v1942
    %v1992 = vcombine.high %v1926, %v1942
    %v1994 = vunpack.c.l.s4 1934713408
    %v1995 = vunpack.c.0.s8 %v1994
    %v1996 = vlaneseq
    %v1997 = vshrl.u32 %v1996, 7
    %v1998 = vsub.s32 %v1995, %v1997
    %v1999 = vrot.slane %v1991, %v1998
    %v2001 = vunpack.c.l.s4 1934713408
    %v2002 = vunpack.c.0.s8 %v2001
    %v2003 = vlaneseq
    %v2004 = vshrl.u32 %v2003, 7
    %v2005 = vsub.s32 %v2002, %v2004
    %v2006 = vrot.slane %v1992, %v2005
    %v2007 = vcombine.low %v1951, %v1967
    %v2008 = vcombine.high %v1951, %v1967
    %v2010 = vunpack.c.l.s4 1934713408
    %v2011 = vunpack.c.0.s8 %v2010
    %v2012 = vlaneseq
    %v2013 = vshrl.u32 %v2012, 7
    %v2014 = vsub.s32 %v2011, %v2013
    %v2015 = vrot.slane %v2007, %v2014
    %v2017 = vunpack.c.l.s4 1934713408
    %v2018 = vunpack.c.0.s8 %v2017
    %v2019 = vlaneseq
    %v2020 = vshrl.u32 %v2019, 7
    %v2021 = vsub.s32 %v2018, %v2020
    %v2022 = vrot.slane %v2008, %v2021
    %v2023 = vcombine.low %v1958, %v1974
    %v2024 = vcombine.high %v1958, %v1974
    %v2026 = vunpack.c.l.s4 1934713408
    %v2027 = vunpack.c.0.s8 %v2026
    %v2028 = vlaneseq
    %v2029 = vshrl.u32 %v2028, 7
    %v2030 = vsub.s32 %v2027, %v2029
    %v2031 = vrot.slane %v2023, %v2030
    %v2033 = vunpack.c.l.s4 1934713408
    %v2034 = vunpack.c.0.s8 %v2033
    %v2035 = vlaneseq
    %v2036 = vshrl.u32 %v2035, 7
    %v2037 = vsub.s32 %v2034, %v2036
    %v2038 = vrot.slane %v2024, %v2037
    %v2039 = vcombine.low %v1983, %v2015
    %v2040 = vcombine.high %v1983, %v2015
    %v2041 = vcombine.low %v1990, %v2022
    %v2042 = vcombine.high %v1990, %v2022
    %v2043 = vcombine.low %v1999, %v2031
    %v2044 = vcombine.high %v1999, %v2031
    %v2045 = vcombine.low %v2006, %v2038
    %v2046 = vcombine.high %v2006, %v2038
    %v2047 = vcombine.low %v57, %v325
    %v2048 = vcombine.high %v57, %v325
    %v2050 = vunpack.c.l.s4 1983009808
    %v2051 = vunpack.c.0.s8 %v2050
    %v2052 = vlaneseq
    %v2053 = vshrl.u32 %v2052, 7
    %v2054 = vsub.s32 %v2051, %v2053
    %v2055 = vrot.slane %v2047, %v2054
    %v2057 = vunpack.c.l.s4 1983009808
    %v2058 = vunpack.c.0.s8 %v2057
    %v2059 = vlaneseq
    %v2060 = vshrl.u32 %v2059, 7
    %v2061 = vsub.s32 %v2058, %v2060
    %v2062 = vrot.slane %v2048, %v2061
    %v2063 = vcombine.low %v191, %v459
    %v2064 = vcombine.high %v191, %v459
    %v2066 = vunpack.c.l.s4 1983009808
    %v2067 = vunpack.c.0.s8 %v2066
    %v2068 = vlaneseq
    %v2069 = vshrl.u32 %v2068, 7
    %v2070 = vsub.s32 %v2067, %v2069
    %v2071 = vrot.slane %v2063, %v2070
    %v2073 = vunpack.c.l.s4 1983009808
    %v2074 = vunpack.c.0.s8 %v2073
    %v2075 = vlaneseq
    %v2076 = vshrl.u32 %v2075, 7
    %v2077 = vsub.s32 %v2074, %v2076
    %v2078 = vrot.slane %v2064, %v2077
    %v2079 = vcombine.low %v593, %v861
    %v2080 = vcombine.high %v593, %v861
    %v2082 = vunpack.c.l.s4 1983009808
    %v2083 = vunpack.c.0.s8 %v2082
    %v2084 = vlaneseq
    %v2085 = vshrl.u32 %v2084, 7
    %v2086 = vsub.s32 %v2083, %v2085
    %v2087 = vrot.slane %v2079, %v2086
    %v2089 = vunpack.c.l.s4 1983009808
    %v2090 = vunpack.c.0.s8 %v2089
    %v2091 = vlaneseq
    %v2092 = vshrl.u32 %v2091, 7
    %v2093 = vsub.s32 %v2090, %v2092
    %v2094 = vrot.slane %v2080, %v2093
    %v2095 = vcombine.low %v727, %v995
    %v2096 = vcombine.high %v727, %v995
    %v2098 = vunpack.c.l.s4 1983009808
    %v2099 = vunpack.c.0.s8 %v2098
    %v2100 = vlaneseq
    %v2101 = vshrl.u32 %v2100, 7
    %v2102 = vsub.s32 %v2099, %v2101
    %v2103 = vrot.slane %v2095, %v2102
    %v2105 = vunpack.c.l.s4 1983009808
    %v2106 = vunpack.c.0.s8 %v2105
    %v2107 = vlaneseq
    %v2108 = vshrl.u32 %v2107, 7
    %v2109 = vsub.s32 %v2106, %v2108
    %v2110 = vrot.slane %v2096, %v2109
    %v2111 = vcombine.low %v2055, %v2071
    %v2112 = vcombine.high %v2055, %v2071
    %v2114 = vunpack.c.l.s4 1934713408
    %v2115 = vunpack.c.0.s8 %v2114
    %v2116 = vlaneseq
    %v2117 = vshrl.u32 %v2116, 7
    %v2118 = vsub.s32 %v2115, %v2117
    %v2119 = vrot.slane %v2111, %v2118
    %v2121 = vunpack.c.l.s4 1934713408
    %v2122 = vunpack.c.0.s8 %v2121
    %v2123 = vlaneseq
    %v2124 = vshrl.u32 %v2123, 7
    %v2125 = vsub.s32 %v2122, %v2124
    %v2126 = vrot.slane %v2112, %v2125
    %v2127 = vcombine.low %v2062, %v2078
    %v2128 = vcombine.high %v2062, %v2078
    %v2130 = vunpack.c.l.s4 1934713408
    %v2131 = vunpack.c.0.s8 %v2130
    %v2132 = vlaneseq
    %v2133 = vshrl.u32 %v2132, 7
    %v2134 = vsub.s32 %v2131, %v2133
    %v2135 = vrot.slane %v2127, %v2134
    %v2137 = vunpack.c.l.s4 1934713408
    %v2138 = vunpack.c.0.s8 %v2137
    %v2139 = vlaneseq
    %v2140 = vshrl.u32 %v2139, 7
    %v2141 = vsub.s32 %v2138, %v2140
    %v2142 = vrot.slane %v2128, %v2141
    %v2143 = vcombine.low %v2087, %v2103
    %v2144 = vcombine.high %v2087, %v2103
    %v2146 = vunpack.c.l.s4 1934713408
    %v2147 = vunpack.c.0.s8 %v2146
    %v2148 = vlaneseq
    %v2149 = vshrl.u32 %v2148, 7
    %v2150 = vsub.s32 %v2147, %v2149
    %v2151 = vrot.slane %v2143, %v2150
    %v2153 = vunpack.c.l.s4 1934713408
    %v2154 = vunpack.c.0.s8 %v2153
    %v2155 = vlaneseq
    %v2156 = vshrl.u32 %v2155, 7
    %v2157 = vsub.s32 %v2154, %v2156
    %v2158 = vrot.slane %v2144, %v2157
    %v2159 = vcombine.low %v2094, %v2110
    %v2160 = vcombine.high %v2094, %v2110
    %v2162 = vunpack.c.l.s4 1934713408
    %v2163 = vunpack.c.0.s8 %v2162
    %v2164 = vlaneseq
    %v2165 = vshrl.u32 %v2164, 7
    %v2166 = vsub.s32 %v2163, %v2165
    %v2167 = vrot.slane %v2159, %v2166
    %v2169 = vunpack.c.l.s4 1934713408
    %v2170 = vunpack.c.0.s8 %v2169
    %v2171 = vlaneseq
    %v2172 = vshrl.u32 %v2171, 7
    %v2173 = vsub.s32 %v2170, %v2172
    %v2174 = vrot.slane %v2160, %v2173
    %v2175 = vcombine.low %v2119, %v2151
    %v2176 = vcombine.high %v2119, %v2151
    %v2177 = vcombine.low %v2126, %v2158
    %v2178 = vcombine.high %v2126, %v2158
    %v2179 = vcombine.low %v2135, %v2167
    %v2180 = vcombine.high %v2135, %v2167
    %v2181 = vcombine.low %v2142, %v2174
    %v2182 = vcombine.high %v2142, %v2174
    %v2183 = vcombine.low %v61, %v329
    %v2184 = vcombine.high %v61, %v329
    %v2186 = vunpack.c.l.s4 1983009808
    %v2187 = vunpack.c.0.s8 %v2186
    %v2188 = vlaneseq
    %v2189 = vshrl.u32 %v2188, 7
    %v2190 = vsub.s32 %v2187, %v2189
    %v2191 = vrot.slane %v2183, %v2190
    %v2193 = vunpack.c.l.s4 1983009808
    %v2194 = vunpack.c.0.s8 %v2193
    %v2195 = vlaneseq
    %v2196 = vshrl.u32 %v2195, 7
    %v2197 = vsub.s32 %v2194, %v2196
    %v2198 = vrot.slane %v2184, %v2197
    %v2199 = vcombine.low %v195, %v463
    %v2200 = vcombine.high %v195, %v463
    %v2202 = vunpack.c.l.s4 1983009808
    %v2203 = vunpack.c.0.s8 %v2202
    %v2204 = vlaneseq
    %v2205 = vshrl.u32 %v2204, 7
    %v2206 = vsub.s32 %v2203, %v2205
    %v2207 = vrot.slane %v2199, %v2206
    %v2209 = vunpack.c.l.s4 1983009808
    %v2210 = vunpack.c.0.s8 %v2209
    %v2211 = vlaneseq
    %v2212 = vshrl.u32 %v2211, 7
    %v2213 = vsub.s32 %v2210, %v2212
    %v2214 = vrot.slane %v2200, %v2213
    %v2215 = vcombine.low %v597, %v865
    %v2216 = vcombine.high %v597, %v865
    %v2218 = vunpack.c.l.s4 1983009808
    %v2219 = vunpack.c.0.s8 %v2218
    %v2220 = vlaneseq
    %v2221 = vshrl.u32 %v2220, 7
    %v2222 = vsub.s32 %v2219, %v2221
    %v2223 = vrot.slane %v2215, %v2222
    %v2225 = vunpack.c.l.s4 1983009808
    %v2226 = vunpack.c.0.s8 %v2225
    %v2227 = vlaneseq
    %v2228 = vshrl.u32 %v2227, 7
    %v2229 = vsub.s32 %v2226, %v2228
    %v2230 = vrot.slane %v2216, %v2229
    %v2231 = vcombine.low %v731, %v999
    %v2232 = vcombine.high %v731, %v999
    %v2234 = vunpack.c.l.s4 1983009808
    %v2235 = vunpack.c.0.s8 %v2234
    %v2236 = vlaneseq
    %v2237 = vshrl.u32 %v2236, 7
    %v2238 = vsub.s32 %v2235, %v2237
    %v2239 = vrot.slane %v2231, %v2238
    %v2241 = vunpack.c.l.s4 1983009808
    %v2242 = vunpack.c.0.s8 %v2241
    %v2243 = vlaneseq
    %v2244 = vshrl.u32 %v2243, 7
    %v2245 = vsub.s32 %v2242, %v2244
    %v2246 = vrot.slane %v2232, %v2245
    %v2247 = vcombine.low %v2191, %v2207
    %v2248 = vcombine.high %v2191, %v2207
    %v2250 = vunpack.c.l.s4 1934713408
    %v2251 = vunpack.c.0.s8 %v2250
    %v2252 = vlaneseq
    %v2253 = vshrl.u32 %v2252, 7
    %v2254 = vsub.s32 %v2251, %v2253
    %v2255 = vrot.slane %v2247, %v2254
    %v2257 = vunpack.c.l.s4 1934713408
    %v2258 = vunpack.c.0.s8 %v2257
    %v2259 = vlaneseq
    %v2260 = vshrl.u32 %v2259, 7
    %v2261 = vsub.s32 %v2258, %v2260
    %v2262 = vrot.slane %v2248, %v2261
    %v2263 = vcombine.low %v2198, %v2214
    %v2264 = vcombine.high %v2198, %v2214
    %v2266 = vunpack.c.l.s4 1934713408
    %v2267 = vunpack.c.0.s8 %v2266
    %v2268 = vlaneseq
    %v2269 = vshrl.u32 %v2268, 7
    %v2270 = vsub.s32 %v2267, %v2269
    %v2271 = vrot.slane %v2263, %v2270
    %v2273 = vunpack.c.l.s4 1934713408
    %v2274 = vunpack.c.0.s8 %v2273
    %v2275 = vlaneseq
    %v2276 = vshrl.u32 %v2275, 7
    %v2277 = vsub.s32 %v2274, %v2276
    %v2278 = vrot.slane %v2264, %v2277
    %v2279 = vcombine.low %v2223, %v2239
    %v2280 = vcombine.high %v2223, %v2239
    %v2282 = vunpack.c.l.s4 1934713408
    %v2283 = vunpack.c.0.s8 %v2282
    %v2284 = vlaneseq
    %v2285 = vshrl.u32 %v2284, 7
    %v2286 = vsub.s32 %v2283, %v2285
    %v2287 = vrot.slane %v2279, %v2286
    %v2289 = vunpack.c.l.s4 1934713408
    %v2290 = vunpack.c.0.s8 %v2289
    %v2291 = vlaneseq
    %v2292 = vshrl.u32 %v2291, 7
    %v2293 = vsub.s32 %v2290, %v2292
    %v2294 = vrot.slane %v2280, %v2293
    %v2295 = vcombine.low %v2230, %v2246
    %v2296 = vcombine.high %v2230, %v2246
    %v2298 = vunpack.c.l.s4 1934713408
    %v2299 = vunpack.c.0.s8 %v2298
    %v2300 = vlaneseq
    %v2301 = vshrl.u32 %v2300, 7
    %v2302 = vsub.s32 %v2299, %v2301
    %v2303 = vrot.slane %v2295, %v2302
    %v2305 = vunpack.c.l.s4 1934713408
    %v2306 = vunpack.c.0.s8 %v2305
    %v2307 = vlaneseq
    %v2308 = vshrl.u32 %v2307, 7
    %v2309 = vsub.s32 %v2306, %v2308
    %v2310 = vrot.slane %v2296, %v2309
    %v2311 = vcombine.low %v2255, %v2287
    %v2312 = vcombine.high %v2255, %v2287
    %v2313 = vcombine.low %v2262, %v2294
    %v2314 = vcombine.high %v2262, %v2294
    %v2315 = vcombine.low %v2271, %v2303
    %v2316 = vcombine.high %v2271, %v2303
    %v2317 = vcombine.low %v2278, %v2310
    %v2318 = vcombine.high %v2278, %v2310
    %v2319 = vcombine.low %v65, %v333
    %v2320 = vcombine.high %v65, %v333
    %v2322 = vunpack.c.l.s4 1983009808
    %v2323 = vunpack.c.0.s8 %v2322
    %v2324 = vlaneseq
    %v2325 = vshrl.u32 %v2324, 7
    %v2326 = vsub.s32 %v2323, %v2325
    %v2327 = vrot.slane %v2319, %v2326
    %v2329 = vunpack.c.l.s4 1983009808
    %v2330 = vunpack.c.0.s8 %v2329
    %v2331 = vlaneseq
    %v2332 = vshrl.u32 %v2331, 7
    %v2333 = vsub.s32 %v2330, %v2332
    %v2334 = vrot.slane %v2320, %v2333
    %v2335 = vcombine.low %v199, %v467
    %v2336 = vcombine.high %v199, %v467
    %v2338 = vunpack.c.l.s4 1983009808
    %v2339 = vunpack.c.0.s8 %v2338
    %v2340 = vlaneseq
    %v2341 = vshrl.u32 %v2340, 7
    %v2342 = vsub.s32 %v2339, %v2341
    %v2343 = vrot.slane %v2335, %v2342
    %v2345 = vunpack.c.l.s4 1983009808
    %v2346 = vunpack.c.0.s8 %v2345
    %v2347 = vlaneseq
    %v2348 = vshrl.u32 %v2347, 7
    %v2349 = vsub.s32 %v2346, %v2348
    %v2350 = vrot.slane %v2336, %v2349
    %v2351 = vcombine.low %v601, %v869
    %v2352 = vcombine.high %v601, %v869
    %v2354 = vunpack.c.l.s4 1983009808
    %v2355 = vunpack.c.0.s8 %v2354
    %v2356 = vlaneseq
    %v2357 = vshrl.u32 %v2356, 7
    %v2358 = vsub.s32 %v2355, %v2357
    %v2359 = vrot.slane %v2351, %v2358
    %v2361 = vunpack.c.l.s4 1983009808
    %v2362 = vunpack.c.0.s8 %v2361
    %v2363 = vlaneseq
    %v2364 = vshrl.u32 %v2363, 7
    %v2365 = vsub.s32 %v2362, %v2364
    %v2366 = vrot.slane %v2352, %v2365
    %v2367 = vcombine.low %v735, %v1003
    %v2368 = vcombine.high %v735, %v1003
    %v2370 = vunpack.c.l.s4 1983009808
    %v2371 = vunpack.c.0.s8 %v2370
    %v2372 = vlaneseq
    %v2373 = vshrl.u32 %v2372, 7
    %v2374 = vsub.s32 %v2371, %v2373
    %v2375 = vrot.slane %v2367, %v2374
    %v2377 = vunpack.c.l.s4 1983009808
    %v2378 = vunpack.c.0.s8 %v2377
    %v2379 = vlaneseq
    %v2380 = vshrl.u32 %v2379, 7
    %v2381 = vsub.s32 %v2378, %v2380
    %v2382 = vrot.slane %v2368, %v2381
    %v2383 = vcombine.low %v2327, %v2343
    %v2384 = vcombine.high %v2327, %v2343
    %v2386 = vunpack.c.l.s4 1934713408
    %v2387 = vunpack.c.0.s8 %v2386
    %v2388 = vlaneseq
    %v2389 = vshrl.u32 %v2388, 7
    %v2390 = vsub.s32 %v2387, %v2389
    %v2391 = vrot.slane %v2383, %v2390
    %v2393 = vunpack.c.l.s4 1934713408
    %v2394 = vunpack.c.0.s8 %v2393
    %v2395 = vlaneseq
    %v2396 = vshrl.u32 %v2395, 7
    %v2397 = vsub.s32 %v2394, %v2396
    %v2398 = vrot.slane %v2384, %v2397
    %v2399 = vcombine.low %v2334, %v2350
    %v2400 = vcombine.high %v2334, %v2350
    %v2402 = vunpack.c.l.s4 1934713408
    %v2403 = vunpack.c.0.s8 %v2402
    %v2404 = vlaneseq
    %v2405 = vshrl.u32 %v2404, 7
    %v2406 = vsub.s32 %v2403, %v2405
    %v2407 = vrot.slane %v2399, %v2406
    %v2409 = vunpack.c.l.s4 1934713408
    %v2410 = vunpack.c.0.s8 %v2409
    %v2411 = vlaneseq
    %v2412 = vshrl.u32 %v2411, 7
    %v2413 = vsub.s32 %v2410, %v2412
    %v2414 = vrot.slane %v2400, %v2413
    %v2415 = vcombine.low %v2359, %v2375
    %v2416 = vcombine.high %v2359, %v2375
    %v2418 = vunpack.c.l.s4 1934713408
    %v2419 = vunpack.c.0.s8 %v2418
    %v2420 = vlaneseq
    %v2421 = vshrl.u32 %v2420, 7
    %v2422 = vsub.s32 %v2419, %v2421
    %v2423 = vrot.slane %v2415, %v2422
    %v2425 = vunpack.c.l.s4 1934713408
    %v2426 = vunpack.c.0.s8 %v2425
    %v2427 = vlaneseq
    %v2428 = vshrl.u32 %v2427, 7
    %v2429 = vsub.s32 %v2426, %v2428
    %v2430 = vrot.slane %v2416, %v2429
    %v2431 = vcombine.low %v2366, %v2382
    %v2432 = vcombine.high %v2366, %v2382
    %v2434 = vunpack.c.l.s4 1934713408
    %v2435 = vunpack.c.0.s8 %v2434
    %v2436 = vlaneseq
    %v2437 = vshrl.u32 %v2436, 7
    %v2438 = vsub.s32 %v2435, %v2437
    %v2439 = vrot.slane %v2431, %v2438
    %v2441 = vunpack.c.l.s4 1934713408
    %v2442 = vunpack.c.0.s8 %v2441
    %v2443 = vlaneseq
    %v2444 = vshrl.u32 %v2443, 7
    %v2445 = vsub.s32 %v2442, %v2444
    %v2446 = vrot.slane %v2432, %v2445
    %v2447 = vcombine.low %v2391, %v2423
    %v2448 = vcombine.high %v2391, %v2423
    %v2449 = vcombine.low %v2398, %v2430
    %v2450 = vcombine.high %v2398, %v2430
    %v2451 = vcombine.low %v2407, %v2439
    %v2452 = vcombine.high %v2407, %v2439
    %v2453 = vcombine.low %v2414, %v2446
    %v2454 = vcombine.high %v2414, %v2446
    %v2455 = vcombine.low %v69, %v337
    %v2456 = vcombine.high %v69, %v337
    %v2458 = vunpack.c.l.s4 1983009808
    %v2459 = vunpack.c.0.s8 %v2458
    %v2460 = vlaneseq
    %v2461 = vshrl.u32 %v2460, 7
    %v2462 = vsub.s32 %v2459, %v2461
    %v2463 = vrot.slane %v2455, %v2462
    %v2465 = vunpack.c.l.s4 1983009808
    %v2466 = vunpack.c.0.s8 %v2465
    %v2467 = vlaneseq
    %v2468 = vshrl.u32 %v2467, 7
    %v2469 = vsub.s32 %v2466, %v2468
    %v2470 = vrot.slane %v2456, %v2469
    %v2471 = vcombine.low %v203, %v471
    %v2472 = vcombine.high %v203, %v471
    %v2474 = vunpack.c.l.s4 1983009808
    %v2475 = vunpack.c.0.s8 %v2474
    %v2476 = vlaneseq
    %v2477 = vshrl.u32 %v2476, 7
    %v2478 = vsub.s32 %v2475, %v2477
    %v2479 = vrot.slane %v2471, %v2478
    %v2481 = vunpack.c.l.s4 1983009808
    %v2482 = vunpack.c.0.s8 %v2481
    %v2483 = vlaneseq
    %v2484 = vshrl.u32 %v2483, 7
    %v2485 = vsub.s32 %v2482, %v2484
    %v2486 = vrot.slane %v2472, %v2485
    %v2487 = vcombine.low %v605, %v873
    %v2488 = vcombine.high %v605, %v873
    %v2490 = vunpack.c.l.s4 1983009808
    %v2491 = vunpack.c.0.s8 %v2490
    %v2492 = vlaneseq
    %v2493 = vshrl.u32 %v2492, 7
    %v2494 = vsub.s32 %v2491, %v2493
    %v2495 = vrot.slane %v2487, %v2494
    %v2497 = vunpack.c.l.s4 1983009808
    %v2498 = vunpack.c.0.s8 %v2497
    %v2499 = vlaneseq
    %v2500 = vshrl.u32 %v2499, 7
    %v2501 = vsub.s32 %v2498, %v2500
    %v2502 = vrot.slane %v2488, %v2501
    %v2503 = vcombine.low %v739, %v1007
    %v2504 = vcombine.high %v739, %v1007
    %v2506 = vunpack.c.l.s4 1983009808
    %v2507 = vunpack.c.0.s8 %v2506
    %v2508 = vlaneseq
    %v2509 = vshrl.u32 %v2508, 7
    %v2510 = vsub.s32 %v2507, %v2509
    %v2511 = vrot.slane %v2503, %v2510
    %v2513 = vunpack.c.l.s4 1983009808
    %v2514 = vunpack.c.0.s8 %v2513
    %v2515 = vlaneseq
    %v2516 = vshrl.u32 %v2515, 7
    %v2517 = vsub.s32 %v2514, %v2516
    %v2518 = vrot.slane %v2504, %v2517
    %v2519 = vcombine.low %v2463, %v2479
    %v2520 = vcombine.high %v2463, %v2479
    %v2522 = vunpack.c.l.s4 1934713408
    %v2523 = vunpack.c.0.s8 %v2522
    %v2524 = vlaneseq
    %v2525 = vshrl.u32 %v2524, 7
    %v2526 = vsub.s32 %v2523, %v2525
    %v2527 = vrot.slane %v2519, %v2526
    %v2529 = vunpack.c.l.s4 1934713408
    %v2530 = vunpack.c.0.s8 %v2529
    %v2531 = vlaneseq
    %v2532 = vshrl.u32 %v2531, 7
    %v2533 = vsub.s32 %v2530, %v2532
    %v2534 = vrot.slane %v2520, %v2533
    %v2535 = vcombine.low %v2470, %v2486
    %v2536 = vcombine.high %v2470, %v2486
    %v2538 = vunpack.c.l.s4 1934713408
    %v2539 = vunpack.c.0.s8 %v2538
    %v2540 = vlaneseq
    %v2541 = vshrl.u32 %v2540, 7
    %v2542 = vsub.s32 %v2539, %v2541
    %v2543 = vrot.slane %v2535, %v2542
    %v2545 = vunpack.c.l.s4 1934713408
    %v2546 = vunpack.c.0.s8 %v2545
    %v2547 = vlaneseq
    %v2548 = vshrl.u32 %v2547, 7
    %v2549 = vsub.s32 %v2546, %v2548
    %v2550 = vrot.slane %v2536, %v2549
    %v2551 = vcombine.low %v2495, %v2511
    %v2552 = vcombine.high %v2495, %v2511
    %v2554 = vunpack.c.l.s4 1934713408
    %v2555 = vunpack.c.0.s8 %v2554
    %v2556 = vlaneseq
    %v2557 = vshrl.u32 %v2556, 7
    %v2558 = vsub.s32 %v2555, %v2557
    %v2559 = vrot.slane %v2551, %v2558
    %v2561 = vunpack.c.l.s4 1934713408
    %v2562 = vunpack.c.0.s8 %v2561
    %v2563 = vlaneseq
    %v2564 = vshrl.u32 %v2563, 7
    %v2565 = vsub.s32 %v2562, %v2564
    %v2566 = vrot.slane %v2552, %v2565
    %v2567 = vcombine.low %v2502, %v2518
    %v2568 = vcombine.high %v2502, %v2518
    %v2570 = vunpack.c.l.s4 1934713408
    %v2571 = vunpack.c.0.s8 %v2570
    %v2572 = vlaneseq
    %v2573 = vshrl.u32 %v2572, 7
    %v2574 = vsub.s32 %v2571, %v2573
    %v2575 = vrot.slane %v2567, %v2574
    %v2577 = vunpack.c.l.s4 1934713408
    %v2578 = vunpack.c.0.s8 %v2577
    %v2579 = vlaneseq
    %v2580 = vshrl.u32 %v2579, 7
    %v2581 = vsub.s32 %v2578, %v2580
    %v2582 = vrot.slane %v2568, %v2581
    %v2583 = vcombine.low %v2527, %v2559
    %v2584 = vcombine.high %v2527, %v2559
    %v2585 = vcombine.low %v2534, %v2566
    %v2586 = vcombine.high %v2534, %v2566
    %v2587 = vcombine.low %v2543, %v2575
    %v2588 = vcombine.high %v2543, %v2575
    %v2589 = vcombine.low %v2550, %v2582
    %v2590 = vcombine.high %v2550, %v2582
    %v2591 = vcombine.low %v73, %v341
    %v2592 = vcombine.high %v73, %v341
    %v2594 = vunpack.c.l.s4 1983009808
    %v2595 = vunpack.c.0.s8 %v2594
    %v2596 = vlaneseq
    %v2597 = vshrl.u32 %v2596, 7
    %v2598 = vsub.s32 %v2595, %v2597
    %v2599 = vrot.slane %v2591, %v2598
    %v2601 = vunpack.c.l.s4 1983009808
    %v2602 = vunpack.c.0.s8 %v2601
    %v2603 = vlaneseq
    %v2604 = vshrl.u32 %v2603, 7
    %v2605 = vsub.s32 %v2602, %v2604
    %v2606 = vrot.slane %v2592, %v2605
    %v2607 = vcombine.low %v207, %v475
    %v2608 = vcombine.high %v207, %v475
    %v2610 = vunpack.c.l.s4 1983009808
    %v2611 = vunpack.c.0.s8 %v2610
    %v2612 = vlaneseq
    %v2613 = vshrl.u32 %v2612, 7
    %v2614 = vsub.s32 %v2611, %v2613
    %v2615 = vrot.slane %v2607, %v2614
    %v2617 = vunpack.c.l.s4 1983009808
    %v2618 = vunpack.c.0.s8 %v2617
    %v2619 = vlaneseq
    %v2620 = vshrl.u32 %v2619, 7
    %v2621 = vsub.s32 %v2618, %v2620
    %v2622 = vrot.slane %v2608, %v2621
    %v2623 = vcombine.low %v609, %v877
    %v2624 = vcombine.high %v609, %v877
    %v2626 = vunpack.c.l.s4 1983009808
    %v2627 = vunpack.c.0.s8 %v2626
    %v2628 = vlaneseq
    %v2629 = vshrl.u32 %v2628, 7
    %v2630 = vsub.s32 %v2627, %v2629
    %v2631 = vrot.slane %v2623, %v2630
    %v2633 = vunpack.c.l.s4 1983009808
    %v2634 = vunpack.c.0.s8 %v2633
    %v2635 = vlaneseq
    %v2636 = vshrl.u32 %v2635, 7
    %v2637 = vsub.s32 %v2634, %v2636
    %v2638 = vrot.slane %v2624, %v2637
    %v2639 = vcombine.low %v743, %v1011
    %v2640 = vcombine.high %v743, %v1011
    %v2642 = vunpack.c.l.s4 1983009808
    %v2643 = vunpack.c.0.s8 %v2642
    %v2644 = vlaneseq
    %v2645 = vshrl.u32 %v2644, 7
    %v2646 = vsub.s32 %v2643, %v2645
    %v2647 = vrot.slane %v2639, %v2646
    %v2649 = vunpack.c.l.s4 1983009808
    %v2650 = vunpack.c.0.s8 %v2649
    %v2651 = vlaneseq
    %v2652 = vshrl.u32 %v2651, 7
    %v2653 = vsub.s32 %v2650, %v2652
    %v2654 = vrot.slane %v2640, %v2653
    %v2655 = vcombine.low %v2599, %v2615
    %v2656 = vcombine.high %v2599, %v2615
    %v2658 = vunpack.c.l.s4 1934713408
    %v2659 = vunpack.c.0.s8 %v2658
    %v2660 = vlaneseq
    %v2661 = vshrl.u32 %v2660, 7
    %v2662 = vsub.s32 %v2659, %v2661
    %v2663 = vrot.slane %v2655, %v2662
    %v2665 = vunpack.c.l.s4 1934713408
    %v2666 = vunpack.c.0.s8 %v2665
    %v2667 = vlaneseq
    %v2668 = vshrl.u32 %v2667, 7
    %v2669 = vsub.s32 %v2666, %v2668
    %v2670 = vrot.slane %v2656, %v2669
    %v2671 = vcombine.low %v2606, %v2622
    %v2672 = vcombine.high %v2606, %v2622
    %v2674 = vunpack.c.l.s4 1934713408
    %v2675 = vunpack.c.0.s8 %v2674
    %v2676 = vlaneseq
    %v2677 = vshrl.u32 %v2676, 7
    %v2678 = vsub.s32 %v2675, %v2677
    %v2679 = vrot.slane %v2671, %v2678
    %v2681 = vunpack.c.l.s4 1934713408
    %v2682 = vunpack.c.0.s8 %v2681
    %v2683 = vlaneseq
    %v2684 = vshrl.u32 %v2683, 7
    %v2685 = vsub.s32 %v2682, %v2684
    %v2686 = vrot.slane %v2672, %v2685
    %v2687 = vcombine.low %v2631, %v2647
    %v2688 = vcombine.high %v2631, %v2647
    %v2690 = vunpack.c.l.s4 1934713408
    %v2691 = vunpack.c.0.s8 %v2690
    %v2692 = vlaneseq
    %v2693 = vshrl.u32 %v2692, 7
    %v2694 = vsub.s32 %v2691, %v2693
    %v2695 = vrot.slane %v2687, %v2694
    %v2697 = vunpack.c.l.s4 1934713408
    %v2698 = vunpack.c.0.s8 %v2697
    %v2699 = vlaneseq
    %v2700 = vshrl.u32 %v2699, 7
    %v2701 = vsub.s32 %v2698, %v2700
    %v2702 = vrot.slane %v2688, %v2701
    %v2703 = vcombine.low %v2638, %v2654
    %v2704 = vcombine.high %v2638, %v2654
    %v2706 = vunpack.c.l.s4 1934713408
    %v2707 = vunpack.c.0.s8 %v2706
    %v2708 = vlaneseq
    %v2709 = vshrl.u32 %v2708, 7
    %v2710 = vsub.s32 %v2707, %v2709
    %v2711 = vrot.slane %v2703, %v2710
    %v2713 = vunpack.c.l.s4 1934713408
    %v2714 = vunpack.c.0.s8 %v2713
    %v2715 = vlaneseq
    %v2716 = vshrl.u32 %v2715, 7
    %v2717 = vsub.s32 %v2714, %v2716
    %v2718 = vrot.slane %v2704, %v2717
    %v2719 = vcombine.low %v2663, %v2695
    %v2720 = vcombine.high %v2663, %v2695
    %v2721 = vcombine.low %v2670, %v2702
    %v2722 = vcombine.high %v2670, %v2702
    %v2723 = vcombine.low %v2679, %v2711
    %v2724 = vcombine.high %v2679, %v2711
    %v2725 = vcombine.low %v2686, %v2718
    %v2726 = vcombine.high %v2686, %v2718
    %v2727 = vcombine.low %v77, %v345
    %v2728 = vcombine.high %v77, %v345
    %v2730 = vunpack.c.l.s4 1983009808
    %v2731 = vunpack.c.0.s8 %v2730
    %v2732 = vlaneseq
    %v2733 = vshrl.u32 %v2732, 7
    %v2734 = vsub.s32 %v2731, %v2733
    %v2735 = vrot.slane %v2727, %v2734
    %v2737 = vunpack.c.l.s4 1983009808
    %v2738 = vunpack.c.0.s8 %v2737
    %v2739 = vlaneseq
    %v2740 = vshrl.u32 %v2739, 7
    %v2741 = vsub.s32 %v2738, %v2740
    %v2742 = vrot.slane %v2728, %v2741
    %v2743 = vcombine.low %v211, %v479
    %v2744 = vcombine.high %v211, %v479
    %v2746 = vunpack.c.l.s4 1983009808
    %v2747 = vunpack.c.0.s8 %v2746
    %v2748 = vlaneseq
    %v2749 = vshrl.u32 %v2748, 7
    %v2750 = vsub.s32 %v2747, %v2749
    %v2751 = vrot.slane %v2743, %v2750
    %v2753 = vunpack.c.l.s4 1983009808
    %v2754 = vunpack.c.0.s8 %v2753
    %v2755 = vlaneseq
    %v2756 = vshrl.u32 %v2755, 7
    %v2757 = vsub.s32 %v2754, %v2756
    %v2758 = vrot.slane %v2744, %v2757
    %v2759 = vcombine.low %v613, %v881
    %v2760 = vcombine.high %v613, %v881
    %v2762 = vunpack.c.l.s4 1983009808
    %v2763 = vunpack.c.0.s8 %v2762
    %v2764 = vlaneseq
    %v2765 = vshrl.u32 %v2764, 7
    %v2766 = vsub.s32 %v2763, %v2765
    %v2767 = vrot.slane %v2759, %v2766
    %v2769 = vunpack.c.l.s4 1983009808
    %v2770 = vunpack.c.0.s8 %v2769
    %v2771 = vlaneseq
    %v2772 = vshrl.u32 %v2771, 7
    %v2773 = vsub.s32 %v2770, %v2772
    %v2774 = vrot.slane %v2760, %v2773
    %v2775 = vcombine.low %v747, %v1015
    %v2776 = vcombine.high %v747, %v1015
    %v2778 = vunpack.c.l.s4 1983009808
    %v2779 = vunpack.c.0.s8 %v2778
    %v2780 = vlaneseq
    %v2781 = vshrl.u32 %v2780, 7
    %v2782 = vsub.s32 %v2779, %v2781
    %v2783 = vrot.slane %v2775, %v2782
    %v2785 = vunpack.c.l.s4 1983009808
    %v2786 = vunpack.c.0.s8 %v2785
    %v2787 = vlaneseq
    %v2788 = vshrl.u32 %v2787, 7
    %v2789 = vsub.s32 %v2786, %v2788
    %v2790 = vrot.slane %v2776, %v2789
    %v2791 = vcombine.low %v2735, %v2751
    %v2792 = vcombine.high %v2735, %v2751
    %v2794 = vunpack.c.l.s4 1934713408
    %v2795 = vunpack.c.0.s8 %v2794
    %v2796 = vlaneseq
    %v2797 = vshrl.u32 %v2796, 7
    %v2798 = vsub.s32 %v2795, %v2797
    %v2799 = vrot.slane %v2791, %v2798
    %v2801 = vunpack.c.l.s4 1934713408
    %v2802 = vunpack.c.0.s8 %v2801
    %v2803 = vlaneseq
    %v2804 = vshrl.u32 %v2803, 7
    %v2805 = vsub.s32 %v2802, %v2804
    %v2806 = vrot.slane %v2792, %v2805
    %v2807 = vcombine.low %v2742, %v2758
    %v2808 = vcombine.high %v2742, %v2758
    %v2810 = vunpack.c.l.s4 1934713408
    %v2811 = vunpack.c.0.s8 %v2810
    %v2812 = vlaneseq
    %v2813 = vshrl.u32 %v2812, 7
    %v2814 = vsub.s32 %v2811, %v2813
    %v2815 = vrot.slane %v2807, %v2814
    %v2817 = vunpack.c.l.s4 1934713408
    %v2818 = vunpack.c.0.s8 %v2817
    %v2819 = vlaneseq
    %v2820 = vshrl.u32 %v2819, 7
    %v2821 = vsub.s32 %v2818, %v2820
    %v2822 = vrot.slane %v2808, %v2821
    %v2823 = vcombine.low %v2767, %v2783
    %v2824 = vcombine.high %v2767, %v2783
    %v2826 = vunpack.c.l.s4 1934713408
    %v2827 = vunpack.c.0.s8 %v2826
    %v2828 = vlaneseq
    %v2829 = vshrl.u32 %v2828, 7
    %v2830 = vsub.s32 %v2827, %v2829
    %v2831 = vrot.slane %v2823, %v2830
    %v2833 = vunpack.c.l.s4 1934713408
    %v2834 = vunpack.c.0.s8 %v2833
    %v2835 = vlaneseq
    %v2836 = vshrl.u32 %v2835, 7
    %v2837 = vsub.s32 %v2834, %v2836
    %v2838 = vrot.slane %v2824, %v2837
    %v2839 = vcombine.low %v2774, %v2790
    %v2840 = vcombine.high %v2774, %v2790
    %v2842 = vunpack.c.l.s4 1934713408
    %v2843 = vunpack.c.0.s8 %v2842
    %v2844 = vlaneseq
    %v2845 = vshrl.u32 %v2844, 7
    %v2846 = vsub.s32 %v2843, %v2845
    %v2847 = vrot.slane %v2839, %v2846
    %v2849 = vunpack.c.l.s4 1934713408
    %v2850 = vunpack.c.0.s8 %v2849
    %v2851 = vlaneseq
    %v2852 = vshrl.u32 %v2851, 7
    %v2853 = vsub.s32 %v2850, %v2852
    %v2854 = vrot.slane %v2840, %v2853
    %v2855 = vcombine.low %v2799, %v2831
    %v2856 = vcombine.high %v2799, %v2831
    %v2857 = vcombine.low %v2806, %v2838
    %v2858 = vcombine.high %v2806, %v2838
    %v2859 = vcombine.low %v2815, %v2847
    %v2860 = vcombine.high %v2815, %v2847
    %v2861 = vcombine.low %v2822, %v2854
    %v2862 = vcombine.high %v2822, %v2854
    %v2863 = vcombine.low %v81, %v349
    %v2864 = vcombine.high %v81, %v349
    %v2866 = vunpack.c.l.s4 1983009808
    %v2867 = vunpack.c.0.s8 %v2866
    %v2868 = vlaneseq
    %v2869 = vshrl.u32 %v2868, 7
    %v2870 = vsub.s32 %v2867, %v2869
    %v2871 = vrot.slane %v2863, %v2870
    %v2873 = vunpack.c.l.s4 1983009808
    %v2874 = vunpack.c.0.s8 %v2873
    %v2875 = vlaneseq
    %v2876 = vshrl.u32 %v2875, 7
    %v2877 = vsub.s32 %v2874, %v2876
    %v2878 = vrot.slane %v2864, %v2877
    %v2879 = vcombine.low %v215, %v483
    %v2880 = vcombine.high %v215, %v483
    %v2882 = vunpack.c.l.s4 1983009808
    %v2883 = vunpack.c.0.s8 %v2882
    %v2884 = vlaneseq
    %v2885 = vshrl.u32 %v2884, 7
    %v2886 = vsub.s32 %v2883, %v2885
    %v2887 = vrot.slane %v2879, %v2886
    %v2889 = vunpack.c.l.s4 1983009808
    %v2890 = vunpack.c.0.s8 %v2889
    %v2891 = vlaneseq
    %v2892 = vshrl.u32 %v2891, 7
    %v2893 = vsub.s32 %v2890, %v2892
    %v2894 = vrot.slane %v2880, %v2893
    %v2895 = vcombine.low %v617, %v885
    %v2896 = vcombine.high %v617, %v885
    %v2898 = vunpack.c.l.s4 1983009808
    %v2899 = vunpack.c.0.s8 %v2898
    %v2900 = vlaneseq
    %v2901 = vshrl.u32 %v2900, 7
    %v2902 = vsub.s32 %v2899, %v2901
    %v2903 = vrot.slane %v2895, %v2902
    %v2905 = vunpack.c.l.s4 1983009808
    %v2906 = vunpack.c.0.s8 %v2905
    %v2907 = vlaneseq
    %v2908 = vshrl.u32 %v2907, 7
    %v2909 = vsub.s32 %v2906, %v2908
    %v2910 = vrot.slane %v2896, %v2909
    %v2911 = vcombine.low %v751, %v1019
    %v2912 = vcombine.high %v751, %v1019
    %v2914 = vunpack.c.l.s4 1983009808
    %v2915 = vunpack.c.0.s8 %v2914
    %v2916 = vlaneseq
    %v2917 = vshrl.u32 %v2916, 7
    %v2918 = vsub.s32 %v2915, %v2917
    %v2919 = vrot.slane %v2911, %v2918
    %v2921 = vunpack.c.l.s4 1983009808
    %v2922 = vunpack.c.0.s8 %v2921
    %v2923 = vlaneseq
    %v2924 = vshrl.u32 %v2923, 7
    %v2925 = vsub.s32 %v2922, %v2924
    %v2926 = vrot.slane %v2912, %v2925
    %v2927 = vcombine.low %v2871, %v2887
    %v2928 = vcombine.high %v2871, %v2887
    %v2930 = vunpack.c.l.s4 1934713408
    %v2931 = vunpack.c.0.s8 %v2930
    %v2932 = vlaneseq
    %v2933 = vshrl.u32 %v2932, 7
    %v2934 = vsub.s32 %v2931, %v2933
    %v2935 = vrot.slane %v2927, %v2934
    %v2937 = vunpack.c.l.s4 1934713408
    %v2938 = vunpack.c.0.s8 %v2937
    %v2939 = vlaneseq
    %v2940 = vshrl.u32 %v2939, 7
    %v2941 = vsub.s32 %v2938, %v2940
    %v2942 = vrot.slane %v2928, %v2941
    %v2943 = vcombine.low %v2878, %v2894
    %v2944 = vcombine.high %v2878, %v2894
    %v2946 = vunpack.c.l.s4 1934713408
    %v2947 = vunpack.c.0.s8 %v2946
    %v2948 = vlaneseq
    %v2949 = vshrl.u32 %v2948, 7
    %v2950 = vsub.s32 %v2947, %v2949
    %v2951 = vrot.slane %v2943, %v2950
    %v2953 = vunpack.c.l.s4 1934713408
    %v2954 = vunpack.c.0.s8 %v2953
    %v2955 = vlaneseq
    %v2956 = vshrl.u32 %v2955, 7
    %v2957 = vsub.s32 %v2954, %v2956
    %v2958 = vrot.slane %v2944, %v2957
    %v2959 = vcombine.low %v2903, %v2919
    %v2960 = vcombine.high %v2903, %v2919
    %v2962 = vunpack.c.l.s4 1934713408
    %v2963 = vunpack.c.0.s8 %v2962
    %v2964 = vlaneseq
    %v2965 = vshrl.u32 %v2964, 7
    %v2966 = vsub.s32 %v2963, %v2965
    %v2967 = vrot.slane %v2959, %v2966
    %v2969 = vunpack.c.l.s4 1934713408
    %v2970 = vunpack.c.0.s8 %v2969
    %v2971 = vlaneseq
    %v2972 = vshrl.u32 %v2971, 7
    %v2973 = vsub.s32 %v2970, %v2972
    %v2974 = vrot.slane %v2960, %v2973
    %v2975 = vcombine.low %v2910, %v2926
    %v2976 = vcombine.high %v2910, %v2926
    %v2978 = vunpack.c.l.s4 1934713408
    %v2979 = vunpack.c.0.s8 %v2978
    %v2980 = vlaneseq
    %v2981 = vshrl.u32 %v2980, 7
    %v2982 = vsub.s32 %v2979, %v2981
    %v2983 = vrot.slane %v2975, %v2982
    %v2985 = vunpack.c.l.s4 1934713408
    %v2986 = vunpack.c.0.s8 %v2985
    %v2987 = vlaneseq
    %v2988 = vshrl.u32 %v2987, 7
    %v2989 = vsub.s32 %v2986, %v2988
    %v2990 = vrot.slane %v2976, %v2989
    %v2991 = vcombine.low %v2935, %v2967
    %v2992 = vcombine.high %v2935, %v2967
    %v2993 = vcombine.low %v2942, %v2974
    %v2994 = vcombine.high %v2942, %v2974
    %v2995 = vcombine.low %v2951, %v2983
    %v2996 = vcombine.high %v2951, %v2983
    %v2997 = vcombine.low %v2958, %v2990
    %v2998 = vcombine.high %v2958, %v2990
    %v2999 = vcombine.low %v85, %v353
    %v3000 = vcombine.high %v85, %v353
    %v3002 = vunpack.c.l.s4 1983009808
    %v3003 = vunpack.c.0.s8 %v3002
    %v3004 = vlaneseq
    %v3005 = vshrl.u32 %v3004, 7
    %v3006 = vsub.s32 %v3003, %v3005
    %v3007 = vrot.slane %v2999, %v3006
    %v3009 = vunpack.c.l.s4 1983009808
    %v3010 = vunpack.c.0.s8 %v3009
    %v3011 = vlaneseq
    %v3012 = vshrl.u32 %v3011, 7
    %v3013 = vsub.s32 %v3010, %v3012
    %v3014 = vrot.slane %v3000, %v3013
    %v3015 = vcombine.low %v219, %v487
    %v3016 = vcombine.high %v219, %v487
    %v3018 = vunpack.c.l.s4 1983009808
    %v3019 = vunpack.c.0.s8 %v3018
    %v3020 = vlaneseq
    %v3021 = vshrl.u32 %v3020, 7
    %v3022 = vsub.s32 %v3019, %v3021
    %v3023 = vrot.slane %v3015, %v3022
    %v3025 = vunpack.c.l.s4 1983009808
    %v3026 = vunpack.c.0.s8 %v3025
    %v3027 = vlaneseq
    %v3028 = vshrl.u32 %v3027, 7
    %v3029 = vsub.s32 %v3026, %v3028
    %v3030 = vrot.slane %v3016, %v3029
    %v3031 = vcombine.low %v621, %v889
    %v3032 = vcombine.high %v621, %v889
    %v3034 = vunpack.c.l.s4 1983009808
    %v3035 = vunpack.c.0.s8 %v3034
    %v3036 = vlaneseq
    %v3037 = vshrl.u32 %v3036, 7
    %v3038 = vsub.s32 %v3035, %v3037
    %v3039 = vrot.slane %v3031, %v3038
    %v3041 = vunpack.c.l.s4 1983009808
    %v3042 = vunpack.c.0.s8 %v3041
    %v3043 = vlaneseq
    %v3044 = vshrl.u32 %v3043, 7
    %v3045 = vsub.s32 %v3042, %v3044
    %v3046 = vrot.slane %v3032, %v3045
    %v3047 = vcombine.low %v755, %v1023
    %v3048 = vcombine.high %v755, %v1023
    %v3050 = vunpack.c.l.s4 1983009808
    %v3051 = vunpack.c.0.s8 %v3050
    %v3052 = vlaneseq
    %v3053 = vshrl.u32 %v3052, 7
    %v3054 = vsub.s32 %v3051, %v3053
    %v3055 = vrot.slane %v3047, %v3054
    %v3057 = vunpack.c.l.s4 1983009808
    %v3058 = vunpack.c.0.s8 %v3057
    %v3059 = vlaneseq
    %v3060 = vshrl.u32 %v3059, 7
    %v3061 = vsub.s32 %v3058, %v3060
    %v3062 = vrot.slane %v3048, %v3061
    %v3063 = vcombine.low %v3007, %v3023
    %v3064 = vcombine.high %v3007, %v3023
    %v3066 = vunpack.c.l.s4 1934713408
    %v3067 = vunpack.c.0.s8 %v3066
    %v3068 = vlaneseq
    %v3069 = vshrl.u32 %v3068, 7
    %v3070 = vsub.s32 %v3067, %v3069
    %v3071 = vrot.slane %v3063, %v3070
    %v3073 = vunpack.c.l.s4 1934713408
    %v3074 = vunpack.c.0.s8 %v3073
    %v3075 = vlaneseq
    %v3076 = vshrl.u32 %v3075, 7
    %v3077 = vsub.s32 %v3074, %v3076
    %v3078 = vrot.slane %v3064, %v3077
    %v3079 = vcombine.low %v3014, %v3030
    %v3080 = vcombine.high %v3014, %v3030
    %v3082 = vunpack.c.l.s4 1934713408
    %v3083 = vunpack.c.0.s8 %v3082
    %v3084 = vlaneseq
    %v3085 = vshrl.u32 %v3084, 7
    %v3086 = vsub.s32 %v3083, %v3085
    %v3087 = vrot.slane %v3079, %v3086
    %v3089 = vunpack.c.l.s4 1934713408
    %v3090 = vunpack.c.0.s8 %v3089
    %v3091 = vlaneseq
    %v3092 = vshrl.u32 %v3091, 7
    %v3093 = vsub.s32 %v3090, %v3092
    %v3094 = vrot.slane %v3080, %v3093
    %v3095 = vcombine.low %v3039, %v3055
    %v3096 = vcombine.high %v3039, %v3055
    %v3098 = vunpack.c.l.s4 1934713408
    %v3099 = vunpack.c.0.s8 %v3098
    %v3100 = vlaneseq
    %v3101 = vshrl.u32 %v3100, 7
    %v3102 = vsub.s32 %v3099, %v3101
    %v3103 = vrot.slane %v3095, %v3102
    %v3105 = vunpack.c.l.s4 1934713408
    %v3106 = vunpack.c.0.s8 %v3105
    %v3107 = vlaneseq
    %v3108 = vshrl.u32 %v3107, 7
    %v3109 = vsub.s32 %v3106, %v3108
    %v3110 = vrot.slane %v3096, %v3109
    %v3111 = vcombine.low %v3046, %v3062
    %v3112 = vcombine.high %v3046, %v3062
    %v3114 = vunpack.c.l.s4 1934713408
    %v3115 = vunpack.c.0.s8 %v3114
    %v3116 = vlaneseq
    %v3117 = vshrl.u32 %v3116, 7
    %v3118 = vsub.s32 %v3115, %v3117
    %v3119 = vrot.slane %v3111, %v3118
    %v3121 = vunpack.c.l.s4 1934713408
    %v3122 = vunpack.c.0.s8 %v3121
    %v3123 = vlaneseq
    %v3124 = vshrl.u32 %v3123, 7
    %v3125 = vsub.s32 %v3122, %v3124
    %v3126 = vrot.slane %v3112, %v3125
    %v3127 = vcombine.low %v3071, %v3103
    %v3128 = vcombine.high %v3071, %v3103
    %v3129 = vcombine.low %v3078, %v3110
    %v3130 = vcombine.high %v3078, %v3110
    %v3131 = vcombine.low %v3087, %v3119
    %v3132 = vcombine.high %v3087, %v3119
    %v3133 = vcombine.low %v3094, %v3126
    %v3134 = vcombine.high %v3094, %v3126
    %v3135 = vcombine.low %v89, %v357
    %v3136 = vcombine.high %v89, %v357
    %v3138 = vunpack.c.l.s4 1983009808
    %v3139 = vunpack.c.0.s8 %v3138
    %v3140 = vlaneseq
    %v3141 = vshrl.u32 %v3140, 7
    %v3142 = vsub.s32 %v3139, %v3141
    %v3143 = vrot.slane %v3135, %v3142
    %v3145 = vunpack.c.l.s4 1983009808
    %v3146 = vunpack.c.0.s8 %v3145
    %v3147 = vlaneseq
    %v3148 = vshrl.u32 %v3147, 7
    %v3149 = vsub.s32 %v3146, %v3148
    %v3150 = vrot.slane %v3136, %v3149
    %v3151 = vcombine.low %v223, %v491
    %v3152 = vcombine.high %v223, %v491
    %v3154 = vunpack.c.l.s4 1983009808
    %v3155 = vunpack.c.0.s8 %v3154
    %v3156 = vlaneseq
    %v3157 = vshrl.u32 %v3156, 7
    %v3158 = vsub.s32 %v3155, %v3157
    %v3159 = vrot.slane %v3151, %v3158
    %v3161 = vunpack.c.l.s4 1983009808
    %v3162 = vunpack.c.0.s8 %v3161
    %v3163 = vlaneseq
    %v3164 = vshrl.u32 %v3163, 7
    %v3165 = vsub.s32 %v3162, %v3164
    %v3166 = vrot.slane %v3152, %v3165
    %v3167 = vcombine.low %v625, %v893
    %v3168 = vcombine.high %v625, %v893
    %v3170 = vunpack.c.l.s4 1983009808
    %v3171 = vunpack.c.0.s8 %v3170
    %v3172 = vlaneseq
    %v3173 = vshrl.u32 %v3172, 7
    %v3174 = vsub.s32 %v3171, %v3173
    %v3175 = vrot.slane %v3167, %v3174
    %v3177 = vunpack.c.l.s4 1983009808
    %v3178 = vunpack.c.0.s8 %v3177
    %v3179 = vlaneseq
    %v3180 = vshrl.u32 %v3179, 7
    %v3181 = vsub.s32 %v3178, %v3180
    %v3182 = vrot.slane %v3168, %v3181
    %v3183 = vcombine.low %v759, %v1027
    %v3184 = vcombine.high %v759, %v1027
    %v3186 = vunpack.c.l.s4 1983009808
    %v3187 = vunpack.c.0.s8 %v3186
    %v3188 = vlaneseq
    %v3189 = vshrl.u32 %v3188, 7
    %v3190 = vsub.s32 %v3187, %v3189
    %v3191 = vrot.slane %v3183, %v3190
    %v3193 = vunpack.c.l.s4 1983009808
    %v3194 = vunpack.c.0.s8 %v3193
    %v3195 = vlaneseq
    %v3196 = vshrl.u32 %v3195, 7
    %v3197 = vsub.s32 %v3194, %v3196
    %v3198 = vrot.slane %v3184, %v3197
    %v3199 = vcombine.low %v3143, %v3159
    %v3200 = vcombine.high %v3143, %v3159
    %v3202 = vunpack.c.l.s4 1934713408
    %v3203 = vunpack.c.0.s8 %v3202
    %v3204 = vlaneseq
    %v3205 = vshrl.u32 %v3204, 7
    %v3206 = vsub.s32 %v3203, %v3205
    %v3207 = vrot.slane %v3199, %v3206
    %v3209 = vunpack.c.l.s4 1934713408
    %v3210 = vunpack.c.0.s8 %v3209
    %v3211 = vlaneseq
    %v3212 = vshrl.u32 %v3211, 7
    %v3213 = vsub.s32 %v3210, %v3212
    %v3214 = vrot.slane %v3200, %v3213
    %v3215 = vcombine.low %v3150, %v3166
    %v3216 = vcombine.high %v3150, %v3166
    %v3218 = vunpack.c.l.s4 1934713408
    %v3219 = vunpack.c.0.s8 %v3218
    %v3220 = vlaneseq
    %v3221 = vshrl.u32 %v3220, 7
    %v3222 = vsub.s32 %v3219, %v3221
    %v3223 = vrot.slane %v3215, %v3222
    %v3225 = vunpack.c.l.s4 1934713408
    %v3226 = vunpack.c.0.s8 %v3225
    %v3227 = vlaneseq
    %v3228 = vshrl.u32 %v3227, 7
    %v3229 = vsub.s32 %v3226, %v3228
    %v3230 = vrot.slane %v3216, %v3229
    %v3231 = vcombine.low %v3175, %v3191
    %v3232 = vcombine.high %v3175, %v3191
    %v3234 = vunpack.c.l.s4 1934713408
    %v3235 = vunpack.c.0.s8 %v3234
    %v3236 = vlaneseq
    %v3237 = vshrl.u32 %v3236, 7
    %v3238 = vsub.s32 %v3235, %v3237
    %v3239 = vrot.slane %v3231, %v3238
    %v3241 = vunpack.c.l.s4 1934713408
    %v3242 = vunpack.c.0.s8 %v3241
    %v3243 = vlaneseq
    %v3244 = vshrl.u32 %v3243, 7
    %v3245 = vsub.s32 %v3242, %v3244
    %v3246 = vrot.slane %v3232, %v3245
    %v3247 = vcombine.low %v3182, %v3198
    %v3248 = vcombine.high %v3182, %v3198
    %v3250 = vunpack.c.l.s4 1934713408
    %v3251 = vunpack.c.0.s8 %v3250
    %v3252 = vlaneseq
    %v3253 = vshrl.u32 %v3252, 7
    %v3254 = vsub.s32 %v3251, %v3253
    %v3255 = vrot.slane %v3247, %v3254
    %v3257 = vunpack.c.l.s4 1934713408
    %v3258 = vunpack.c.0.s8 %v3257
    %v3259 = vlaneseq
    %v3260 = vshrl.u32 %v3259, 7
    %v3261 = vsub.s32 %v3258, %v3260
    %v3262 = vrot.slane %v3248, %v3261
    %v3263 = vcombine.low %v3207, %v3239
    %v3264 = vcombine.high %v3207, %v3239
    %v3265 = vcombine.low %v3214, %v3246
    %v3266 = vcombine.high %v3214, %v3246
    %v3267 = vcombine.low %v3223, %v3255
    %v3268 = vcombine.high %v3223, %v3255
    %v3269 = vcombine.low %v3230, %v3262
    %v3270 = vcombine.high %v3230, %v3262
    %v3271 = vcombine.low %v96, %v364
    %v3272 = vcombine.high %v96, %v364
    %v3274 = vunpack.c.l.s4 1983009808
    %v3275 = vunpack.c.0.s8 %v3274
    %v3276 = vlaneseq
    %v3277 = vshrl.u32 %v3276, 7
    %v3278 = vsub.s32 %v3275, %v3277
    %v3279 = vrot.slane %v3271, %v3278
    %v3281 = vunpack.c.l.s4 1983009808
    %v3282 = vunpack.c.0.s8 %v3281
    %v3283 = vlaneseq
    %v3284 = vshrl.u32 %v3283, 7
    %v3285 = vsub.s32 %v3282, %v3284
    %v3286 = vrot.slane %v3272, %v3285
    %v3287 = vcombine.low %v230, %v498
    %v3288 = vcombine.high %v230, %v498
    %v3290 = vunpack.c.l.s4 1983009808
    %v3291 = vunpack.c.0.s8 %v3290
    %v3292 = vlaneseq
    %v3293 = vshrl.u32 %v3292, 7
    %v3294 = vsub.s32 %v3291, %v3293
    %v3295 = vrot.slane %v3287, %v3294
    %v3297 = vunpack.c.l.s4 1983009808
    %v3298 = vunpack.c.0.s8 %v3297
    %v3299 = vlaneseq
    %v3300 = vshrl.u32 %v3299, 7
    %v3301 = vsub.s32 %v3298, %v3300
    %v3302 = vrot.slane %v3288, %v3301
    %v3303 = vcombine.low %v632, %v900
    %v3304 = vcombine.high %v632, %v900
    %v3306 = vunpack.c.l.s4 1983009808
    %v3307 = vunpack.c.0.s8 %v3306
    %v3308 = vlaneseq
    %v3309 = vshrl.u32 %v3308, 7
    %v3310 = vsub.s32 %v3307, %v3309
    %v3311 = vrot.slane %v3303, %v3310
    %v3313 = vunpack.c.l.s4 1983009808
    %v3314 = vunpack.c.0.s8 %v3313
    %v3315 = vlaneseq
    %v3316 = vshrl.u32 %v3315, 7
    %v3317 = vsub.s32 %v3314, %v3316
    %v3318 = vrot.slane %v3304, %v3317
    %v3319 = vcombine.low %v766, %v1034
    %v3320 = vcombine.high %v766, %v1034
    %v3322 = vunpack.c.l.s4 1983009808
    %v3323 = vunpack.c.0.s8 %v3322
    %v3324 = vlaneseq
    %v3325 = vshrl.u32 %v3324, 7
    %v3326 = vsub.s32 %v3323, %v3325
    %v3327 = vrot.slane %v3319, %v3326
    %v3329 = vunpack.c.l.s4 1983009808
    %v3330 = vunpack.c.0.s8 %v3329
    %v3331 = vlaneseq
    %v3332 = vshrl.u32 %v3331, 7
    %v3333 = vsub.s32 %v3330, %v3332
    %v3334 = vrot.slane %v3320, %v3333
    %v3335 = vcombine.low %v3279, %v3295
    %v3336 = vcombine.high %v3279, %v3295
    %v3338 = vunpack.c.l.s4 1934713408
    %v3339 = vunpack.c.0.s8 %v3338
    %v3340 = vlaneseq
    %v3341 = vshrl.u32 %v3340, 7
    %v3342 = vsub.s32 %v3339, %v3341
    %v3343 = vrot.slane %v3335, %v3342
    %v3345 = vunpack.c.l.s4 1934713408
    %v3346 = vunpack.c.0.s8 %v3345
    %v3347 = vlaneseq
    %v3348 = vshrl.u32 %v3347, 7
    %v3349 = vsub.s32 %v3346, %v3348
    %v3350 = vrot.slane %v3336, %v3349
    %v3351 = vcombine.low %v3286, %v3302
    %v3352 = vcombine.high %v3286, %v3302
    %v3354 = vunpack.c.l.s4 1934713408
    %v3355 = vunpack.c.0.s8 %v3354
    %v3356 = vlaneseq
    %v3357 = vshrl.u32 %v3356, 7
    %v3358 = vsub.s32 %v3355, %v3357
    %v3359 = vrot.slane %v3351, %v3358
    %v3361 = vunpack.c.l.s4 1934713408
    %v3362 = vunpack.c.0.s8 %v3361
    %v3363 = vlaneseq
    %v3364 = vshrl.u32 %v3363, 7
    %v3365 = vsub.s32 %v3362, %v3364
    %v3366 = vrot.slane %v3352, %v3365
    %v3367 = vcombine.low %v3311, %v3327
    %v3368 = vcombine.high %v3311, %v3327
    %v3370 = vunpack.c.l.s4 1934713408
    %v3371 = vunpack.c.0.s8 %v3370
    %v3372 = vlaneseq
    %v3373 = vshrl.u32 %v3372, 7
    %v3374 = vsub.s32 %v3371, %v3373
    %v3375 = vrot.slane %v3367, %v3374
    %v3377 = vunpack.c.l.s4 1934713408
    %v3378 = vunpack.c.0.s8 %v3377
    %v3379 = vlaneseq
    %v3380 = vshrl.u32 %v3379, 7
    %v3381 = vsub.s32 %v3378, %v3380
    %v3382 = vrot.slane %v3368, %v3381
    %v3383 = vcombine.low %v3318, %v3334
    %v3384 = vcombine.high %v3318, %v3334
    %v3386 = vunpack.c.l.s4 1934713408
    %v3387 = vunpack.c.0.s8 %v3386
    %v3388 = vlaneseq
    %v3389 = vshrl.u32 %v3388, 7
    %v3390 = vsub.s32 %v3387, %v3389
    %v3391 = vrot.slane %v3383, %v3390
    %v3393 = vunpack.c.l.s4 1934713408
    %v3394 = vunpack.c.0.s8 %v3393
    %v3395 = vlaneseq
    %v3396 = vshrl.u32 %v3395, 7
    %v3397 = vsub.s32 %v3394, %v3396
    %v3398 = vrot.slane %v3384, %v3397
    %v3399 = vcombine.low %v3343, %v3375
    %v3400 = vcombine.high %v3343, %v3375
    %v3401 = vcombine.low %v3350, %v3382
    %v3402 = vcombine.high %v3350, %v3382
    %v3403 = vcombine.low %v3359, %v3391
    %v3404 = vcombine.high %v3359, %v3391
    %v3405 = vcombine.low %v3366, %v3398
    %v3406 = vcombine.high %v3366, %v3398
    %v3407 = vcombine.low %v100, %v368
    %v3408 = vcombine.high %v100, %v368
    %v3410 = vunpack.c.l.s4 1983009808
    %v3411 = vunpack.c.0.s8 %v3410
    %v3412 = vlaneseq
    %v3413 = vshrl.u32 %v3412, 7
    %v3414 = vsub.s32 %v3411, %v3413
    %v3415 = vrot.slane %v3407, %v3414
    %v3417 = vunpack.c.l.s4 1983009808
    %v3418 = vunpack.c.0.s8 %v3417
    %v3419 = vlaneseq
    %v3420 = vshrl.u32 %v3419, 7
    %v3421 = vsub.s32 %v3418, %v3420
    %v3422 = vrot.slane %v3408, %v3421
    %v3423 = vcombine.low %v234, %v502
    %v3424 = vcombine.high %v234, %v502
    %v3426 = vunpack.c.l.s4 1983009808
    %v3427 = vunpack.c.0.s8 %v3426
    %v3428 = vlaneseq
    %v3429 = vshrl.u32 %v3428, 7
    %v3430 = vsub.s32 %v3427, %v3429
    %v3431 = vrot.slane %v3423, %v3430
    %v3433 = vunpack.c.l.s4 1983009808
    %v3434 = vunpack.c.0.s8 %v3433
    %v3435 = vlaneseq
    %v3436 = vshrl.u32 %v3435, 7
    %v3437 = vsub.s32 %v3434, %v3436
    %v3438 = vrot.slane %v3424, %v3437
    %v3439 = vcombine.low %v636, %v904
    %v3440 = vcombine.high %v636, %v904
    %v3442 = vunpack.c.l.s4 1983009808
    %v3443 = vunpack.c.0.s8 %v3442
    %v3444 = vlaneseq
    %v3445 = vshrl.u32 %v3444, 7
    %v3446 = vsub.s32 %v3443, %v3445
    %v3447 = vrot.slane %v3439, %v3446
    %v3449 = vunpack.c.l.s4 1983009808
    %v3450 = vunpack.c.0.s8 %v3449
    %v3451 = vlaneseq
    %v3452 = vshrl.u32 %v3451, 7
    %v3453 = vsub.s32 %v3450, %v3452
    %v3454 = vrot.slane %v3440, %v3453
    %v3455 = vcombine.low %v770, %v1038
    %v3456 = vcombine.high %v770, %v1038
    %v3458 = vunpack.c.l.s4 1983009808
    %v3459 = vunpack.c.0.s8 %v3458
    %v3460 = vlaneseq
    %v3461 = vshrl.u32 %v3460, 7
    %v3462 = vsub.s32 %v3459, %v3461
    %v3463 = vrot.slane %v3455, %v3462
    %v3465 = vunpack.c.l.s4 1983009808
    %v3466 = vunpack.c.0.s8 %v3465
    %v3467 = vlaneseq
    %v3468 = vshrl.u32 %v3467, 7
    %v3469 = vsub.s32 %v3466, %v3468
    %v3470 = vrot.slane %v3456, %v3469
    %v3471 = vcombine.low %v3415, %v3431
    %v3472 = vcombine.high %v3415, %v3431
    %v3474 = vunpack.c.l.s4 1934713408
    %v3475 = vunpack.c.0.s8 %v3474
    %v3476 = vlaneseq
    %v3477 = vshrl.u32 %v3476, 7
    %v3478 = vsub.s32 %v3475, %v3477
    %v3479 = vrot.slane %v3471, %v3478
    %v3481 = vunpack.c.l.s4 1934713408
    %v3482 = vunpack.c.0.s8 %v3481
    %v3483 = vlaneseq
    %v3484 = vshrl.u32 %v3483, 7
    %v3485 = vsub.s32 %v3482, %v3484
    %v3486 = vrot.slane %v3472, %v3485
    %v3487 = vcombine.low %v3422, %v3438
    %v3488 = vcombine.high %v3422, %v3438
    %v3490 = vunpack.c.l.s4 1934713408
    %v3491 = vunpack.c.0.s8 %v3490
    %v3492 = vlaneseq
    %v3493 = vshrl.u32 %v3492, 7
    %v3494 = vsub.s32 %v3491, %v3493
    %v3495 = vrot.slane %v3487, %v3494
    %v3497 = vunpack.c.l.s4 1934713408
    %v3498 = vunpack.c.0.s8 %v3497
    %v3499 = vlaneseq
    %v3500 = vshrl.u32 %v3499, 7
    %v3501 = vsub.s32 %v3498, %v3500
    %v3502 = vrot.slane %v3488, %v3501
    %v3503 = vcombine.low %v3447, %v3463
    %v3504 = vcombine.high %v3447, %v3463
    %v3506 = vunpack.c.l.s4 1934713408
    %v3507 = vunpack.c.0.s8 %v3506
    %v3508 = vlaneseq
    %v3509 = vshrl.u32 %v3508, 7
    %v3510 = vsub.s32 %v3507, %v3509
    %v3511 = vrot.slane %v3503, %v3510
    %v3513 = vunpack.c.l.s4 1934713408
    %v3514 = vunpack.c.0.s8 %v3513
    %v3515 = vlaneseq
    %v3516 = vshrl.u32 %v3515, 7
    %v3517 = vsub.s32 %v3514, %v3516
    %v3518 = vrot.slane %v3504, %v3517
    %v3519 = vcombine.low %v3454, %v3470
    %v3520 = vcombine.high %v3454, %v3470
    %v3522 = vunpack.c.l.s4 1934713408
    %v3523 = vunpack.c.0.s8 %v3522
    %v3524 = vlaneseq
    %v3525 = vshrl.u32 %v3524, 7
    %v3526 = vsub.s32 %v3523, %v3525
    %v3527 = vrot.slane %v3519, %v3526
    %v3529 = vunpack.c.l.s4 1934713408
    %v3530 = vunpack.c.0.s8 %v3529
    %v3531 = vlaneseq
    %v3532 = vshrl.u32 %v3531, 7
    %v3533 = vsub.s32 %v3530, %v3532
    %v3534 = vrot.slane %v3520, %v3533
    %v3535 = vcombine.low %v3479, %v3511
    %v3536 = vcombine.high %v3479, %v3511
    %v3537 = vcombine.low %v3486, %v3518
    %v3538 = vcombine.high %v3486, %v3518
    %v3539 = vcombine.low %v3495, %v3527
    %v3540 = vcombine.high %v3495, %v3527
    %v3541 = vcombine.low %v3502, %v3534
    %v3542 = vcombine.high %v3502, %v3534
    %v3543 = vcombine.low %v104, %v372
    %v3544 = vcombine.high %v104, %v372
    %v3546 = vunpack.c.l.s4 1983009808
    %v3547 = vunpack.c.0.s8 %v3546
    %v3548 = vlaneseq
    %v3549 = vshrl.u32 %v3548, 7
    %v3550 = vsub.s32 %v3547, %v3549
    %v3551 = vrot.slane %v3543, %v3550
    %v3553 = vunpack.c.l.s4 1983009808
    %v3554 = vunpack.c.0.s8 %v3553
    %v3555 = vlaneseq
    %v3556 = vshrl.u32 %v3555, 7
    %v3557 = vsub.s32 %v3554, %v3556
    %v3558 = vrot.slane %v3544, %v3557
    %v3559 = vcombine.low %v238, %v506
    %v3560 = vcombine.high %v238, %v506
    %v3562 = vunpack.c.l.s4 1983009808
    %v3563 = vunpack.c.0.s8 %v3562
    %v3564 = vlaneseq
    %v3565 = vshrl.u32 %v3564, 7
    %v3566 = vsub.s32 %v3563, %v3565
    %v3567 = vrot.slane %v3559, %v3566
    %v3569 = vunpack.c.l.s4 1983009808
    %v3570 = vunpack.c.0.s8 %v3569
    %v3571 = vlaneseq
    %v3572 = vshrl.u32 %v3571, 7
    %v3573 = vsub.s32 %v3570, %v3572
    %v3574 = vrot.slane %v3560, %v3573
    %v3575 = vcombine.low %v640, %v908
    %v3576 = vcombine.high %v640, %v908
    %v3578 = vunpack.c.l.s4 1983009808
    %v3579 = vunpack.c.0.s8 %v3578
    %v3580 = vlaneseq
    %v3581 = vshrl.u32 %v3580, 7
    %v3582 = vsub.s32 %v3579, %v3581
    %v3583 = vrot.slane %v3575, %v3582
    %v3585 = vunpack.c.l.s4 1983009808
    %v3586 = vunpack.c.0.s8 %v3585
    %v3587 = vlaneseq
    %v3588 = vshrl.u32 %v3587, 7
    %v3589 = vsub.s32 %v3586, %v3588
    %v3590 = vrot.slane %v3576, %v3589
    %v3591 = vcombine.low %v774, %v1042
    %v3592 = vcombine.high %v774, %v1042
    %v3594 = vunpack.c.l.s4 1983009808
    %v3595 = vunpack.c.0.s8 %v3594
    %v3596 = vlaneseq
    %v3597 = vshrl.u32 %v3596, 7
    %v3598 = vsub.s32 %v3595, %v3597
    %v3599 = vrot.slane %v3591, %v3598
    %v3601 = vunpack.c.l.s4 1983009808
    %v3602 = vunpack.c.0.s8 %v3601
    %v3603 = vlaneseq
    %v3604 = vshrl.u32 %v3603, 7
    %v3605 = vsub.s32 %v3602, %v3604
    %v3606 = vrot.slane %v3592, %v3605
    %v3607 = vcombine.low %v3551, %v3567
    %v3608 = vcombine.high %v3551, %v3567
    %v3610 = vunpack.c.l.s4 1934713408
    %v3611 = vunpack.c.0.s8 %v3610
    %v3612 = vlaneseq
    %v3613 = vshrl.u32 %v3612, 7
    %v3614 = vsub.s32 %v3611, %v3613
    %v3615 = vrot.slane %v3607, %v3614
    %v3617 = vunpack.c.l.s4 1934713408
    %v3618 = vunpack.c.0.s8 %v3617
    %v3619 = vlaneseq
    %v3620 = vshrl.u32 %v3619, 7
    %v3621 = vsub.s32 %v3618, %v3620
    %v3622 = vrot.slane %v3608, %v3621
    %v3623 = vcombine.low %v3558, %v3574
    %v3624 = vcombine.high %v3558, %v3574
    %v3626 = vunpack.c.l.s4 1934713408
    %v3627 = vunpack.c.0.s8 %v3626
    %v3628 = vlaneseq
    %v3629 = vshrl.u32 %v3628, 7
    %v3630 = vsub.s32 %v3627, %v3629
    %v3631 = vrot.slane %v3623, %v3630
    %v3633 = vunpack.c.l.s4 1934713408
    %v3634 = vunpack.c.0.s8 %v3633
    %v3635 = vlaneseq
    %v3636 = vshrl.u32 %v3635, 7
    %v3637 = vsub.s32 %v3634, %v3636
    %v3638 = vrot.slane %v3624, %v3637
    %v3639 = vcombine.low %v3583, %v3599
    %v3640 = vcombine.high %v3583, %v3599
    %v3642 = vunpack.c.l.s4 1934713408
    %v3643 = vunpack.c.0.s8 %v3642
    %v3644 = vlaneseq
    %v3645 = vshrl.u32 %v3644, 7
    %v3646 = vsub.s32 %v3643, %v3645
    %v3647 = vrot.slane %v3639, %v3646
    %v3649 = vunpack.c.l.s4 1934713408
    %v3650 = vunpack.c.0.s8 %v3649
    %v3651 = vlaneseq
    %v3652 = vshrl.u32 %v3651, 7
    %v3653 = vsub.s32 %v3650, %v3652
    %v3654 = vrot.slane %v3640, %v3653
    %v3655 = vcombine.low %v3590, %v3606
    %v3656 = vcombine.high %v3590, %v3606
    %v3658 = vunpack.c.l.s4 1934713408
    %v3659 = vunpack.c.0.s8 %v3658
    %v3660 = vlaneseq
    %v3661 = vshrl.u32 %v3660, 7
    %v3662 = vsub.s32 %v3659, %v3661
    %v3663 = vrot.slane %v3655, %v3662
    %v3665 = vunpack.c.l.s4 1934713408
    %v3666 = vunpack.c.0.s8 %v3665
    %v3667 = vlaneseq
    %v3668 = vshrl.u32 %v3667, 7
    %v3669 = vsub.s32 %v3666, %v3668
    %v3670 = vrot.slane %v3656, %v3669
    %v3671 = vcombine.low %v3615, %v3647
    %v3672 = vcombine.high %v3615, %v3647
    %v3673 = vcombine.low %v3622, %v3654
    %v3674 = vcombine.high %v3622, %v3654
    %v3675 = vcombine.low %v3631, %v3663
    %v3676 = vcombine.high %v3631, %v3663
    %v3677 = vcombine.low %v3638, %v3670
    %v3678 = vcombine.high %v3638, %v3670
    %v3679 = vcombine.low %v108, %v376
    %v3680 = vcombine.high %v108, %v376
    %v3682 = vunpack.c.l.s4 1983009808
    %v3683 = vunpack.c.0.s8 %v3682
    %v3684 = vlaneseq
    %v3685 = vshrl.u32 %v3684, 7
    %v3686 = vsub.s32 %v3683, %v3685
    %v3687 = vrot.slane %v3679, %v3686
    %v3689 = vunpack.c.l.s4 1983009808
    %v3690 = vunpack.c.0.s8 %v3689
    %v3691 = vlaneseq
    %v3692 = vshrl.u32 %v3691, 7
    %v3693 = vsub.s32 %v3690, %v3692
    %v3694 = vrot.slane %v3680, %v3693
    %v3695 = vcombine.low %v242, %v510
    %v3696 = vcombine.high %v242, %v510
    %v3698 = vunpack.c.l.s4 1983009808
    %v3699 = vunpack.c.0.s8 %v3698
    %v3700 = vlaneseq
    %v3701 = vshrl.u32 %v3700, 7
    %v3702 = vsub.s32 %v3699, %v3701
    %v3703 = vrot.slane %v3695, %v3702
    %v3705 = vunpack.c.l.s4 1983009808
    %v3706 = vunpack.c.0.s8 %v3705
    %v3707 = vlaneseq
    %v3708 = vshrl.u32 %v3707, 7
    %v3709 = vsub.s32 %v3706, %v3708
    %v3710 = vrot.slane %v3696, %v3709
    %v3711 = vcombine.low %v644, %v912
    %v3712 = vcombine.high %v644, %v912
    %v3714 = vunpack.c.l.s4 1983009808
    %v3715 = vunpack.c.0.s8 %v3714
    %v3716 = vlaneseq
    %v3717 = vshrl.u32 %v3716, 7
    %v3718 = vsub.s32 %v3715, %v3717
    %v3719 = vrot.slane %v3711, %v3718
    %v3721 = vunpack.c.l.s4 1983009808
    %v3722 = vunpack.c.0.s8 %v3721
    %v3723 = vlaneseq
    %v3724 = vshrl.u32 %v3723, 7
    %v3725 = vsub.s32 %v3722, %v3724
    %v3726 = vrot.slane %v3712, %v3725
    %v3727 = vcombine.low %v778, %v1046
    %v3728 = vcombine.high %v778, %v1046
    %v3730 = vunpack.c.l.s4 1983009808
    %v3731 = vunpack.c.0.s8 %v3730
    %v3732 = vlaneseq
    %v3733 = vshrl.u32 %v3732, 7
    %v3734 = vsub.s32 %v3731, %v3733
    %v3735 = vrot.slane %v3727, %v3734
    %v3737 = vunpack.c.l.s4 1983009808
    %v3738 = vunpack.c.0.s8 %v3737
    %v3739 = vlaneseq
    %v3740 = vshrl.u32 %v3739, 7
    %v3741 = vsub.s32 %v3738, %v3740
    %v3742 = vrot.slane %v3728, %v3741
    %v3743 = vcombine.low %v3687, %v3703
    %v3744 = vcombine.high %v3687, %v3703
    %v3746 = vunpack.c.l.s4 1934713408
    %v3747 = vunpack.c.0.s8 %v3746
    %v3748 = vlaneseq
    %v3749 = vshrl.u32 %v3748, 7
    %v3750 = vsub.s32 %v3747, %v3749
    %v3751 = vrot.slane %v3743, %v3750
    %v3753 = vunpack.c.l.s4 1934713408
    %v3754 = vunpack.c.0.s8 %v3753
    %v3755 = vlaneseq
    %v3756 = vshrl.u32 %v3755, 7
    %v3757 = vsub.s32 %v3754, %v3756
    %v3758 = vrot.slane %v3744, %v3757
    %v3759 = vcombine.low %v3694, %v3710
    %v3760 = vcombine.high %v3694, %v3710
    %v3762 = vunpack.c.l.s4 1934713408
    %v3763 = vunpack.c.0.s8 %v3762
    %v3764 = vlaneseq
    %v3765 = vshrl.u32 %v3764, 7
    %v3766 = vsub.s32 %v3763, %v3765
    %v3767 = vrot.slane %v3759, %v3766
    %v3769 = vunpack.c.l.s4 1934713408
    %v3770 = vunpack.c.0.s8 %v3769
    %v3771 = vlaneseq
    %v3772 = vshrl.u32 %v3771, 7
    %v3773 = vsub.s32 %v3770, %v3772
    %v3774 = vrot.slane %v3760, %v3773
    %v3775 = vcombine.low %v3719, %v3735
    %v3776 = vcombine.high %v3719, %v3735
    %v3778 = vunpack.c.l.s4 1934713408
    %v3779 = vunpack.c.0.s8 %v3778
    %v3780 = vlaneseq
    %v3781 = vshrl.u32 %v3780, 7
    %v3782 = vsub.s32 %v3779, %v3781
    %v3783 = vrot.slane %v3775, %v3782
    %v3785 = vunpack.c.l.s4 1934713408
    %v3786 = vunpack.c.0.s8 %v3785
    %v3787 = vlaneseq
    %v3788 = vshrl.u32 %v3787, 7
    %v3789 = vsub.s32 %v3786, %v3788
    %v3790 = vrot.slane %v3776, %v3789
    %v3791 = vcombine.low %v3726, %v3742
    %v3792 = vcombine.high %v3726, %v3742
    %v3794 = vunpack.c.l.s4 1934713408
    %v3795 = vunpack.c.0.s8 %v3794
    %v3796 = vlaneseq
    %v3797 = vshrl.u32 %v3796, 7
    %v3798 = vsub.s32 %v3795, %v3797
    %v3799 = vrot.slane %v3791, %v3798
    %v3801 = vunpack.c.l.s4 1934713408
    %v3802 = vunpack.c.0.s8 %v3801
    %v3803 = vlaneseq
    %v3804 = vshrl.u32 %v3803, 7
    %v3805 = vsub.s32 %v3802, %v3804
    %v3806 = vrot.slane %v3792, %v3805
    %v3807 = vcombine.low %v3751, %v3783
    %v3808 = vcombine.high %v3751, %v3783
    %v3809 = vcombine.low %v3758, %v3790
    %v3810 = vcombine.high %v3758, %v3790
    %v3811 = vcombine.low %v3767, %v3799
    %v3812 = vcombine.high %v3767, %v3799
    %v3813 = vcombine.low %v3774, %v3806
    %v3814 = vcombine.high %v3774, %v3806
    %v3815 = vcombine.low %v112, %v380
    %v3816 = vcombine.high %v112, %v380
    %v3818 = vunpack.c.l.s4 1983009808
    %v3819 = vunpack.c.0.s8 %v3818
    %v3820 = vlaneseq
    %v3821 = vshrl.u32 %v3820, 7
    %v3822 = vsub.s32 %v3819, %v3821
    %v3823 = vrot.slane %v3815, %v3822
    %v3825 = vunpack.c.l.s4 1983009808
    %v3826 = vunpack.c.0.s8 %v3825
    %v3827 = vlaneseq
    %v3828 = vshrl.u32 %v3827, 7
    %v3829 = vsub.s32 %v3826, %v3828
    %v3830 = vrot.slane %v3816, %v3829
    %v3831 = vcombine.low %v246, %v514
    %v3832 = vcombine.high %v246, %v514
    %v3834 = vunpack.c.l.s4 1983009808
    %v3835 = vunpack.c.0.s8 %v3834
    %v3836 = vlaneseq
    %v3837 = vshrl.u32 %v3836, 7
    %v3838 = vsub.s32 %v3835, %v3837
    %v3839 = vrot.slane %v3831, %v3838
    %v3841 = vunpack.c.l.s4 1983009808
    %v3842 = vunpack.c.0.s8 %v3841
    %v3843 = vlaneseq
    %v3844 = vshrl.u32 %v3843, 7
    %v3845 = vsub.s32 %v3842, %v3844
    %v3846 = vrot.slane %v3832, %v3845
    %v3847 = vcombine.low %v648, %v916
    %v3848 = vcombine.high %v648, %v916
    %v3850 = vunpack.c.l.s4 1983009808
    %v3851 = vunpack.c.0.s8 %v3850
    %v3852 = vlaneseq
    %v3853 = vshrl.u32 %v3852, 7
    %v3854 = vsub.s32 %v3851, %v3853
    %v3855 = vrot.slane %v3847, %v3854
    %v3857 = vunpack.c.l.s4 1983009808
    %v3858 = vunpack.c.0.s8 %v3857
    %v3859 = vlaneseq
    %v3860 = vshrl.u32 %v3859, 7
    %v3861 = vsub.s32 %v3858, %v3860
    %v3862 = vrot.slane %v3848, %v3861
    %v3863 = vcombine.low %v782, %v1050
    %v3864 = vcombine.high %v782, %v1050
    %v3866 = vunpack.c.l.s4 1983009808
    %v3867 = vunpack.c.0.s8 %v3866
    %v3868 = vlaneseq
    %v3869 = vshrl.u32 %v3868, 7
    %v3870 = vsub.s32 %v3867, %v3869
    %v3871 = vrot.slane %v3863, %v3870
    %v3873 = vunpack.c.l.s4 1983009808
    %v3874 = vunpack.c.0.s8 %v3873
    %v3875 = vlaneseq
    %v3876 = vshrl.u32 %v3875, 7
    %v3877 = vsub.s32 %v3874, %v3876
    %v3878 = vrot.slane %v3864, %v3877
    %v3879 = vcombine.low %v3823, %v3839
    %v3880 = vcombine.high %v3823, %v3839
    %v3882 = vunpack.c.l.s4 1934713408
    %v3883 = vunpack.c.0.s8 %v3882
    %v3884 = vlaneseq
    %v3885 = vshrl.u32 %v3884, 7
    %v3886 = vsub.s32 %v3883, %v3885
    %v3887 = vrot.slane %v3879, %v3886
    %v3889 = vunpack.c.l.s4 1934713408
    %v3890 = vunpack.c.0.s8 %v3889
    %v3891 = vlaneseq
    %v3892 = vshrl.u32 %v3891, 7
    %v3893 = vsub.s32 %v3890, %v3892
    %v3894 = vrot.slane %v3880, %v3893
    %v3895 = vcombine.low %v3830, %v3846
    %v3896 = vcombine.high %v3830, %v3846
    %v3898 = vunpack.c.l.s4 1934713408
    %v3899 = vunpack.c.0.s8 %v3898
    %v3900 = vlaneseq
    %v3901 = vshrl.u32 %v3900, 7
    %v3902 = vsub.s32 %v3899, %v3901
    %v3903 = vrot.slane %v3895, %v3902
    %v3905 = vunpack.c.l.s4 1934713408
    %v3906 = vunpack.c.0.s8 %v3905
    %v3907 = vlaneseq
    %v3908 = vshrl.u32 %v3907, 7
    %v3909 = vsub.s32 %v3906, %v3908
    %v3910 = vrot.slane %v3896, %v3909
    %v3911 = vcombine.low %v3855, %v3871
    %v3912 = vcombine.high %v3855, %v3871
    %v3914 = vunpack.c.l.s4 1934713408
    %v3915 = vunpack.c.0.s8 %v3914
    %v3916 = vlaneseq
    %v3917 = vshrl.u32 %v3916, 7
    %v3918 = vsub.s32 %v3915, %v3917
    %v3919 = vrot.slane %v3911, %v3918
    %v3921 = vunpack.c.l.s4 1934713408
    %v3922 = vunpack.c.0.s8 %v3921
    %v3923 = vlaneseq
    %v3924 = vshrl.u32 %v3923, 7
    %v3925 = vsub.s32 %v3922, %v3924
    %v3926 = vrot.slane %v3912, %v3925
    %v3927 = vcombine.low %v3862, %v3878
    %v3928 = vcombine.high %v3862, %v3878
    %v3930 = vunpack.c.l.s4 1934713408
    %v3931 = vunpack.c.0.s8 %v3930
    %v3932 = vlaneseq
    %v3933 = vshrl.u32 %v3932, 7
    %v3934 = vsub.s32 %v3931, %v3933
    %v3935 = vrot.slane %v3927, %v3934
    %v3937 = vunpack.c.l.s4 1934713408
    %v3938 = vunpack.c.0.s8 %v3937
    %v3939 = vlaneseq
    %v3940 = vshrl.u32 %v3939, 7
    %v3941 = vsub.s32 %v3938, %v3940
    %v3942 = vrot.slane %v3928, %v3941
    %v3943 = vcombine.low %v3887, %v3919
    %v3944 = vcombine.high %v3887, %v3919
    %v3945 = vcombine.low %v3894, %v3926
    %v3946 = vcombine.high %v3894, %v3926
    %v3947 = vcombine.low %v3903, %v3935
    %v3948 = vcombine.high %v3903, %v3935
    %v3949 = vcombine.low %v3910, %v3942
    %v3950 = vcombine.high %v3910, %v3942
    %v3951 = vcombine.low %v116, %v384
    %v3952 = vcombine.high %v116, %v384
    %v3954 = vunpack.c.l.s4 1983009808
    %v3955 = vunpack.c.0.s8 %v3954
    %v3956 = vlaneseq
    %v3957 = vshrl.u32 %v3956, 7
    %v3958 = vsub.s32 %v3955, %v3957
    %v3959 = vrot.slane %v3951, %v3958
    %v3961 = vunpack.c.l.s4 1983009808
    %v3962 = vunpack.c.0.s8 %v3961
    %v3963 = vlaneseq
    %v3964 = vshrl.u32 %v3963, 7
    %v3965 = vsub.s32 %v3962, %v3964
    %v3966 = vrot.slane %v3952, %v3965
    %v3967 = vcombine.low %v250, %v518
    %v3968 = vcombine.high %v250, %v518
    %v3970 = vunpack.c.l.s4 1983009808
    %v3971 = vunpack.c.0.s8 %v3970
    %v3972 = vlaneseq
    %v3973 = vshrl.u32 %v3972, 7
    %v3974 = vsub.s32 %v3971, %v3973
    %v3975 = vrot.slane %v3967, %v3974
    %v3977 = vunpack.c.l.s4 1983009808
    %v3978 = vunpack.c.0.s8 %v3977
    %v3979 = vlaneseq
    %v3980 = vshrl.u32 %v3979, 7
    %v3981 = vsub.s32 %v3978, %v3980
    %v3982 = vrot.slane %v3968, %v3981
    %v3983 = vcombine.low %v652, %v920
    %v3984 = vcombine.high %v652, %v920
    %v3986 = vunpack.c.l.s4 1983009808
    %v3987 = vunpack.c.0.s8 %v3986
    %v3988 = vlaneseq
    %v3989 = vshrl.u32 %v3988, 7
    %v3990 = vsub.s32 %v3987, %v3989
    %v3991 = vrot.slane %v3983, %v3990
    %v3993 = vunpack.c.l.s4 1983009808
    %v3994 = vunpack.c.0.s8 %v3993
    %v3995 = vlaneseq
    %v3996 = vshrl.u32 %v3995, 7
    %v3997 = vsub.s32 %v3994, %v3996
    %v3998 = vrot.slane %v3984, %v3997
    %v3999 = vcombine.low %v786, %v1054
    %v4000 = vcombine.high %v786, %v1054
    %v4002 = vunpack.c.l.s4 1983009808
    %v4003 = vunpack.c.0.s8 %v4002
    %v4004 = vlaneseq
    %v4005 = vshrl.u32 %v4004, 7
    %v4006 = vsub.s32 %v4003, %v4005
    %v4007 = vrot.slane %v3999, %v4006
    %v4009 = vunpack.c.l.s4 1983009808
    %v4010 = vunpack.c.0.s8 %v4009
    %v4011 = vlaneseq
    %v4012 = vshrl.u32 %v4011, 7
    %v4013 = vsub.s32 %v4010, %v4012
    %v4014 = vrot.slane %v4000, %v4013
    %v4015 = vcombine.low %v3959, %v3975
    %v4016 = vcombine.high %v3959, %v3975
    %v4018 = vunpack.c.l.s4 1934713408
    %v4019 = vunpack.c.0.s8 %v4018
    %v4020 = vlaneseq
    %v4021 = vshrl.u32 %v4020, 7
    %v4022 = vsub.s32 %v4019, %v4021
    %v4023 = vrot.slane %v4015, %v4022
    %v4025 = vunpack.c.l.s4 1934713408
    %v4026 = vunpack.c.0.s8 %v4025
    %v4027 = vlaneseq
    %v4028 = vshrl.u32 %v4027, 7
    %v4029 = vsub.s32 %v4026, %v4028
    %v4030 = vrot.slane %v4016, %v4029
    %v4031 = vcombine.low %v3966, %v3982
    %v4032 = vcombine.high %v3966, %v3982
    %v4034 = vunpack.c.l.s4 1934713408
    %v4035 = vunpack.c.0.s8 %v4034
    %v4036 = vlaneseq
    %v4037 = vshrl.u32 %v4036, 7
    %v4038 = vsub.s32 %v4035, %v4037
    %v4039 = vrot.slane %v4031, %v4038
    %v4041 = vunpack.c.l.s4 1934713408
    %v4042 = vunpack.c.0.s8 %v4041
    %v4043 = vlaneseq
    %v4044 = vshrl.u32 %v4043, 7
    %v4045 = vsub.s32 %v4042, %v4044
    %v4046 = vrot.slane %v4032, %v4045
    %v4047 = vcombine.low %v3991, %v4007
    %v4048 = vcombine.high %v3991, %v4007
    %v4050 = vunpack.c.l.s4 1934713408
    %v4051 = vunpack.c.0.s8 %v4050
    %v4052 = vlaneseq
    %v4053 = vshrl.u32 %v4052, 7
    %v4054 = vsub.s32 %v4051, %v4053
    %v4055 = vrot.slane %v4047, %v4054
    %v4057 = vunpack.c.l.s4 1934713408
    %v4058 = vunpack.c.0.s8 %v4057
    %v4059 = vlaneseq
    %v4060 = vshrl.u32 %v4059, 7
    %v4061 = vsub.s32 %v4058, %v4060
    %v4062 = vrot.slane %v4048, %v4061
    %v4063 = vcombine.low %v3998, %v4014
    %v4064 = vcombine.high %v3998, %v4014
    %v4066 = vunpack.c.l.s4 1934713408
    %v4067 = vunpack.c.0.s8 %v4066
    %v4068 = vlaneseq
    %v4069 = vshrl.u32 %v4068, 7
    %v4070 = vsub.s32 %v4067, %v4069
    %v4071 = vrot.slane %v4063, %v4070
    %v4073 = vunpack.c.l.s4 1934713408
    %v4074 = vunpack.c.0.s8 %v4073
    %v4075 = vlaneseq
    %v4076 = vshrl.u32 %v4075, 7
    %v4077 = vsub.s32 %v4074, %v4076
    %v4078 = vrot.slane %v4064, %v4077
    %v4079 = vcombine.low %v4023, %v4055
    %v4080 = vcombine.high %v4023, %v4055
    %v4081 = vcombine.low %v4030, %v4062
    %v4082 = vcombine.high %v4030, %v4062
    %v4083 = vcombine.low %v4039, %v4071
    %v4084 = vcombine.high %v4039, %v4071
    %v4085 = vcombine.low %v4046, %v4078
    %v4086 = vcombine.high %v4046, %v4078
    %v4087 = vcombine.low %v120, %v388
    %v4088 = vcombine.high %v120, %v388
    %v4090 = vunpack.c.l.s4 1983009808
    %v4091 = vunpack.c.0.s8 %v4090
    %v4092 = vlaneseq
    %v4093 = vshrl.u32 %v4092, 7
    %v4094 = vsub.s32 %v4091, %v4093
    %v4095 = vrot.slane %v4087, %v4094
    %v4097 = vunpack.c.l.s4 1983009808
    %v4098 = vunpack.c.0.s8 %v4097
    %v4099 = vlaneseq
    %v4100 = vshrl.u32 %v4099, 7
    %v4101 = vsub.s32 %v4098, %v4100
    %v4102 = vrot.slane %v4088, %v4101
    %v4103 = vcombine.low %v254, %v522
    %v4104 = vcombine.high %v254, %v522
    %v4106 = vunpack.c.l.s4 1983009808
    %v4107 = vunpack.c.0.s8 %v4106
    %v4108 = vlaneseq
    %v4109 = vshrl.u32 %v4108, 7
    %v4110 = vsub.s32 %v4107, %v4109
    %v4111 = vrot.slane %v4103, %v4110
    %v4113 = vunpack.c.l.s4 1983009808
    %v4114 = vunpack.c.0.s8 %v4113
    %v4115 = vlaneseq
    %v4116 = vshrl.u32 %v4115, 7
    %v4117 = vsub.s32 %v4114, %v4116
    %v4118 = vrot.slane %v4104, %v4117
    %v4119 = vcombine.low %v656, %v924
    %v4120 = vcombine.high %v656, %v924
    %v4122 = vunpack.c.l.s4 1983009808
    %v4123 = vunpack.c.0.s8 %v4122
    %v4124 = vlaneseq
    %v4125 = vshrl.u32 %v4124, 7
    %v4126 = vsub.s32 %v4123, %v4125
    %v4127 = vrot.slane %v4119, %v4126
    %v4129 = vunpack.c.l.s4 1983009808
    %v4130 = vunpack.c.0.s8 %v4129
    %v4131 = vlaneseq
    %v4132 = vshrl.u32 %v4131, 7
    %v4133 = vsub.s32 %v4130, %v4132
    %v4134 = vrot.slane %v4120, %v4133
    %v4135 = vcombine.low %v790, %v1058
    %v4136 = vcombine.high %v790, %v1058
    %v4138 = vunpack.c.l.s4 1983009808
    %v4139 = vunpack.c.0.s8 %v4138
    %v4140 = vlaneseq
    %v4141 = vshrl.u32 %v4140, 7
    %v4142 = vsub.s32 %v4139, %v4141
    %v4143 = vrot.slane %v4135, %v4142
    %v4145 = vunpack.c.l.s4 1983009808
    %v4146 = vunpack.c.0.s8 %v4145
    %v4147 = vlaneseq
    %v4148 = vshrl.u32 %v4147, 7
    %v4149 = vsub.s32 %v4146, %v4148
    %v4150 = vrot.slane %v4136, %v4149
    %v4151 = vcombine.low %v4095, %v4111
    %v4152 = vcombine.high %v4095, %v4111
    %v4154 = vunpack.c.l.s4 1934713408
    %v4155 = vunpack.c.0.s8 %v4154
    %v4156 = vlaneseq
    %v4157 = vshrl.u32 %v4156, 7
    %v4158 = vsub.s32 %v4155, %v4157
    %v4159 = vrot.slane %v4151, %v4158
    %v4161 = vunpack.c.l.s4 1934713408
    %v4162 = vunpack.c.0.s8 %v4161
    %v4163 = vlaneseq
    %v4164 = vshrl.u32 %v4163, 7
    %v4165 = vsub.s32 %v4162, %v4164
    %v4166 = vrot.slane %v4152, %v4165
    %v4167 = vcombine.low %v4102, %v4118
    %v4168 = vcombine.high %v4102, %v4118
    %v4170 = vunpack.c.l.s4 1934713408
    %v4171 = vunpack.c.0.s8 %v4170
    %v4172 = vlaneseq
    %v4173 = vshrl.u32 %v4172, 7
    %v4174 = vsub.s32 %v4171, %v4173
    %v4175 = vrot.slane %v4167, %v4174
    %v4177 = vunpack.c.l.s4 1934713408
    %v4178 = vunpack.c.0.s8 %v4177
    %v4179 = vlaneseq
    %v4180 = vshrl.u32 %v4179, 7
    %v4181 = vsub.s32 %v4178, %v4180
    %v4182 = vrot.slane %v4168, %v4181
    %v4183 = vcombine.low %v4127, %v4143
    %v4184 = vcombine.high %v4127, %v4143
    %v4186 = vunpack.c.l.s4 1934713408
    %v4187 = vunpack.c.0.s8 %v4186
    %v4188 = vlaneseq
    %v4189 = vshrl.u32 %v4188, 7
    %v4190 = vsub.s32 %v4187, %v4189
    %v4191 = vrot.slane %v4183, %v4190
    %v4193 = vunpack.c.l.s4 1934713408
    %v4194 = vunpack.c.0.s8 %v4193
    %v4195 = vlaneseq
    %v4196 = vshrl.u32 %v4195, 7
    %v4197 = vsub.s32 %v4194, %v4196
    %v4198 = vrot.slane %v4184, %v4197
    %v4199 = vcombine.low %v4134, %v4150
    %v4200 = vcombine.high %v4134, %v4150
    %v4202 = vunpack.c.l.s4 1934713408
    %v4203 = vunpack.c.0.s8 %v4202
    %v4204 = vlaneseq
    %v4205 = vshrl.u32 %v4204, 7
    %v4206 = vsub.s32 %v4203, %v4205
    %v4207 = vrot.slane %v4199, %v4206
    %v4209 = vunpack.c.l.s4 1934713408
    %v4210 = vunpack.c.0.s8 %v4209
    %v4211 = vlaneseq
    %v4212 = vshrl.u32 %v4211, 7
    %v4213 = vsub.s32 %v4210, %v4212
    %v4214 = vrot.slane %v4200, %v4213
    %v4215 = vcombine.low %v4159, %v4191
    %v4216 = vcombine.high %v4159, %v4191
    %v4217 = vcombine.low %v4166, %v4198
    %v4218 = vcombine.high %v4166, %v4198
    %v4219 = vcombine.low %v4175, %v4207
    %v4220 = vcombine.high %v4175, %v4207
    %v4221 = vcombine.low %v4182, %v4214
    %v4222 = vcombine.high %v4182, %v4214
    %v4223 = vcombine.low %v124, %v392
    %v4224 = vcombine.high %v124, %v392
    %v4226 = vunpack.c.l.s4 1983009808
    %v4227 = vunpack.c.0.s8 %v4226
    %v4228 = vlaneseq
    %v4229 = vshrl.u32 %v4228, 7
    %v4230 = vsub.s32 %v4227, %v4229
    %v4231 = vrot.slane %v4223, %v4230
    %v4233 = vunpack.c.l.s4 1983009808
    %v4234 = vunpack.c.0.s8 %v4233
    %v4235 = vlaneseq
    %v4236 = vshrl.u32 %v4235, 7
    %v4237 = vsub.s32 %v4234, %v4236
    %v4238 = vrot.slane %v4224, %v4237
    %v4239 = vcombine.low %v258, %v526
    %v4240 = vcombine.high %v258, %v526
    %v4242 = vunpack.c.l.s4 1983009808
    %v4243 = vunpack.c.0.s8 %v4242
    %v4244 = vlaneseq
    %v4245 = vshrl.u32 %v4244, 7
    %v4246 = vsub.s32 %v4243, %v4245
    %v4247 = vrot.slane %v4239, %v4246
    %v4249 = vunpack.c.l.s4 1983009808
    %v4250 = vunpack.c.0.s8 %v4249
    %v4251 = vlaneseq
    %v4252 = vshrl.u32 %v4251, 7
    %v4253 = vsub.s32 %v4250, %v4252
    %v4254 = vrot.slane %v4240, %v4253
    %v4255 = vcombine.low %v660, %v928
    %v4256 = vcombine.high %v660, %v928
    %v4258 = vunpack.c.l.s4 1983009808
    %v4259 = vunpack.c.0.s8 %v4258
    %v4260 = vlaneseq
    %v4261 = vshrl.u32 %v4260, 7
    %v4262 = vsub.s32 %v4259, %v4261
    %v4263 = vrot.slane %v4255, %v4262
    %v4265 = vunpack.c.l.s4 1983009808
    %v4266 = vunpack.c.0.s8 %v4265
    %v4267 = vlaneseq
    %v4268 = vshrl.u32 %v4267, 7
    %v4269 = vsub.s32 %v4266, %v4268
    %v4270 = vrot.slane %v4256, %v4269
    %v4271 = vcombine.low %v794, %v1062
    %v4272 = vcombine.high %v794, %v1062
    %v4274 = vunpack.c.l.s4 1983009808
    %v4275 = vunpack.c.0.s8 %v4274
    %v4276 = vlaneseq
    %v4277 = vshrl.u32 %v4276, 7
    %v4278 = vsub.s32 %v4275, %v4277
    %v4279 = vrot.slane %v4271, %v4278
    %v4281 = vunpack.c.l.s4 1983009808
    %v4282 = vunpack.c.0.s8 %v4281
    %v4283 = vlaneseq
    %v4284 = vshrl.u32 %v4283, 7
    %v4285 = vsub.s32 %v4282, %v4284
    %v4286 = vrot.slane %v4272, %v4285
    %v4287 = vcombine.low %v4231, %v4247
    %v4288 = vcombine.high %v4231, %v4247
    %v4290 = vunpack.c.l.s4 1934713408
    %v4291 = vunpack.c.0.s8 %v4290
    %v4292 = vlaneseq
    %v4293 = vshrl.u32 %v4292, 7
    %v4294 = vsub.s32 %v4291, %v4293
    %v4295 = vrot.slane %v4287, %v4294
    %v4297 = vunpack.c.l.s4 1934713408
    %v4298 = vunpack.c.0.s8 %v4297
    %v4299 = vlaneseq
    %v4300 = vshrl.u32 %v4299, 7
    %v4301 = vsub.s32 %v4298, %v4300
    %v4302 = vrot.slane %v4288, %v4301
    %v4303 = vcombine.low %v4238, %v4254
    %v4304 = vcombine.high %v4238, %v4254
    %v4306 = vunpack.c.l.s4 1934713408
    %v4307 = vunpack.c.0.s8 %v4306
    %v4308 = vlaneseq
    %v4309 = vshrl.u32 %v4308, 7
    %v4310 = vsub.s32 %v4307, %v4309
    %v4311 = vrot.slane %v4303, %v4310
    %v4313 = vunpack.c.l.s4 1934713408
    %v4314 = vunpack.c.0.s8 %v4313
    %v4315 = vlaneseq
    %v4316 = vshrl.u32 %v4315, 7
    %v4317 = vsub.s32 %v4314, %v4316
    %v4318 = vrot.slane %v4304, %v4317
    %v4319 = vcombine.low %v4263, %v4279
    %v4320 = vcombine.high %v4263, %v4279
    %v4322 = vunpack.c.l.s4 1934713408
    %v4323 = vunpack.c.0.s8 %v4322
    %v4324 = vlaneseq
    %v4325 = vshrl.u32 %v4324, 7
    %v4326 = vsub.s32 %v4323, %v4325
    %v4327 = vrot.slane %v4319, %v4326
    %v4329 = vunpack.c.l.s4 1934713408
    %v4330 = vunpack.c.0.s8 %v4329
    %v4331 = vlaneseq
    %v4332 = vshrl.u32 %v4331, 7
    %v4333 = vsub.s32 %v4330, %v4332
    %v4334 = vrot.slane %v4320, %v4333
    %v4335 = vcombine.low %v4270, %v4286
    %v4336 = vcombine.high %v4270, %v4286
    %v4338 = vunpack.c.l.s4 1934713408
    %v4339 = vunpack.c.0.s8 %v4338
    %v4340 = vlaneseq
    %v4341 = vshrl.u32 %v4340, 7
    %v4342 = vsub.s32 %v4339, %v4341
    %v4343 = vrot.slane %v4335, %v4342
    %v4345 = vunpack.c.l.s4 1934713408
    %v4346 = vunpack.c.0.s8 %v4345
    %v4347 = vlaneseq
    %v4348 = vshrl.u32 %v4347, 7
    %v4349 = vsub.s32 %v4346, %v4348
    %v4350 = vrot.slane %v4336, %v4349
    %v4351 = vcombine.low %v4295, %v4327
    %v4352 = vcombine.high %v4295, %v4327
    %v4353 = vcombine.low %v4302, %v4334
    %v4354 = vcombine.high %v4302, %v4334
    %v4355 = vcombine.low %v4311, %v4343
    %v4356 = vcombine.high %v4311, %v4343
    %v4357 = vcombine.low %v4318, %v4350
    %v4358 = vcombine.high %v4318, %v4350
    %v4359 = vcombine.low %v128, %v396
    %v4360 = vcombine.high %v128, %v396
    %v4362 = vunpack.c.l.s4 1983009808
    %v4363 = vunpack.c.0.s8 %v4362
    %v4364 = vlaneseq
    %v4365 = vshrl.u32 %v4364, 7
    %v4366 = vsub.s32 %v4363, %v4365
    %v4367 = vrot.slane %v4359, %v4366
    %v4369 = vunpack.c.l.s4 1983009808
    %v4370 = vunpack.c.0.s8 %v4369
    %v4371 = vlaneseq
    %v4372 = vshrl.u32 %v4371, 7
    %v4373 = vsub.s32 %v4370, %v4372
    %v4374 = vrot.slane %v4360, %v4373
    %v4375 = vcombine.low %v262, %v530
    %v4376 = vcombine.high %v262, %v530
    %v4378 = vunpack.c.l.s4 1983009808
    %v4379 = vunpack.c.0.s8 %v4378
    %v4380 = vlaneseq
    %v4381 = vshrl.u32 %v4380, 7
    %v4382 = vsub.s32 %v4379, %v4381
    %v4383 = vrot.slane %v4375, %v4382
    %v4385 = vunpack.c.l.s4 1983009808
    %v4386 = vunpack.c.0.s8 %v4385
    %v4387 = vlaneseq
    %v4388 = vshrl.u32 %v4387, 7
    %v4389 = vsub.s32 %v4386, %v4388
    %v4390 = vrot.slane %v4376, %v4389
    %v4391 = vcombine.low %v664, %v932
    %v4392 = vcombine.high %v664, %v932
    %v4394 = vunpack.c.l.s4 1983009808
    %v4395 = vunpack.c.0.s8 %v4394
    %v4396 = vlaneseq
    %v4397 = vshrl.u32 %v4396, 7
    %v4398 = vsub.s32 %v4395, %v4397
    %v4399 = vrot.slane %v4391, %v4398
    %v4401 = vunpack.c.l.s4 1983009808
    %v4402 = vunpack.c.0.s8 %v4401
    %v4403 = vlaneseq
    %v4404 = vshrl.u32 %v4403, 7
    %v4405 = vsub.s32 %v4402, %v4404
    %v4406 = vrot.slane %v4392, %v4405
    %v4407 = vcombine.low %v798, %v1066
    %v4408 = vcombine.high %v798, %v1066
    %v4410 = vunpack.c.l.s4 1983009808
    %v4411 = vunpack.c.0.s8 %v4410
    %v4412 = vlaneseq
    %v4413 = vshrl.u32 %v4412, 7
    %v4414 = vsub.s32 %v4411, %v4413
    %v4415 = vrot.slane %v4407, %v4414
    %v4417 = vunpack.c.l.s4 1983009808
    %v4418 = vunpack.c.0.s8 %v4417
    %v4419 = vlaneseq
    %v4420 = vshrl.u32 %v4419, 7
    %v4421 = vsub.s32 %v4418, %v4420
    %v4422 = vrot.slane %v4408, %v4421
    %v4423 = vcombine.low %v4367, %v4383
    %v4424 = vcombine.high %v4367, %v4383
    %v4426 = vunpack.c.l.s4 1934713408
    %v4427 = vunpack.c.0.s8 %v4426
    %v4428 = vlaneseq
    %v4429 = vshrl.u32 %v4428, 7
    %v4430 = vsub.s32 %v4427, %v4429
    %v4431 = vrot.slane %v4423, %v4430
    %v4433 = vunpack.c.l.s4 1934713408
    %v4434 = vunpack.c.0.s8 %v4433
    %v4435 = vlaneseq
    %v4436 = vshrl.u32 %v4435, 7
    %v4437 = vsub.s32 %v4434, %v4436
    %v4438 = vrot.slane %v4424, %v4437
    %v4439 = vcombine.low %v4374, %v4390
    %v4440 = vcombine.high %v4374, %v4390
    %v4442 = vunpack.c.l.s4 1934713408
    %v4443 = vunpack.c.0.s8 %v4442
    %v4444 = vlaneseq
    %v4445 = vshrl.u32 %v4444, 7
    %v4446 = vsub.s32 %v4443, %v4445
    %v4447 = vrot.slane %v4439, %v4446
    %v4449 = vunpack.c.l.s4 1934713408
    %v4450 = vunpack.c.0.s8 %v4449
    %v4451 = vlaneseq
    %v4452 = vshrl.u32 %v4451, 7
    %v4453 = vsub.s32 %v4450, %v4452
    %v4454 = vrot.slane %v4440, %v4453
    %v4455 = vcombine.low %v4399, %v4415
    %v4456 = vcombine.high %v4399, %v4415
    %v4458 = vunpack.c.l.s4 1934713408
    %v4459 = vunpack.c.0.s8 %v4458
    %v4460 = vlaneseq
    %v4461 = vshrl.u32 %v4460, 7
    %v4462 = vsub.s32 %v4459, %v4461
    %v4463 = vrot.slane %v4455, %v4462
    %v4465 = vunpack.c.l.s4 1934713408
    %v4466 = vunpack.c.0.s8 %v4465
    %v4467 = vlaneseq
    %v4468 = vshrl.u32 %v4467, 7
    %v4469 = vsub.s32 %v4466, %v4468
    %v4470 = vrot.slane %v4456, %v4469
    %v4471 = vcombine.low %v4406, %v4422
    %v4472 = vcombine.high %v4406, %v4422
    %v4474 = vunpack.c.l.s4 1934713408
    %v4475 = vunpack.c.0.s8 %v4474
    %v4476 = vlaneseq
    %v4477 = vshrl.u32 %v4476, 7
    %v4478 = vsub.s32 %v4475, %v4477
    %v4479 = vrot.slane %v4471, %v4478
    %v4481 = vunpack.c.l.s4 1934713408
    %v4482 = vunpack.c.0.s8 %v4481
    %v4483 = vlaneseq
    %v4484 = vshrl.u32 %v4483, 7
    %v4485 = vsub.s32 %v4482, %v4484
    %v4486 = vrot.slane %v4472, %v4485
    %v4487 = vcombine.low %v4431, %v4463
    %v4488 = vcombine.high %v4431, %v4463
    %v4489 = vcombine.low %v4438, %v4470
    %v4490 = vcombine.high %v4438, %v4470
    %v4491 = vcombine.low %v4447, %v4479
    %v4492 = vcombine.high %v4447, %v4479
    %v4493 = vcombine.low %v4454, %v4486
    %v4494 = vcombine.high %v4454, %v4486
    %v4495 = vcombine.low %v132, %v400
    %v4496 = vcombine.high %v132, %v400
    %v4498 = vunpack.c.l.s4 1983009808
    %v4499 = vunpack.c.0.s8 %v4498
    %v4500 = vlaneseq
    %v4501 = vshrl.u32 %v4500, 7
    %v4502 = vsub.s32 %v4499, %v4501
    %v4503 = vrot.slane %v4495, %v4502
    %v4505 = vunpack.c.l.s4 1983009808
    %v4506 = vunpack.c.0.s8 %v4505
    %v4507 = vlaneseq
    %v4508 = vshrl.u32 %v4507, 7
    %v4509 = vsub.s32 %v4506, %v4508
    %v4510 = vrot.slane %v4496, %v4509
    %v4511 = vcombine.low %v266, %v534
    %v4512 = vcombine.high %v266, %v534
    %v4514 = vunpack.c.l.s4 1983009808
    %v4515 = vunpack.c.0.s8 %v4514
    %v4516 = vlaneseq
    %v4517 = vshrl.u32 %v4516, 7
    %v4518 = vsub.s32 %v4515, %v4517
    %v4519 = vrot.slane %v4511, %v4518
    %v4521 = vunpack.c.l.s4 1983009808
    %v4522 = vunpack.c.0.s8 %v4521
    %v4523 = vlaneseq
    %v4524 = vshrl.u32 %v4523, 7
    %v4525 = vsub.s32 %v4522, %v4524
    %v4526 = vrot.slane %v4512, %v4525
    %v4527 = vcombine.low %v668, %v936
    %v4528 = vcombine.high %v668, %v936
    %v4530 = vunpack.c.l.s4 1983009808
    %v4531 = vunpack.c.0.s8 %v4530
    %v4532 = vlaneseq
    %v4533 = vshrl.u32 %v4532, 7
    %v4534 = vsub.s32 %v4531, %v4533
    %v4535 = vrot.slane %v4527, %v4534
    %v4537 = vunpack.c.l.s4 1983009808
    %v4538 = vunpack.c.0.s8 %v4537
    %v4539 = vlaneseq
    %v4540 = vshrl.u32 %v4539, 7
    %v4541 = vsub.s32 %v4538, %v4540
    %v4542 = vrot.slane %v4528, %v4541
    %v4543 = vcombine.low %v802, %v1070
    %v4544 = vcombine.high %v802, %v1070
    %v4546 = vunpack.c.l.s4 1983009808
    %v4547 = vunpack.c.0.s8 %v4546
    %v4548 = vlaneseq
    %v4549 = vshrl.u32 %v4548, 7
    %v4550 = vsub.s32 %v4547, %v4549
    %v4551 = vrot.slane %v4543, %v4550
    %v4553 = vunpack.c.l.s4 1983009808
    %v4554 = vunpack.c.0.s8 %v4553
    %v4555 = vlaneseq
    %v4556 = vshrl.u32 %v4555, 7
    %v4557 = vsub.s32 %v4554, %v4556
    %v4558 = vrot.slane %v4544, %v4557
    %v4559 = vcombine.low %v4503, %v4519
    %v4560 = vcombine.high %v4503, %v4519
    %v4562 = vunpack.c.l.s4 1934713408
    %v4563 = vunpack.c.0.s8 %v4562
    %v4564 = vlaneseq
    %v4565 = vshrl.u32 %v4564, 7
    %v4566 = vsub.s32 %v4563, %v4565
    %v4567 = vrot.slane %v4559, %v4566
    %v4569 = vunpack.c.l.s4 1934713408
    %v4570 = vunpack.c.0.s8 %v4569
    %v4571 = vlaneseq
    %v4572 = vshrl.u32 %v4571, 7
    %v4573 = vsub.s32 %v4570, %v4572
    %v4574 = vrot.slane %v4560, %v4573
    %v4575 = vcombine.low %v4510, %v4526
    %v4576 = vcombine.high %v4510, %v4526
    %v4578 = vunpack.c.l.s4 1934713408
    %v4579 = vunpack.c.0.s8 %v4578
    %v4580 = vlaneseq
    %v4581 = vshrl.u32 %v4580, 7
    %v4582 = vsub.s32 %v4579, %v4581
    %v4583 = vrot.slane %v4575, %v4582
    %v4585 = vunpack.c.l.s4 1934713408
    %v4586 = vunpack.c.0.s8 %v4585
    %v4587 = vlaneseq
    %v4588 = vshrl.u32 %v4587, 7
    %v4589 = vsub.s32 %v4586, %v4588
    %v4590 = vrot.slane %v4576, %v4589
    %v4591 = vcombine.low %v4535, %v4551
    %v4592 = vcombine.high %v4535, %v4551
    %v4594 = vunpack.c.l.s4 1934713408
    %v4595 = vunpack.c.0.s8 %v4594
    %v4596 = vlaneseq
    %v4597 = vshrl.u32 %v4596, 7
    %v4598 = vsub.s32 %v4595, %v4597
    %v4599 = vrot.slane %v4591, %v4598
    %v4601 = vunpack.c.l.s4 1934713408
    %v4602 = vunpack.c.0.s8 %v4601
    %v4603 = vlaneseq
    %v4604 = vshrl.u32 %v4603, 7
    %v4605 = vsub.s32 %v4602, %v4604
    %v4606 = vrot.slane %v4592, %v4605
    %v4607 = vcombine.low %v4542, %v4558
    %v4608 = vcombine.high %v4542, %v4558
    %v4610 = vunpack.c.l.s4 1934713408
    %v4611 = vunpack.c.0.s8 %v4610
    %v4612 = vlaneseq
    %v4613 = vshrl.u32 %v4612, 7
    %v4614 = vsub.s32 %v4611, %v4613
    %v4615 = vrot.slane %v4607, %v4614
    %v4617 = vunpack.c.l.s4 1934713408
    %v4618 = vunpack.c.0.s8 %v4617
    %v4619 = vlaneseq
    %v4620 = vshrl.u32 %v4619, 7
    %v4621 = vsub.s32 %v4618, %v4620
    %v4622 = vrot.slane %v4608, %v4621
    %v4623 = vcombine.low %v4567, %v4599
    %v4624 = vcombine.high %v4567, %v4599
    %v4625 = vcombine.low %v4574, %v4606
    %v4626 = vcombine.high %v4574, %v4606
    %v4627 = vcombine.low %v4583, %v4615
    %v4628 = vcombine.high %v4583, %v4615
    %v4629 = vcombine.low %v4590, %v4622
    %v4630 = vcombine.high %v4590, %v4622
    %v4631 = vcombine.low %v136, %v404
    %v4632 = vcombine.high %v136, %v404
    %v4634 = vunpack.c.l.s4 1983009808
    %v4635 = vunpack.c.0.s8 %v4634
    %v4636 = vlaneseq
    %v4637 = vshrl.u32 %v4636, 7
    %v4638 = vsub.s32 %v4635, %v4637
    %v4639 = vrot.slane %v4631, %v4638
    %v4641 = vunpack.c.l.s4 1983009808
    %v4642 = vunpack.c.0.s8 %v4641
    %v4643 = vlaneseq
    %v4644 = vshrl.u32 %v4643, 7
    %v4645 = vsub.s32 %v4642, %v4644
    %v4646 = vrot.slane %v4632, %v4645
    %v4647 = vcombine.low %v270, %v538
    %v4648 = vcombine.high %v270, %v538
    %v4650 = vunpack.c.l.s4 1983009808
    %v4651 = vunpack.c.0.s8 %v4650
    %v4652 = vlaneseq
    %v4653 = vshrl.u32 %v4652, 7
    %v4654 = vsub.s32 %v4651, %v4653
    %v4655 = vrot.slane %v4647, %v4654
    %v4657 = vunpack.c.l.s4 1983009808
    %v4658 = vunpack.c.0.s8 %v4657
    %v4659 = vlaneseq
    %v4660 = vshrl.u32 %v4659, 7
    %v4661 = vsub.s32 %v4658, %v4660
    %v4662 = vrot.slane %v4648, %v4661
    %v4663 = vcombine.low %v672, %v940
    %v4664 = vcombine.high %v672, %v940
    %v4666 = vunpack.c.l.s4 1983009808
    %v4667 = vunpack.c.0.s8 %v4666
    %v4668 = vlaneseq
    %v4669 = vshrl.u32 %v4668, 7
    %v4670 = vsub.s32 %v4667, %v4669
    %v4671 = vrot.slane %v4663, %v4670
    %v4673 = vunpack.c.l.s4 1983009808
    %v4674 = vunpack.c.0.s8 %v4673
    %v4675 = vlaneseq
    %v4676 = vshrl.u32 %v4675, 7
    %v4677 = vsub.s32 %v4674, %v4676
    %v4678 = vrot.slane %v4664, %v4677
    %v4679 = vcombine.low %v806, %v1074
    %v4680 = vcombine.high %v806, %v1074
    %v4682 = vunpack.c.l.s4 1983009808
    %v4683 = vunpack.c.0.s8 %v4682
    %v4684 = vlaneseq
    %v4685 = vshrl.u32 %v4684, 7
    %v4686 = vsub.s32 %v4683, %v4685
    %v4687 = vrot.slane %v4679, %v4686
    %v4689 = vunpack.c.l.s4 1983009808
    %v4690 = vunpack.c.0.s8 %v4689
    %v4691 = vlaneseq
    %v4692 = vshrl.u32 %v4691, 7
    %v4693 = vsub.s32 %v4690, %v4692
    %v4694 = vrot.slane %v4680, %v4693
    %v4695 = vcombine.low %v4639, %v4655
    %v4696 = vcombine.high %v4639, %v4655
    %v4698 = vunpack.c.l.s4 1934713408
    %v4699 = vunpack.c.0.s8 %v4698
    %v4700 = vlaneseq
    %v4701 = vshrl.u32 %v4700, 7
    %v4702 = vsub.s32 %v4699, %v4701
    %v4703 = vrot.slane %v4695, %v4702
    %v4705 = vunpack.c.l.s4 1934713408
    %v4706 = vunpack.c.0.s8 %v4705
    %v4707 = vlaneseq
    %v4708 = vshrl.u32 %v4707, 7
    %v4709 = vsub.s32 %v4706, %v4708
    %v4710 = vrot.slane %v4696, %v4709
    %v4711 = vcombine.low %v4646, %v4662
    %v4712 = vcombine.high %v4646, %v4662
    %v4714 = vunpack.c.l.s4 1934713408
    %v4715 = vunpack.c.0.s8 %v4714
    %v4716 = vlaneseq
    %v4717 = vshrl.u32 %v4716, 7
    %v4718 = vsub.s32 %v4715, %v4717
    %v4719 = vrot.slane %v4711, %v4718
    %v4721 = vunpack.c.l.s4 1934713408
    %v4722 = vunpack.c.0.s8 %v4721
    %v4723 = vlaneseq
    %v4724 = vshrl.u32 %v4723, 7
    %v4725 = vsub.s32 %v4722, %v4724
    %v4726 = vrot.slane %v4712, %v4725
    %v4727 = vcombine.low %v4671, %v4687
    %v4728 = vcombine.high %v4671, %v4687
    %v4730 = vunpack.c.l.s4 1934713408
    %v4731 = vunpack.c.0.s8 %v4730
    %v4732 = vlaneseq
    %v4733 = vshrl.u32 %v4732, 7
    %v4734 = vsub.s32 %v4731, %v4733
    %v4735 = vrot.slane %v4727, %v4734
    %v4737 = vunpack.c.l.s4 1934713408
    %v4738 = vunpack.c.0.s8 %v4737
    %v4739 = vlaneseq
    %v4740 = vshrl.u32 %v4739, 7
    %v4741 = vsub.s32 %v4738, %v4740
    %v4742 = vrot.slane %v4728, %v4741
    %v4743 = vcombine.low %v4678, %v4694
    %v4744 = vcombine.high %v4678, %v4694
    %v4746 = vunpack.c.l.s4 1934713408
    %v4747 = vunpack.c.0.s8 %v4746
    %v4748 = vlaneseq
    %v4749 = vshrl.u32 %v4748, 7
    %v4750 = vsub.s32 %v4747, %v4749
    %v4751 = vrot.slane %v4743, %v4750
    %v4753 = vunpack.c.l.s4 1934713408
    %v4754 = vunpack.c.0.s8 %v4753
    %v4755 = vlaneseq
    %v4756 = vshrl.u32 %v4755, 7
    %v4757 = vsub.s32 %v4754, %v4756
    %v4758 = vrot.slane %v4744, %v4757
    %v4759 = vcombine.low %v4703, %v4735
    %v4760 = vcombine.high %v4703, %v4735
    %v4761 = vcombine.low %v4710, %v4742
    %v4762 = vcombine.high %v4710, %v4742
    %v4763 = vcombine.low %v4719, %v4751
    %v4764 = vcombine.high %v4719, %v4751
    %v4765 = vcombine.low %v4726, %v4758
    %v4766 = vcombine.high %v4726, %v4758
    %v4767 = vcombine.low %v140, %v408
    %v4768 = vcombine.high %v140, %v408
    %v4770 = vunpack.c.l.s4 1983009808
    %v4771 = vunpack.c.0.s8 %v4770
    %v4772 = vlaneseq
    %v4773 = vshrl.u32 %v4772, 7
    %v4774 = vsub.s32 %v4771, %v4773
    %v4775 = vrot.slane %v4767, %v4774
    %v4777 = vunpack.c.l.s4 1983009808
    %v4778 = vunpack.c.0.s8 %v4777
    %v4779 = vlaneseq
    %v4780 = vshrl.u32 %v4779, 7
    %v4781 = vsub.s32 %v4778, %v4780
    %v4782 = vrot.slane %v4768, %v4781
    %v4783 = vcombine.low %v274, %v542
    %v4784 = vcombine.high %v274, %v542
    %v4786 = vunpack.c.l.s4 1983009808
    %v4787 = vunpack.c.0.s8 %v4786
    %v4788 = vlaneseq
    %v4789 = vshrl.u32 %v4788, 7
    %v4790 = vsub.s32 %v4787, %v4789
    %v4791 = vrot.slane %v4783, %v4790
    %v4793 = vunpack.c.l.s4 1983009808
    %v4794 = vunpack.c.0.s8 %v4793
    %v4795 = vlaneseq
    %v4796 = vshrl.u32 %v4795, 7
    %v4797 = vsub.s32 %v4794, %v4796
    %v4798 = vrot.slane %v4784, %v4797
    %v4799 = vcombine.low %v676, %v944
    %v4800 = vcombine.high %v676, %v944
    %v4802 = vunpack.c.l.s4 1983009808
    %v4803 = vunpack.c.0.s8 %v4802
    %v4804 = vlaneseq
    %v4805 = vshrl.u32 %v4804, 7
    %v4806 = vsub.s32 %v4803, %v4805
    %v4807 = vrot.slane %v4799, %v4806
    %v4809 = vunpack.c.l.s4 1983009808
    %v4810 = vunpack.c.0.s8 %v4809
    %v4811 = vlaneseq
    %v4812 = vshrl.u32 %v4811, 7
    %v4813 = vsub.s32 %v4810, %v4812
    %v4814 = vrot.slane %v4800, %v4813
    %v4815 = vcombine.low %v810, %v1078
    %v4816 = vcombine.high %v810, %v1078
    %v4818 = vunpack.c.l.s4 1983009808
    %v4819 = vunpack.c.0.s8 %v4818
    %v4820 = vlaneseq
    %v4821 = vshrl.u32 %v4820, 7
    %v4822 = vsub.s32 %v4819, %v4821
    %v4823 = vrot.slane %v4815, %v4822
    %v4825 = vunpack.c.l.s4 1983009808
    %v4826 = vunpack.c.0.s8 %v4825
    %v4827 = vlaneseq
    %v4828 = vshrl.u32 %v4827, 7
    %v4829 = vsub.s32 %v4826, %v4828
    %v4830 = vrot.slane %v4816, %v4829
    %v4831 = vcombine.low %v4775, %v4791
    %v4832 = vcombine.high %v4775, %v4791
    %v4834 = vunpack.c.l.s4 1934713408
    %v4835 = vunpack.c.0.s8 %v4834
    %v4836 = vlaneseq
    %v4837 = vshrl.u32 %v4836, 7
    %v4838 = vsub.s32 %v4835, %v4837
    %v4839 = vrot.slane %v4831, %v4838
    %v4841 = vunpack.c.l.s4 1934713408
    %v4842 = vunpack.c.0.s8 %v4841
    %v4843 = vlaneseq
    %v4844 = vshrl.u32 %v4843, 7
    %v4845 = vsub.s32 %v4842, %v4844
    %v4846 = vrot.slane %v4832, %v4845
    %v4847 = vcombine.low %v4782, %v4798
    %v4848 = vcombine.high %v4782, %v4798
    %v4850 = vunpack.c.l.s4 1934713408
    %v4851 = vunpack.c.0.s8 %v4850
    %v4852 = vlaneseq
    %v4853 = vshrl.u32 %v4852, 7
    %v4854 = vsub.s32 %v4851, %v4853
    %v4855 = vrot.slane %v4847, %v4854
    %v4857 = vunpack.c.l.s4 1934713408
    %v4858 = vunpack.c.0.s8 %v4857
    %v4859 = vlaneseq
    %v4860 = vshrl.u32 %v4859, 7
    %v4861 = vsub.s32 %v4858, %v4860
    %v4862 = vrot.slane %v4848, %v4861
    %v4863 = vcombine.low %v4807, %v4823
    %v4864 = vcombine.high %v4807, %v4823
    %v4866 = vunpack.c.l.s4 1934713408
    %v4867 = vunpack.c.0.s8 %v4866
    %v4868 = vlaneseq
    %v4869 = vshrl.u32 %v4868, 7
    %v4870 = vsub.s32 %v4867, %v4869
    %v4871 = vrot.slane %v4863, %v4870
    %v4873 = vunpack.c.l.s4 1934713408
    %v4874 = vunpack.c.0.s8 %v4873
    %v4875 = vlaneseq
    %v4876 = vshrl.u32 %v4875, 7
    %v4877 = vsub.s32 %v4874, %v4876
    %v4878 = vrot.slane %v4864, %v4877
    %v4879 = vcombine.low %v4814, %v4830
    %v4880 = vcombine.high %v4814, %v4830
    %v4882 = vunpack.c.l.s4 1934713408
    %v4883 = vunpack.c.0.s8 %v4882
    %v4884 = vlaneseq
    %v4885 = vshrl.u32 %v4884, 7
    %v4886 = vsub.s32 %v4883, %v4885
    %v4887 = vrot.slane %v4879, %v4886
    %v4889 = vunpack.c.l.s4 1934713408
    %v4890 = vunpack.c.0.s8 %v4889
    %v4891 = vlaneseq
    %v4892 = vshrl.u32 %v4891, 7
    %v4893 = vsub.s32 %v4890, %v4892
    %v4894 = vrot.slane %v4880, %v4893
    %v4895 = vcombine.low %v4839, %v4871
    %v4896 = vcombine.high %v4839, %v4871
    %v4897 = vcombine.low %v4846, %v4878
    %v4898 = vcombine.high %v4846, %v4878
    %v4899 = vcombine.low %v4855, %v4887
    %v4900 = vcombine.high %v4855, %v4887
    %v4901 = vcombine.low %v4862, %v4894
    %v4902 = vcombine.high %v4862, %v4894
    %v4903 = vcombine.low %v144, %v412
    %v4904 = vcombine.high %v144, %v412
    %v4906 = vunpack.c.l.s4 1983009808
    %v4907 = vunpack.c.0.s8 %v4906
    %v4908 = vlaneseq
    %v4909 = vshrl.u32 %v4908, 7
    %v4910 = vsub.s32 %v4907, %v4909
    %v4911 = vrot.slane %v4903, %v4910
    %v4913 = vunpack.c.l.s4 1983009808
    %v4914 = vunpack.c.0.s8 %v4913
    %v4915 = vlaneseq
    %v4916 = vshrl.u32 %v4915, 7
    %v4917 = vsub.s32 %v4914, %v4916
    %v4918 = vrot.slane %v4904, %v4917
    %v4919 = vcombine.low %v278, %v546
    %v4920 = vcombine.high %v278, %v546
    %v4922 = vunpack.c.l.s4 1983009808
    %v4923 = vunpack.c.0.s8 %v4922
    %v4924 = vlaneseq
    %v4925 = vshrl.u32 %v4924, 7
    %v4926 = vsub.s32 %v4923, %v4925
    %v4927 = vrot.slane %v4919, %v4926
    %v4929 = vunpack.c.l.s4 1983009808
    %v4930 = vunpack.c.0.s8 %v4929
    %v4931 = vlaneseq
    %v4932 = vshrl.u32 %v4931, 7
    %v4933 = vsub.s32 %v4930, %v4932
    %v4934 = vrot.slane %v4920, %v4933
    %v4935 = vcombine.low %v680, %v948
    %v4936 = vcombine.high %v680, %v948
    %v4938 = vunpack.c.l.s4 1983009808
    %v4939 = vunpack.c.0.s8 %v4938
    %v4940 = vlaneseq
    %v4941 = vshrl.u32 %v4940, 7
    %v4942 = vsub.s32 %v4939, %v4941
    %v4943 = vrot.slane %v4935, %v4942
    %v4945 = vunpack.c.l.s4 1983009808
    %v4946 = vunpack.c.0.s8 %v4945
    %v4947 = vlaneseq
    %v4948 = vshrl.u32 %v4947, 7
    %v4949 = vsub.s32 %v4946, %v4948
    %v4950 = vrot.slane %v4936, %v4949
    %v4951 = vcombine.low %v814, %v1082
    %v4952 = vcombine.high %v814, %v1082
    %v4954 = vunpack.c.l.s4 1983009808
    %v4955 = vunpack.c.0.s8 %v4954
    %v4956 = vlaneseq
    %v4957 = vshrl.u32 %v4956, 7
    %v4958 = vsub.s32 %v4955, %v4957
    %v4959 = vrot.slane %v4951, %v4958
    %v4961 = vunpack.c.l.s4 1983009808
    %v4962 = vunpack.c.0.s8 %v4961
    %v4963 = vlaneseq
    %v4964 = vshrl.u32 %v4963, 7
    %v4965 = vsub.s32 %v4962, %v4964
    %v4966 = vrot.slane %v4952, %v4965
    %v4967 = vcombine.low %v4911, %v4927
    %v4968 = vcombine.high %v4911, %v4927
    %v4970 = vunpack.c.l.s4 1934713408
    %v4971 = vunpack.c.0.s8 %v4970
    %v4972 = vlaneseq
    %v4973 = vshrl.u32 %v4972, 7
    %v4974 = vsub.s32 %v4971, %v4973
    %v4975 = vrot.slane %v4967, %v4974
    %v4977 = vunpack.c.l.s4 1934713408
    %v4978 = vunpack.c.0.s8 %v4977
    %v4979 = vlaneseq
    %v4980 = vshrl.u32 %v4979, 7
    %v4981 = vsub.s32 %v4978, %v4980
    %v4982 = vrot.slane %v4968, %v4981
    %v4983 = vcombine.low %v4918, %v4934
    %v4984 = vcombine.high %v4918, %v4934
    %v4986 = vunpack.c.l.s4 1934713408
    %v4987 = vunpack.c.0.s8 %v4986
    %v4988 = vlaneseq
    %v4989 = vshrl.u32 %v4988, 7
    %v4990 = vsub.s32 %v4987, %v4989
    %v4991 = vrot.slane %v4983, %v4990
    %v4993 = vunpack.c.l.s4 1934713408
    %v4994 = vunpack.c.0.s8 %v4993
    %v4995 = vlaneseq
    %v4996 = vshrl.u32 %v4995, 7
    %v4997 = vsub.s32 %v4994, %v4996
    %v4998 = vrot.slane %v4984, %v4997
    %v4999 = vcombine.low %v4943, %v4959
    %v5000 = vcombine.high %v4943, %v4959
    %v5002 = vunpack.c.l.s4 1934713408
    %v5003 = vunpack.c.0.s8 %v5002
    %v5004 = vlaneseq
    %v5005 = vshrl.u32 %v5004, 7
    %v5006 = vsub.s32 %v5003, %v5005
    %v5007 = vrot.slane %v4999, %v5006
    %v5009 = vunpack.c.l.s4 1934713408
    %v5010 = vunpack.c.0.s8 %v5009
    %v5011 = vlaneseq
    %v5012 = vshrl.u32 %v5011, 7
    %v5013 = vsub.s32 %v5010, %v5012
    %v5014 = vrot.slane %v5000, %v5013
    %v5015 = vcombine.low %v4950, %v4966
    %v5016 = vcombine.high %v4950, %v4966
    %v5018 = vunpack.c.l.s4 1934713408
    %v5019 = vunpack.c.0.s8 %v5018
    %v5020 = vlaneseq
    %v5021 = vshrl.u32 %v5020, 7
    %v5022 = vsub.s32 %v5019, %v5021
    %v5023 = vrot.slane %v5015, %v5022
    %v5025 = vunpack.c.l.s4 1934713408
    %v5026 = vunpack.c.0.s8 %v5025
    %v5027 = vlaneseq
    %v5028 = vshrl.u32 %v5027, 7
    %v5029 = vsub.s32 %v5026, %v5028
    %v5030 = vrot.slane %v5016, %v5029
    %v5031 = vcombine.low %v4975, %v5007
    %v5032 = vcombine.high %v4975, %v5007
    %v5033 = vcombine.low %v4982, %v5014
    %v5034 = vcombine.high %v4982, %v5014
    %v5035 = vcombine.low %v4991, %v5023
    %v5036 = vcombine.high %v4991, %v5023
    %v5037 = vcombine.low %v4998, %v5030
    %v5038 = vcombine.high %v4998, %v5030
    %v5039 = vcombine.low %v148, %v416
    %v5040 = vcombine.high %v148, %v416
    %v5042 = vunpack.c.l.s4 1983009808
    %v5043 = vunpack.c.0.s8 %v5042
    %v5044 = vlaneseq
    %v5045 = vshrl.u32 %v5044, 7
    %v5046 = vsub.s32 %v5043, %v5045
    %v5047 = vrot.slane %v5039, %v5046
    %v5049 = vunpack.c.l.s4 1983009808
    %v5050 = vunpack.c.0.s8 %v5049
    %v5051 = vlaneseq
    %v5052 = vshrl.u32 %v5051, 7
    %v5053 = vsub.s32 %v5050, %v5052
    %v5054 = vrot.slane %v5040, %v5053
    %v5055 = vcombine.low %v282, %v550
    %v5056 = vcombine.high %v282, %v550
    %v5058 = vunpack.c.l.s4 1983009808
    %v5059 = vunpack.c.0.s8 %v5058
    %v5060 = vlaneseq
    %v5061 = vshrl.u32 %v5060, 7
    %v5062 = vsub.s32 %v5059, %v5061
    %v5063 = vrot.slane %v5055, %v5062
    %v5065 = vunpack.c.l.s4 1983009808
    %v5066 = vunpack.c.0.s8 %v5065
    %v5067 = vlaneseq
    %v5068 = vshrl.u32 %v5067, 7
    %v5069 = vsub.s32 %v5066, %v5068
    %v5070 = vrot.slane %v5056, %v5069
    %v5071 = vcombine.low %v684, %v952
    %v5072 = vcombine.high %v684, %v952
    %v5074 = vunpack.c.l.s4 1983009808
    %v5075 = vunpack.c.0.s8 %v5074
    %v5076 = vlaneseq
    %v5077 = vshrl.u32 %v5076, 7
    %v5078 = vsub.s32 %v5075, %v5077
    %v5079 = vrot.slane %v5071, %v5078
    %v5081 = vunpack.c.l.s4 1983009808
    %v5082 = vunpack.c.0.s8 %v5081
    %v5083 = vlaneseq
    %v5084 = vshrl.u32 %v5083, 7
    %v5085 = vsub.s32 %v5082, %v5084
    %v5086 = vrot.slane %v5072, %v5085
    %v5087 = vcombine.low %v818, %v1086
    %v5088 = vcombine.high %v818, %v1086
    %v5090 = vunpack.c.l.s4 1983009808
    %v5091 = vunpack.c.0.s8 %v5090
    %v5092 = vlaneseq
    %v5093 = vshrl.u32 %v5092, 7
    %v5094 = vsub.s32 %v5091, %v5093
    %v5095 = vrot.slane %v5087, %v5094
    %v5097 = vunpack.c.l.s4 1983009808
    %v5098 = vunpack.c.0.s8 %v5097
    %v5099 = vlaneseq
    %v5100 = vshrl.u32 %v5099, 7
    %v5101 = vsub.s32 %v5098, %v5100
    %v5102 = vrot.slane %v5088, %v5101
    %v5103 = vcombine.low %v5047, %v5063
    %v5104 = vcombine.high %v5047, %v5063
    %v5106 = vunpack.c.l.s4 1934713408
    %v5107 = vunpack.c.0.s8 %v5106
    %v5108 = vlaneseq
    %v5109 = vshrl.u32 %v5108, 7
    %v5110 = vsub.s32 %v5107, %v5109
    %v5111 = vrot.slane %v5103, %v5110
    %v5113 = vunpack.c.l.s4 1934713408
    %v5114 = vunpack.c.0.s8 %v5113
    %v5115 = vlaneseq
    %v5116 = vshrl.u32 %v5115, 7
    %v5117 = vsub.s32 %v5114, %v5116
    %v5118 = vrot.slane %v5104, %v5117
    %v5119 = vcombine.low %v5054, %v5070
    %v5120 = vcombine.high %v5054, %v5070
    %v5122 = vunpack.c.l.s4 1934713408
    %v5123 = vunpack.c.0.s8 %v5122
    %v5124 = vlaneseq
    %v5125 = vshrl.u32 %v5124, 7
    %v5126 = vsub.s32 %v5123, %v5125
    %v5127 = vrot.slane %v5119, %v5126
    %v5129 = vunpack.c.l.s4 1934713408
    %v5130 = vunpack.c.0.s8 %v5129
    %v5131 = vlaneseq
    %v5132 = vshrl.u32 %v5131, 7
    %v5133 = vsub.s32 %v5130, %v5132
    %v5134 = vrot.slane %v5120, %v5133
    %v5135 = vcombine.low %v5079, %v5095
    %v5136 = vcombine.high %v5079, %v5095
    %v5138 = vunpack.c.l.s4 1934713408
    %v5139 = vunpack.c.0.s8 %v5138
    %v5140 = vlaneseq
    %v5141 = vshrl.u32 %v5140, 7
    %v5142 = vsub.s32 %v5139, %v5141
    %v5143 = vrot.slane %v5135, %v5142
    %v5145 = vunpack.c.l.s4 1934713408
    %v5146 = vunpack.c.0.s8 %v5145
    %v5147 = vlaneseq
    %v5148 = vshrl.u32 %v5147, 7
    %v5149 = vsub.s32 %v5146, %v5148
    %v5150 = vrot.slane %v5136, %v5149
    %v5151 = vcombine.low %v5086, %v5102
    %v5152 = vcombine.high %v5086, %v5102
    %v5154 = vunpack.c.l.s4 1934713408
    %v5155 = vunpack.c.0.s8 %v5154
    %v5156 = vlaneseq
    %v5157 = vshrl.u32 %v5156, 7
    %v5158 = vsub.s32 %v5155, %v5157
    %v5159 = vrot.slane %v5151, %v5158
    %v5161 = vunpack.c.l.s4 1934713408
    %v5162 = vunpack.c.0.s8 %v5161
    %v5163 = vlaneseq
    %v5164 = vshrl.u32 %v5163, 7
    %v5165 = vsub.s32 %v5162, %v5164
    %v5166 = vrot.slane %v5152, %v5165
    %v5167 = vcombine.low %v5111, %v5143
    %v5168 = vcombine.high %v5111, %v5143
    %v5169 = vcombine.low %v5118, %v5150
    %v5170 = vcombine.high %v5118, %v5150
    %v5171 = vcombine.low %v5127, %v5159
    %v5172 = vcombine.high %v5127, %v5159
    %v5173 = vcombine.low %v5134, %v5166
    %v5174 = vcombine.high %v5134, %v5166
    %v5175 = vcombine.low %v152, %v420
    %v5176 = vcombine.high %v152, %v420
    %v5178 = vunpack.c.l.s4 1983009808
    %v5179 = vunpack.c.0.s8 %v5178
    %v5180 = vlaneseq
    %v5181 = vshrl.u32 %v5180, 7
    %v5182 = vsub.s32 %v5179, %v5181
    %v5183 = vrot.slane %v5175, %v5182
    %v5185 = vunpack.c.l.s4 1983009808
    %v5186 = vunpack.c.0.s8 %v5185
    %v5187 = vlaneseq
    %v5188 = vshrl.u32 %v5187, 7
    %v5189 = vsub.s32 %v5186, %v5188
    %v5190 = vrot.slane %v5176, %v5189
    %v5191 = vcombine.low %v286, %v554
    %v5192 = vcombine.high %v286, %v554
    %v5194 = vunpack.c.l.s4 1983009808
    %v5195 = vunpack.c.0.s8 %v5194
    %v5196 = vlaneseq
    %v5197 = vshrl.u32 %v5196, 7
    %v5198 = vsub.s32 %v5195, %v5197
    %v5199 = vrot.slane %v5191, %v5198
    %v5201 = vunpack.c.l.s4 1983009808
    %v5202 = vunpack.c.0.s8 %v5201
    %v5203 = vlaneseq
    %v5204 = vshrl.u32 %v5203, 7
    %v5205 = vsub.s32 %v5202, %v5204
    %v5206 = vrot.slane %v5192, %v5205
    %v5207 = vcombine.low %v688, %v956
    %v5208 = vcombine.high %v688, %v956
    %v5210 = vunpack.c.l.s4 1983009808
    %v5211 = vunpack.c.0.s8 %v5210
    %v5212 = vlaneseq
    %v5213 = vshrl.u32 %v5212, 7
    %v5214 = vsub.s32 %v5211, %v5213
    %v5215 = vrot.slane %v5207, %v5214
    %v5217 = vunpack.c.l.s4 1983009808
    %v5218 = vunpack.c.0.s8 %v5217
    %v5219 = vlaneseq
    %v5220 = vshrl.u32 %v5219, 7
    %v5221 = vsub.s32 %v5218, %v5220
    %v5222 = vrot.slane %v5208, %v5221
    %v5223 = vcombine.low %v822, %v1090
    %v5224 = vcombine.high %v822, %v1090
    %v5226 = vunpack.c.l.s4 1983009808
    %v5227 = vunpack.c.0.s8 %v5226
    %v5228 = vlaneseq
    %v5229 = vshrl.u32 %v5228, 7
    %v5230 = vsub.s32 %v5227, %v5229
    %v5231 = vrot.slane %v5223, %v5230
    %v5233 = vunpack.c.l.s4 1983009808
    %v5234 = vunpack.c.0.s8 %v5233
    %v5235 = vlaneseq
    %v5236 = vshrl.u32 %v5235, 7
    %v5237 = vsub.s32 %v5234, %v5236
    %v5238 = vrot.slane %v5224, %v5237
    %v5239 = vcombine.low %v5183, %v5199
    %v5240 = vcombine.high %v5183, %v5199
    %v5242 = vunpack.c.l.s4 1934713408
    %v5243 = vunpack.c.0.s8 %v5242
    %v5244 = vlaneseq
    %v5245 = vshrl.u32 %v5244, 7
    %v5246 = vsub.s32 %v5243, %v5245
    %v5247 = vrot.slane %v5239, %v5246
    %v5249 = vunpack.c.l.s4 1934713408
    %v5250 = vunpack.c.0.s8 %v5249
    %v5251 = vlaneseq
    %v5252 = vshrl.u32 %v5251, 7
    %v5253 = vsub.s32 %v5250, %v5252
    %v5254 = vrot.slane %v5240, %v5253
    %v5255 = vcombine.low %v5190, %v5206
    %v5256 = vcombine.high %v5190, %v5206
    %v5258 = vunpack.c.l.s4 1934713408
    %v5259 = vunpack.c.0.s8 %v5258
    %v5260 = vlaneseq
    %v5261 = vshrl.u32 %v5260, 7
    %v5262 = vsub.s32 %v5259, %v5261
    %v5263 = vrot.slane %v5255, %v5262
    %v5265 = vunpack.c.l.s4 1934713408
    %v5266 = vunpack.c.0.s8 %v5265
    %v5267 = vlaneseq
    %v5268 = vshrl.u32 %v5267, 7
    %v5269 = vsub.s32 %v5266, %v5268
    %v5270 = vrot.slane %v5256, %v5269
    %v5271 = vcombine.low %v5215, %v5231
    %v5272 = vcombine.high %v5215, %v5231
    %v5274 = vunpack.c.l.s4 1934713408
    %v5275 = vunpack.c.0.s8 %v5274
    %v5276 = vlaneseq
    %v5277 = vshrl.u32 %v5276, 7
    %v5278 = vsub.s32 %v5275, %v5277
    %v5279 = vrot.slane %v5271, %v5278
    %v5281 = vunpack.c.l.s4 1934713408
    %v5282 = vunpack.c.0.s8 %v5281
    %v5283 = vlaneseq
    %v5284 = vshrl.u32 %v5283, 7
    %v5285 = vsub.s32 %v5282, %v5284
    %v5286 = vrot.slane %v5272, %v5285
    %v5287 = vcombine.low %v5222, %v5238
    %v5288 = vcombine.high %v5222, %v5238
    %v5290 = vunpack.c.l.s4 1934713408
    %v5291 = vunpack.c.0.s8 %v5290
    %v5292 = vlaneseq
    %v5293 = vshrl.u32 %v5292, 7
    %v5294 = vsub.s32 %v5291, %v5293
    %v5295 = vrot.slane %v5287, %v5294
    %v5297 = vunpack.c.l.s4 1934713408
    %v5298 = vunpack.c.0.s8 %v5297
    %v5299 = vlaneseq
    %v5300 = vshrl.u32 %v5299, 7
    %v5301 = vsub.s32 %v5298, %v5300
    %v5302 = vrot.slane %v5288, %v5301
    %v5303 = vcombine.low %v5247, %v5279
    %v5304 = vcombine.high %v5247, %v5279
    %v5305 = vcombine.low %v5254, %v5286
    %v5306 = vcombine.high %v5254, %v5286
    %v5307 = vcombine.low %v5263, %v5295
    %v5308 = vcombine.high %v5263, %v5295
    %v5309 = vcombine.low %v5270, %v5302
    %v5310 = vcombine.high %v5270, %v5302
    %v5311 = vcombine.low %v156, %v424
    %v5312 = vcombine.high %v156, %v424
    %v5314 = vunpack.c.l.s4 1983009808
    %v5315 = vunpack.c.0.s8 %v5314
    %v5316 = vlaneseq
    %v5317 = vshrl.u32 %v5316, 7
    %v5318 = vsub.s32 %v5315, %v5317
    %v5319 = vrot.slane %v5311, %v5318
    %v5321 = vunpack.c.l.s4 1983009808
    %v5322 = vunpack.c.0.s8 %v5321
    %v5323 = vlaneseq
    %v5324 = vshrl.u32 %v5323, 7
    %v5325 = vsub.s32 %v5322, %v5324
    %v5326 = vrot.slane %v5312, %v5325
    %v5327 = vcombine.low %v290, %v558
    %v5328 = vcombine.high %v290, %v558
    %v5330 = vunpack.c.l.s4 1983009808
    %v5331 = vunpack.c.0.s8 %v5330
    %v5332 = vlaneseq
    %v5333 = vshrl.u32 %v5332, 7
    %v5334 = vsub.s32 %v5331, %v5333
    %v5335 = vrot.slane %v5327, %v5334
    %v5337 = vunpack.c.l.s4 1983009808
    %v5338 = vunpack.c.0.s8 %v5337
    %v5339 = vlaneseq
    %v5340 = vshrl.u32 %v5339, 7
    %v5341 = vsub.s32 %v5338, %v5340
    %v5342 = vrot.slane %v5328, %v5341
    %v5343 = vcombine.low %v692, %v960
    %v5344 = vcombine.high %v692, %v960
    %v5346 = vunpack.c.l.s4 1983009808
    %v5347 = vunpack.c.0.s8 %v5346
    %v5348 = vlaneseq
    %v5349 = vshrl.u32 %v5348, 7
    %v5350 = vsub.s32 %v5347, %v5349
    %v5351 = vrot.slane %v5343, %v5350
    %v5353 = vunpack.c.l.s4 1983009808
    %v5354 = vunpack.c.0.s8 %v5353
    %v5355 = vlaneseq
    %v5356 = vshrl.u32 %v5355, 7
    %v5357 = vsub.s32 %v5354, %v5356
    %v5358 = vrot.slane %v5344, %v5357
    %v5359 = vcombine.low %v826, %v1094
    %v5360 = vcombine.high %v826, %v1094
    %v5362 = vunpack.c.l.s4 1983009808
    %v5363 = vunpack.c.0.s8 %v5362
    %v5364 = vlaneseq
    %v5365 = vshrl.u32 %v5364, 7
    %v5366 = vsub.s32 %v5363, %v5365
    %v5367 = vrot.slane %v5359, %v5366
    %v5369 = vunpack.c.l.s4 1983009808
    %v5370 = vunpack.c.0.s8 %v5369
    %v5371 = vlaneseq
    %v5372 = vshrl.u32 %v5371, 7
    %v5373 = vsub.s32 %v5370, %v5372
    %v5374 = vrot.slane %v5360, %v5373
    %v5375 = vcombine.low %v5319, %v5335
    %v5376 = vcombine.high %v5319, %v5335
    %v5378 = vunpack.c.l.s4 1934713408
    %v5379 = vunpack.c.0.s8 %v5378
    %v5380 = vlaneseq
    %v5381 = vshrl.u32 %v5380, 7
    %v5382 = vsub.s32 %v5379, %v5381
    %v5383 = vrot.slane %v5375, %v5382
    %v5385 = vunpack.c.l.s4 1934713408
    %v5386 = vunpack.c.0.s8 %v5385
    %v5387 = vlaneseq
    %v5388 = vshrl.u32 %v5387, 7
    %v5389 = vsub.s32 %v5386, %v5388
    %v5390 = vrot.slane %v5376, %v5389
    %v5391 = vcombine.low %v5326, %v5342
    %v5392 = vcombine.high %v5326, %v5342
    %v5394 = vunpack.c.l.s4 1934713408
    %v5395 = vunpack.c.0.s8 %v5394
    %v5396 = vlaneseq
    %v5397 = vshrl.u32 %v5396, 7
    %v5398 = vsub.s32 %v5395, %v5397
    %v5399 = vrot.slane %v5391, %v5398
    %v5401 = vunpack.c.l.s4 1934713408
    %v5402 = vunpack.c.0.s8 %v5401
    %v5403 = vlaneseq
    %v5404 = vshrl.u32 %v5403, 7
    %v5405 = vsub.s32 %v5402, %v5404
    %v5406 = vrot.slane %v5392, %v5405
    %v5407 = vcombine.low %v5351, %v5367
    %v5408 = vcombine.high %v5351, %v5367
    %v5410 = vunpack.c.l.s4 1934713408
    %v5411 = vunpack.c.0.s8 %v5410
    %v5412 = vlaneseq
    %v5413 = vshrl.u32 %v5412, 7
    %v5414 = vsub.s32 %v5411, %v5413
    %v5415 = vrot.slane %v5407, %v5414
    %v5417 = vunpack.c.l.s4 1934713408
    %v5418 = vunpack.c.0.s8 %v5417
    %v5419 = vlaneseq
    %v5420 = vshrl.u32 %v5419, 7
    %v5421 = vsub.s32 %v5418, %v5420
    %v5422 = vrot.slane %v5408, %v5421
    %v5423 = vcombine.low %v5358, %v5374
    %v5424 = vcombine.high %v5358, %v5374
    %v5426 = vunpack.c.l.s4 1934713408
    %v5427 = vunpack.c.0.s8 %v5426
    %v5428 = vlaneseq
    %v5429 = vshrl.u32 %v5428, 7
    %v5430 = vsub.s32 %v5427, %v5429
    %v5431 = vrot.slane %v5423, %v5430
    %v5433 = vunpack.c.l.s4 1934713408
    %v5434 = vunpack.c.0.s8 %v5433
    %v5435 = vlaneseq
    %v5436 = vshrl.u32 %v5435, 7
    %v5437 = vsub.s32 %v5434, %v5436
    %v5438 = vrot.slane %v5424, %v5437
    %v5439 = vcombine.low %v5383, %v5415
    %v5440 = vcombine.high %v5383, %v5415
    %v5441 = vcombine.low %v5390, %v5422
    %v5442 = vcombine.high %v5390, %v5422
    %v5443 = vcombine.low %v5399, %v5431
    %v5444 = vcombine.high %v5399, %v5431
    %v5445 = vcombine.low %v5406, %v5438
    %v5446 = vcombine.high %v5406, %v5438
    %5448 = vrot.lane.b32.xlu0 %v1224, 2
    %v5449 = vpop.permute.xlu0 %5448
    %5452 = vrot.lane.b32.xlu0 %v1225, 4
    %v5453 = vpop.permute.xlu0 %5452
    %5456 = vrot.lane.b32.xlu0 %v1226, 6
    %v5457 = vpop.permute.xlu0 %5456
    %5460 = vrot.lane.b32.xlu0 %v1227, 8
    %v5461 = vpop.permute.xlu0 %5460
    %5464 = vrot.lane.b32.xlu0 %v1228, 10
    %v5465 = vpop.permute.xlu0 %5464
    %5468 = vrot.lane.b32.xlu0 %v1229, 12
    %v5469 = vpop.permute.xlu0 %5468
    %5472 = vrot.lane.b32.xlu0 %v1230, 14
    %v5473 = vpop.permute.xlu0 %5472
    %5476 = vrot.lane.b32.xlu0 %v1359, 16
    %v5477 = vpop.permute.xlu0 %5476
    %5480 = vrot.lane.b32.xlu0 %v1360, 18
    %v5481 = vpop.permute.xlu0 %5480
    %5484 = vrot.lane.b32.xlu0 %v1361, 20
    %v5485 = vpop.permute.xlu0 %5484
    %5488 = vrot.lane.b32.xlu0 %v1362, 22
    %v5489 = vpop.permute.xlu0 %5488
    %5492 = vrot.lane.b32.xlu0 %v1363, 24
    %v5493 = vpop.permute.xlu0 %5492
    %5496 = vrot.lane.b32.xlu0 %v1364, 26
    %v5497 = vpop.permute.xlu0 %5496
    %5500 = vrot.lane.b32.xlu0 %v1365, 28
    %v5501 = vpop.permute.xlu0 %5500
    %5504 = vrot.lane.b32.xlu0 %v1366, 30
    %v5505 = vpop.permute.xlu0 %5504
    %5508 = vrot.lane.b32.xlu0 %v1495, 32
    %v5509 = vpop.permute.xlu0 %5508
    %5512 = vrot.lane.b32.xlu0 %v1496, 34
    %v5513 = vpop.permute.xlu0 %5512
    %5516 = vrot.lane.b32.xlu0 %v1497, 36
    %v5517 = vpop.permute.xlu0 %5516
    %5520 = vrot.lane.b32.xlu0 %v1498, 38
    %v5521 = vpop.permute.xlu0 %5520
    %5524 = vrot.lane.b32.xlu0 %v1499, 40
    %v5525 = vpop.permute.xlu0 %5524
    %5528 = vrot.lane.b32.xlu0 %v1500, 42
    %v5529 = vpop.permute.xlu0 %5528
    %5532 = vrot.lane.b32.xlu0 %v1501, 44
    %v5533 = vpop.permute.xlu0 %5532
    %5536 = vrot.lane.b32.xlu0 %v1502, 46
    %v5537 = vpop.permute.xlu0 %5536
    %5540 = vrot.lane.b32.xlu0 %v1631, 48
    %v5541 = vpop.permute.xlu0 %5540
    %5544 = vrot.lane.b32.xlu0 %v1632, 50
    %v5545 = vpop.permute.xlu0 %5544
    %5548 = vrot.lane.b32.xlu0 %v1633, 52
    %v5549 = vpop.permute.xlu0 %5548
    %5552 = vrot.lane.b32.xlu0 %v1634, 54
    %v5553 = vpop.permute.xlu0 %5552
    %5556 = vrot.lane.b32.xlu0 %v1635, 56
    %v5557 = vpop.permute.xlu0 %5556
    %5560 = vrot.lane.b32.xlu0 %v1636, 58
    %v5561 = vpop.permute.xlu0 %5560
    %5564 = vrot.lane.b32.xlu0 %v1637, 60
    %v5565 = vpop.permute.xlu0 %5564
    %5568 = vrot.lane.b32.xlu0 %v1638, 62
    %v5569 = vpop.permute.xlu0 %5568
    %5572 = vrot.lane.b32.xlu0 %v1767, 64
    %v5573 = vpop.permute.xlu0 %5572
    %5576 = vrot.lane.b32.xlu0 %v1768, 66
    %v5577 = vpop.permute.xlu0 %5576
    %5580 = vrot.lane.b32.xlu0 %v1769, 68
    %v5581 = vpop.permute.xlu0 %5580
    %5584 = vrot.lane.b32.xlu0 %v1770, 70
    %v5585 = vpop.permute.xlu0 %5584
    %5588 = vrot.lane.b32.xlu0 %v1771, 72
    %v5589 = vpop.permute.xlu0 %5588
    %5592 = vrot.lane.b32.xlu0 %v1772, 74
    %v5593 = vpop.permute.xlu0 %5592
    %5596 = vrot.lane.b32.xlu0 %v1773, 76
    %v5597 = vpop.permute.xlu0 %5596
    %5600 = vrot.lane.b32.xlu0 %v1774, 78
    %v5601 = vpop.permute.xlu0 %5600
    %5604 = vrot.lane.b32.xlu0 %v1903, 80
    %v5605 = vpop.permute.xlu0 %5604
    %5608 = vrot.lane.b32.xlu0 %v1904, 82
    %v5609 = vpop.permute.xlu0 %5608
    %5612 = vrot.lane.b32.xlu0 %v1905, 84
    %v5613 = vpop.permute.xlu0 %5612
    %5616 = vrot.lane.b32.xlu0 %v1906, 86
    %v5617 = vpop.permute.xlu0 %5616
    %5620 = vrot.lane.b32.xlu0 %v1907, 88
    %v5621 = vpop.permute.xlu0 %5620
    %5624 = vrot.lane.b32.xlu0 %v1908, 90
    %v5625 = vpop.permute.xlu0 %5624
    %5628 = vrot.lane.b32.xlu0 %v1909, 92
    %v5629 = vpop.permute.xlu0 %5628
    %5632 = vrot.lane.b32.xlu0 %v1910, 94
    %v5633 = vpop.permute.xlu0 %5632
    %5636 = vrot.lane.b32.xlu0 %v2039, 96
    %v5637 = vpop.permute.xlu0 %5636
    %5640 = vrot.lane.b32.xlu0 %v2040, 98
    %v5641 = vpop.permute.xlu0 %5640
    %5644 = vrot.lane.b32.xlu0 %v2041, 100
    %v5645 = vpop.permute.xlu0 %5644
    %5648 = vrot.lane.b32.xlu0 %v2042, 102
    %v5649 = vpop.permute.xlu0 %5648
    %5652 = vrot.lane.b32.xlu0 %v2043, 104
    %v5653 = vpop.permute.xlu0 %5652
    %5656 = vrot.lane.b32.xlu0 %v2044, 106
    %v5657 = vpop.permute.xlu0 %5656
    %5660 = vrot.lane.b32.xlu0 %v2045, 108
    %v5661 = vpop.permute.xlu0 %5660
    %5664 = vrot.lane.b32.xlu0 %v2046, 110
    %v5665 = vpop.permute.xlu0 %5664
    %5668 = vrot.lane.b32.xlu0 %v2175, 112
    %v5669 = vpop.permute.xlu0 %5668
    %5672 = vrot.lane.b32.xlu0 %v2176, 114
    %v5673 = vpop.permute.xlu0 %5672
    %5676 = vrot.lane.b32.xlu0 %v2177, 116
    %v5677 = vpop.permute.xlu0 %5676
    %5680 = vrot.lane.b32.xlu0 %v2178, 118
    %v5681 = vpop.permute.xlu0 %5680
    %5684 = vrot.lane.b32.xlu0 %v2179, 120
    %v5685 = vpop.permute.xlu0 %5684
    %5688 = vrot.lane.b32.xlu0 %v2180, 122
    %v5689 = vpop.permute.xlu0 %5688
    %5692 = vrot.lane.b32.xlu0 %v2181, 124
    %v5693 = vpop.permute.xlu0 %5692
    %5696 = vrot.lane.b32.xlu0 %v2182, 126
    %v5697 = vpop.permute.xlu0 %5696
    %5700 = vrot.lane.b32.xlu0 %v2312, 2
    %v5701 = vpop.permute.xlu0 %5700
    %5704 = vrot.lane.b32.xlu0 %v2313, 4
    %v5705 = vpop.permute.xlu0 %5704
    %5708 = vrot.lane.b32.xlu0 %v2314, 6
    %v5709 = vpop.permute.xlu0 %5708
    %5712 = vrot.lane.b32.xlu0 %v2315, 8
    %v5713 = vpop.permute.xlu0 %5712
    %5716 = vrot.lane.b32.xlu0 %v2316, 10
    %v5717 = vpop.permute.xlu0 %5716
    %5720 = vrot.lane.b32.xlu0 %v2317, 12
    %v5721 = vpop.permute.xlu0 %5720
    %5724 = vrot.lane.b32.xlu0 %v2318, 14
    %v5725 = vpop.permute.xlu0 %5724
    %5728 = vrot.lane.b32.xlu0 %v2447, 16
    %v5729 = vpop.permute.xlu0 %5728
    %5732 = vrot.lane.b32.xlu0 %v2448, 18
    %v5733 = vpop.permute.xlu0 %5732
    %5736 = vrot.lane.b32.xlu0 %v2449, 20
    %v5737 = vpop.permute.xlu0 %5736
    %5740 = vrot.lane.b32.xlu0 %v2450, 22
    %v5741 = vpop.permute.xlu0 %5740
    %5744 = vrot.lane.b32.xlu0 %v2451, 24
    %v5745 = vpop.permute.xlu0 %5744
    %5748 = vrot.lane.b32.xlu0 %v2452, 26
    %v5749 = vpop.permute.xlu0 %5748
    %5752 = vrot.lane.b32.xlu0 %v2453, 28
    %v5753 = vpop.permute.xlu0 %5752
    %5756 = vrot.lane.b32.xlu0 %v2454, 30
    %v5757 = vpop.permute.xlu0 %5756
    %5760 = vrot.lane.b32.xlu0 %v2583, 32
    %v5761 = vpop.permute.xlu0 %5760
    %5764 = vrot.lane.b32.xlu0 %v2584, 34
    %v5765 = vpop.permute.xlu0 %5764
    %5768 = vrot.lane.b32.xlu0 %v2585, 36
    %v5769 = vpop.permute.xlu0 %5768
    %5772 = vrot.lane.b32.xlu0 %v2586, 38
    %v5773 = vpop.permute.xlu0 %5772
    %5776 = vrot.lane.b32.xlu0 %v2587, 40
    %v5777 = vpop.permute.xlu0 %5776
    %5780 = vrot.lane.b32.xlu0 %v2588, 42
    %v5781 = vpop.permute.xlu0 %5780
    %5784 = vrot.lane.b32.xlu0 %v2589, 44
    %v5785 = vpop.permute.xlu0 %5784
    %5788 = vrot.lane.b32.xlu0 %v2590, 46
    %v5789 = vpop.permute.xlu0 %5788
    %5792 = vrot.lane.b32.xlu0 %v2719, 48
    %v5793 = vpop.permute.xlu0 %5792
    %5796 = vrot.lane.b32.xlu0 %v2720, 50
    %v5797 = vpop.permute.xlu0 %5796
    %5800 = vrot.lane.b32.xlu0 %v2721, 52
    %v5801 = vpop.permute.xlu0 %5800
    %5804 = vrot.lane.b32.xlu0 %v2722, 54
    %v5805 = vpop.permute.xlu0 %5804
    %5808 = vrot.lane.b32.xlu0 %v2723, 56
    %v5809 = vpop.permute.xlu0 %5808
    %5812 = vrot.lane.b32.xlu0 %v2724, 58
    %v5813 = vpop.permute.xlu0 %5812
    %5816 = vrot.lane.b32.xlu0 %v2725, 60
    %v5817 = vpop.permute.xlu0 %5816
    %5820 = vrot.lane.b32.xlu0 %v2726, 62
    %v5821 = vpop.permute.xlu0 %5820
    %5824 = vrot.lane.b32.xlu0 %v2855, 64
    %v5825 = vpop.permute.xlu0 %5824
    %5828 = vrot.lane.b32.xlu0 %v2856, 66
    %v5829 = vpop.permute.xlu0 %5828
    %5832 = vrot.lane.b32.xlu0 %v2857, 68
    %v5833 = vpop.permute.xlu0 %5832
    %5836 = vrot.lane.b32.xlu0 %v2858, 70
    %v5837 = vpop.permute.xlu0 %5836
    %5840 = vrot.lane.b32.xlu0 %v2859, 72
    %v5841 = vpop.permute.xlu0 %5840
    %5844 = vrot.lane.b32.xlu0 %v2860, 74
    %v5845 = vpop.permute.xlu0 %5844
    %5848 = vrot.lane.b32.xlu0 %v2861, 76
    %v5849 = vpop.permute.xlu0 %5848
    %5852 = vrot.lane.b32.xlu0 %v2862, 78
    %v5853 = vpop.permute.xlu0 %5852
    %5856 = vrot.lane.b32.xlu0 %v2991, 80
    %v5857 = vpop.permute.xlu0 %5856
    %5860 = vrot.lane.b32.xlu0 %v2992, 82
    %v5861 = vpop.permute.xlu0 %5860
    %5864 = vrot.lane.b32.xlu0 %v2993, 84
    %v5865 = vpop.permute.xlu0 %5864
    %5868 = vrot.lane.b32.xlu0 %v2994, 86
    %v5869 = vpop.permute.xlu0 %5868
    %5872 = vrot.lane.b32.xlu0 %v2995, 88
    %v5873 = vpop.permute.xlu0 %5872
    %5876 = vrot.lane.b32.xlu0 %v2996, 90
    %v5877 = vpop.permute.xlu0 %5876
    %5880 = vrot.lane.b32.xlu0 %v2997, 92
    %v5881 = vpop.permute.xlu0 %5880
    %5884 = vrot.lane.b32.xlu0 %v2998, 94
    %v5885 = vpop.permute.xlu0 %5884
    %5888 = vrot.lane.b32.xlu0 %v3127, 96
    %v5889 = vpop.permute.xlu0 %5888
    %5892 = vrot.lane.b32.xlu0 %v3128, 98
    %v5893 = vpop.permute.xlu0 %5892
    %5896 = vrot.lane.b32.xlu0 %v3129, 100
    %v5897 = vpop.permute.xlu0 %5896
    %5900 = vrot.lane.b32.xlu0 %v3130, 102
    %v5901 = vpop.permute.xlu0 %5900
    %5904 = vrot.lane.b32.xlu0 %v3131, 104
    %v5905 = vpop.permute.xlu0 %5904
    %5908 = vrot.lane.b32.xlu0 %v3132, 106
    %v5909 = vpop.permute.xlu0 %5908
    %5912 = vrot.lane.b32.xlu0 %v3133, 108
    %v5913 = vpop.permute.xlu0 %5912
    %5916 = vrot.lane.b32.xlu0 %v3134, 110
    %v5917 = vpop.permute.xlu0 %5916
    %5920 = vrot.lane.b32.xlu0 %v3263, 112
    %v5921 = vpop.permute.xlu0 %5920
    %5924 = vrot.lane.b32.xlu0 %v3264, 114
    %v5925 = vpop.permute.xlu0 %5924
    %5928 = vrot.lane.b32.xlu0 %v3265, 116
    %v5929 = vpop.permute.xlu0 %5928
    %5932 = vrot.lane.b32.xlu0 %v3266, 118
    %v5933 = vpop.permute.xlu0 %5932
    %5936 = vrot.lane.b32.xlu0 %v3267, 120
    %v5937 = vpop.permute.xlu0 %5936
    %5940 = vrot.lane.b32.xlu0 %v3268, 122
    %v5941 = vpop.permute.xlu0 %5940
    %5944 = vrot.lane.b32.xlu0 %v3269, 124
    %v5945 = vpop.permute.xlu0 %5944
    %5948 = vrot.lane.b32.xlu0 %v3270, 126
    %v5949 = vpop.permute.xlu0 %5948
    %5952 = vrot.lane.b32.xlu0 %v3400, 2
    %v5953 = vpop.permute.xlu0 %5952
    %5956 = vrot.lane.b32.xlu0 %v3401, 4
    %v5957 = vpop.permute.xlu0 %5956
    %5960 = vrot.lane.b32.xlu0 %v3402, 6
    %v5961 = vpop.permute.xlu0 %5960
    %5964 = vrot.lane.b32.xlu0 %v3403, 8
    %v5965 = vpop.permute.xlu0 %5964
    %5968 = vrot.lane.b32.xlu0 %v3404, 10
    %v5969 = vpop.permute.xlu0 %5968
    %5972 = vrot.lane.b32.xlu0 %v3405, 12
    %v5973 = vpop.permute.xlu0 %5972
    %5976 = vrot.lane.b32.xlu0 %v3406, 14
    %v5977 = vpop.permute.xlu0 %5976
    %5980 = vrot.lane.b32.xlu0 %v3535, 16
    %v5981 = vpop.permute.xlu0 %5980
    %5984 = vrot.lane.b32.xlu0 %v3536, 18
    %v5985 = vpop.permute.xlu0 %5984
    %5988 = vrot.lane.b32.xlu0 %v3537, 20
    %v5989 = vpop.permute.xlu0 %5988
    %5992 = vrot.lane.b32.xlu0 %v3538, 22
    %v5993 = vpop.permute.xlu0 %5992
    %5996 = vrot.lane.b32.xlu0 %v3539, 24
    %v5997 = vpop.permute.xlu0 %5996
    %6000 = vrot.lane.b32.xlu0 %v3540, 26
    %v6001 = vpop.permute.xlu0 %6000
    %6004 = vrot.lane.b32.xlu0 %v3541, 28
    %v6005 = vpop.permute.xlu0 %6004
    %6008 = vrot.lane.b32.xlu0 %v3542, 30
    %v6009 = vpop.permute.xlu0 %6008
    %6012 = vrot.lane.b32.xlu0 %v3671, 32
    %v6013 = vpop.permute.xlu0 %6012
    %6016 = vrot.lane.b32.xlu0 %v3672, 34
    %v6017 = vpop.permute.xlu0 %6016
    %6020 = vrot.lane.b32.xlu0 %v3673, 36
    %v6021 = vpop.permute.xlu0 %6020
    %6024 = vrot.lane.b32.xlu0 %v3674, 38
    %v6025 = vpop.permute.xlu0 %6024
    %6028 = vrot.lane.b32.xlu0 %v3675, 40
    %v6029 = vpop.permute.xlu0 %6028
    %6032 = vrot.lane.b32.xlu0 %v3676, 42
    %v6033 = vpop.permute.xlu0 %6032
    %6036 = vrot.lane.b32.xlu0 %v3677, 44
    %v6037 = vpop.permute.xlu0 %6036
    %6040 = vrot.lane.b32.xlu0 %v3678, 46
    %v6041 = vpop.permute.xlu0 %6040
    %6044 = vrot.lane.b32.xlu0 %v3807, 48
    %v6045 = vpop.permute.xlu0 %6044
    %6048 = vrot.lane.b32.xlu0 %v3808, 50
    %v6049 = vpop.permute.xlu0 %6048
    %6052 = vrot.lane.b32.xlu0 %v3809, 52
    %v6053 = vpop.permute.xlu0 %6052
    %6056 = vrot.lane.b32.xlu0 %v3810, 54
    %v6057 = vpop.permute.xlu0 %6056
    %6060 = vrot.lane.b32.xlu0 %v3811, 56
    %v6061 = vpop.permute.xlu0 %6060
    %6064 = vrot.lane.b32.xlu0 %v3812, 58
    %v6065 = vpop.permute.xlu0 %6064
    %6068 = vrot.lane.b32.xlu0 %v3813, 60
    %v6069 = vpop.permute.xlu0 %6068
    %6072 = vrot.lane.b32.xlu0 %v3814, 62
    %v6073 = vpop.permute.xlu0 %6072
    %6076 = vrot.lane.b32.xlu0 %v3943, 64
    %v6077 = vpop.permute.xlu0 %6076
    %6080 = vrot.lane.b32.xlu0 %v3944, 66
    %v6081 = vpop.permute.xlu0 %6080
    %6084 = vrot.lane.b32.xlu0 %v3945, 68
    %v6085 = vpop.permute.xlu0 %6084
    %6088 = vrot.lane.b32.xlu0 %v3946, 70
    %v6089 = vpop.permute.xlu0 %6088
    %6092 = vrot.lane.b32.xlu0 %v3947, 72
    %v6093 = vpop.permute.xlu0 %6092
    %6096 = vrot.lane.b32.xlu0 %v3948, 74
    %v6097 = vpop.permute.xlu0 %6096
    %6100 = vrot.lane.b32.xlu0 %v3949, 76
    %v6101 = vpop.permute.xlu0 %6100
    %6104 = vrot.lane.b32.xlu0 %v3950, 78
    %v6105 = vpop.permute.xlu0 %6104
    %6108 = vrot.lane.b32.xlu0 %v4079, 80
    %v6109 = vpop.permute.xlu0 %6108
    %6112 = vrot.lane.b32.xlu0 %v4080, 82
    %v6113 = vpop.permute.xlu0 %6112
    %6116 = vrot.lane.b32.xlu0 %v4081, 84
    %v6117 = vpop.permute.xlu0 %6116
    %6120 = vrot.lane.b32.xlu0 %v4082, 86
    %v6121 = vpop.permute.xlu0 %6120
    %6124 = vrot.lane.b32.xlu0 %v4083, 88
    %v6125 = vpop.permute.xlu0 %6124
    %6128 = vrot.lane.b32.xlu0 %v4084, 90
    %v6129 = vpop.permute.xlu0 %6128
    %6132 = vrot.lane.b32.xlu0 %v4085, 92
    %v6133 = vpop.permute.xlu0 %6132
    %6136 = vrot.lane.b32.xlu0 %v4086, 94
    %v6137 = vpop.permute.xlu0 %6136
    %6140 = vrot.lane.b32.xlu0 %v4215, 96
    %v6141 = vpop.permute.xlu0 %6140
    %6144 = vrot.lane.b32.xlu0 %v4216, 98
    %v6145 = vpop.permute.xlu0 %6144
    %6148 = vrot.lane.b32.xlu0 %v4217, 100
    %v6149 = vpop.permute.xlu0 %6148
    %6152 = vrot.lane.b32.xlu0 %v4218, 102
    %v6153 = vpop.permute.xlu0 %6152
    %6156 = vrot.lane.b32.xlu0 %v4219, 104
    %v6157 = vpop.permute.xlu0 %6156
    %6160 = vrot.lane.b32.xlu0 %v4220, 106
    %v6161 = vpop.permute.xlu0 %6160
    %6164 = vrot.lane.b32.xlu0 %v4221, 108
    %v6165 = vpop.permute.xlu0 %6164
    %6168 = vrot.lane.b32.xlu0 %v4222, 110
    %v6169 = vpop.permute.xlu0 %6168
    %6172 = vrot.lane.b32.xlu0 %v4351, 112
    %v6173 = vpop.permute.xlu0 %6172
    %6176 = vrot.lane.b32.xlu0 %v4352, 114
    %v6177 = vpop.permute.xlu0 %6176
    %6180 = vrot.lane.b32.xlu0 %v4353, 116
    %v6181 = vpop.permute.xlu0 %6180
    %6184 = vrot.lane.b32.xlu0 %v4354, 118
    %v6185 = vpop.permute.xlu0 %6184
    %6188 = vrot.lane.b32.xlu0 %v4355, 120
    %v6189 = vpop.permute.xlu0 %6188
    %6192 = vrot.lane.b32.xlu0 %v4356, 122
    %v6193 = vpop.permute.xlu0 %6192
    %6196 = vrot.lane.b32.xlu0 %v4357, 124
    %v6197 = vpop.permute.xlu0 %6196
    %6200 = vrot.lane.b32.xlu0 %v4358, 126
    %v6201 = vpop.permute.xlu0 %6200
    %6204 = vrot.lane.b32.xlu0 %v4488, 2
    %v6205 = vpop.permute.xlu0 %6204
    %6208 = vrot.lane.b32.xlu0 %v4489, 4
    %v6209 = vpop.permute.xlu0 %6208
    %6212 = vrot.lane.b32.xlu0 %v4490, 6
    %v6213 = vpop.permute.xlu0 %6212
    %6216 = vrot.lane.b32.xlu0 %v4491, 8
    %v6217 = vpop.permute.xlu0 %6216
    %6220 = vrot.lane.b32.xlu0 %v4492, 10
    %v6221 = vpop.permute.xlu0 %6220
    %6224 = vrot.lane.b32.xlu0 %v4493, 12
    %v6225 = vpop.permute.xlu0 %6224
    %6228 = vrot.lane.b32.xlu0 %v4494, 14
    %v6229 = vpop.permute.xlu0 %6228
    %6232 = vrot.lane.b32.xlu0 %v4623, 16
    %v6233 = vpop.permute.xlu0 %6232
    %6236 = vrot.lane.b32.xlu0 %v4624, 18
    %v6237 = vpop.permute.xlu0 %6236
    %6240 = vrot.lane.b32.xlu0 %v4625, 20
    %v6241 = vpop.permute.xlu0 %6240
    %6244 = vrot.lane.b32.xlu0 %v4626, 22
    %v6245 = vpop.permute.xlu0 %6244
    %6248 = vrot.lane.b32.xlu0 %v4627, 24
    %v6249 = vpop.permute.xlu0 %6248
    %6252 = vrot.lane.b32.xlu0 %v4628, 26
    %v6253 = vpop.permute.xlu0 %6252
    %6256 = vrot.lane.b32.xlu0 %v4629, 28
    %v6257 = vpop.permute.xlu0 %6256
    %6260 = vrot.lane.b32.xlu0 %v4630, 30
    %v6261 = vpop.permute.xlu0 %6260
    %6264 = vrot.lane.b32.xlu0 %v4759, 32
    %v6265 = vpop.permute.xlu0 %6264
    %6268 = vrot.lane.b32.xlu0 %v4760, 34
    %v6269 = vpop.permute.xlu0 %6268
    %6272 = vrot.lane.b32.xlu0 %v4761, 36
    %v6273 = vpop.permute.xlu0 %6272
    %6276 = vrot.lane.b32.xlu0 %v4762, 38
    %v6277 = vpop.permute.xlu0 %6276
    %6280 = vrot.lane.b32.xlu0 %v4763, 40
    %v6281 = vpop.permute.xlu0 %6280
    %6284 = vrot.lane.b32.xlu0 %v4764, 42
    %v6285 = vpop.permute.xlu0 %6284
    %6288 = vrot.lane.b32.xlu0 %v4765, 44
    %v6289 = vpop.permute.xlu0 %6288
    %6292 = vrot.lane.b32.xlu0 %v4766, 46
    %v6293 = vpop.permute.xlu0 %6292
    %6296 = vrot.lane.b32.xlu0 %v4895, 48
    %v6297 = vpop.permute.xlu0 %6296
    %6300 = vrot.lane.b32.xlu0 %v4896, 50
    %v6301 = vpop.permute.xlu0 %6300
    %6304 = vrot.lane.b32.xlu0 %v4897, 52
    %v6305 = vpop.permute.xlu0 %6304
    %6308 = vrot.lane.b32.xlu0 %v4898, 54
    %v6309 = vpop.permute.xlu0 %6308
    %6312 = vrot.lane.b32.xlu0 %v4899, 56
    %v6313 = vpop.permute.xlu0 %6312
    %6316 = vrot.lane.b32.xlu0 %v4900, 58
    %v6317 = vpop.permute.xlu0 %6316
    %6320 = vrot.lane.b32.xlu0 %v4901, 60
    %v6321 = vpop.permute.xlu0 %6320
    %6324 = vrot.lane.b32.xlu0 %v4902, 62
    %v6325 = vpop.permute.xlu0 %6324
    %6328 = vrot.lane.b32.xlu0 %v5031, 64
    %v6329 = vpop.permute.xlu0 %6328
    %6332 = vrot.lane.b32.xlu0 %v5032, 66
    %v6333 = vpop.permute.xlu0 %6332
    %6336 = vrot.lane.b32.xlu0 %v5033, 68
    %v6337 = vpop.permute.xlu0 %6336
    %6340 = vrot.lane.b32.xlu0 %v5034, 70
    %v6341 = vpop.permute.xlu0 %6340
    %6344 = vrot.lane.b32.xlu0 %v5035, 72
    %v6345 = vpop.permute.xlu0 %6344
    %6348 = vrot.lane.b32.xlu0 %v5036, 74
    %v6349 = vpop.permute.xlu0 %6348
    %6352 = vrot.lane.b32.xlu0 %v5037, 76
    %v6353 = vpop.permute.xlu0 %6352
    %6356 = vrot.lane.b32.xlu0 %v5038, 78
    %v6357 = vpop.permute.xlu0 %6356
    %6360 = vrot.lane.b32.xlu0 %v5167, 80
    %v6361 = vpop.permute.xlu0 %6360
    %6364 = vrot.lane.b32.xlu0 %v5168, 82
    %v6365 = vpop.permute.xlu0 %6364
    %6368 = vrot.lane.b32.xlu0 %v5169, 84
    %v6369 = vpop.permute.xlu0 %6368
    %6372 = vrot.lane.b32.xlu0 %v5170, 86
    %v6373 = vpop.permute.xlu0 %6372
    %6376 = vrot.lane.b32.xlu0 %v5171, 88
    %v6377 = vpop.permute.xlu0 %6376
    %6380 = vrot.lane.b32.xlu0 %v5172, 90
    %v6381 = vpop.permute.xlu0 %6380
    %6384 = vrot.lane.b32.xlu0 %v5173, 92
    %v6385 = vpop.permute.xlu0 %6384
    %6388 = vrot.lane.b32.xlu0 %v5174, 94
    %v6389 = vpop.permute.xlu0 %6388
    %6392 = vrot.lane.b32.xlu0 %v5303, 96
    %v6393 = vpop.permute.xlu0 %6392
    %6396 = vrot.lane.b32.xlu0 %v5304, 98
    %v6397 = vpop.permute.xlu0 %6396
    %6400 = vrot.lane.b32.xlu0 %v5305, 100
    %v6401 = vpop.permute.xlu0 %6400
    %6404 = vrot.lane.b32.xlu0 %v5306, 102
    %v6405 = vpop.permute.xlu0 %6404
    %6408 = vrot.lane.b32.xlu0 %v5307, 104
    %v6409 = vpop.permute.xlu0 %6408
    %6412 = vrot.lane.b32.xlu0 %v5308, 106
    %v6413 = vpop.permute.xlu0 %6412
    %6416 = vrot.lane.b32.xlu0 %v5309, 108
    %v6417 = vpop.permute.xlu0 %6416
    %6420 = vrot.lane.b32.xlu0 %v5310, 110
    %v6421 = vpop.permute.xlu0 %6420
    %6424 = vrot.lane.b32.xlu0 %v5439, 112
    %v6425 = vpop.permute.xlu0 %6424
    %6428 = vrot.lane.b32.xlu0 %v5440, 114
    %v6429 = vpop.permute.xlu0 %6428
    %6432 = vrot.lane.b32.xlu0 %v5441, 116
    %v6433 = vpop.permute.xlu0 %6432
    %6436 = vrot.lane.b32.xlu0 %v5442, 118
    %v6437 = vpop.permute.xlu0 %6436
    %6440 = vrot.lane.b32.xlu0 %v5443, 120
    %v6441 = vpop.permute.xlu0 %6440
    %6444 = vrot.lane.b32.xlu0 %v5444, 122
    %v6445 = vpop.permute.xlu0 %6444
    %6448 = vrot.lane.b32.xlu0 %v5445, 124
    %v6449 = vpop.permute.xlu0 %6448
    %6452 = vrot.lane.b32.xlu0 %v5446, 126
    %v6453 = vpop.permute.xlu0 %6452
    %vm6455 = vcmask 15360
    %v6456 = vsel %vm6455, %v1223, %v5449
    %vm6457 = vcmask 31744
    %v6458 = vsel %vm6457, %v6456, %v5453
    %vm6459 = vcmask 48128
    %v6460 = vsel %vm6459, %v6458, %v5457
    %vm6461 = vcmask 64512
    %v6462 = vsel %vm6461, %v6460, %v5461
    %vm6463 = vcmask 80896
    %v6464 = vsel %vm6463, %v6462, %v5465
    %vm6465 = vcmask 97280
    %v6466 = vsel %vm6465, %v6464, %v5469
    %vm6467 = vcmask 113664
    %v6468 = vsel %vm6467, %v6466, %v5473
    %vm6469 = vcmask 130048
    %v6470 = vsel %vm6469, %v6468, %v5477
    %vm6471 = vcmask 146432
    %v6472 = vsel %vm6471, %v6470, %v5481
    %vm6473 = vcmask 162816
    %v6474 = vsel %vm6473, %v6472, %v5485
    %vm6475 = vcmask 179200
    %v6476 = vsel %vm6475, %v6474, %v5489
    %vm6477 = vcmask 195584
    %v6478 = vsel %vm6477, %v6476, %v5493
    %vm6479 = vcmask 211968
    %v6480 = vsel %vm6479, %v6478, %v5497
    %vm6481 = vcmask 228352
    %v6482 = vsel %vm6481, %v6480, %v5501
    %vm6483 = vcmask 244736
    %v6484 = vsel %vm6483, %v6482, %v5505
    %vm6485 = vcmask 261120
    %v6486 = vsel %vm6485, %v6484, %v5509
    %vm6487 = vcmask 277504
    %v6488 = vsel %vm6487, %v6486, %v5513
    %vm6489 = vcmask 293888
    %v6490 = vsel %vm6489, %v6488, %v5517
    %vm6491 = vcmask 310272
    %v6492 = vsel %vm6491, %v6490, %v5521
    %vm6493 = vcmask 326656
    %v6494 = vsel %vm6493, %v6492, %v5525
    %vm6495 = vcmask 343040
    %v6496 = vsel %vm6495, %v6494, %v5529
    %vm6497 = vcmask 359424
    %v6498 = vsel %vm6497, %v6496, %v5533
    %vm6499 = vcmask 375808
    %v6500 = vsel %vm6499, %v6498, %v5537
    %vm6501 = vcmask 392192
    %v6502 = vsel %vm6501, %v6500, %v5541
    %vm6503 = vcmask 408576
    %v6504 = vsel %vm6503, %v6502, %v5545
    %vm6505 = vcmask 424960
    %v6506 = vsel %vm6505, %v6504, %v5549
    %vm6507 = vcmask 441344
    %v6508 = vsel %vm6507, %v6506, %v5553
    %vm6509 = vcmask 457728
    %v6510 = vsel %vm6509, %v6508, %v5557
    %vm6511 = vcmask 474112
    %v6512 = vsel %vm6511, %v6510, %v5561
    %vm6513 = vcmask 490496
    %v6514 = vsel %vm6513, %v6512, %v5565
    %vm6515 = vcmask 506880
    %v6516 = vsel %vm6515, %v6514, %v5569
    %vm6517 = vcmask 523264
    %v6518 = vsel %vm6517, %v6516, %v5573
    %vm6519 = vcmask 539648
    %v6520 = vsel %vm6519, %v6518, %v5577
    %vm6521 = vcmask 556032
    %v6522 = vsel %vm6521, %v6520, %v5581
    %vm6523 = vcmask 572416
    %v6524 = vsel %vm6523, %v6522, %v5585
    %vm6525 = vcmask 588800
    %v6526 = vsel %vm6525, %v6524, %v5589
    %vm6527 = vcmask 605184
    %v6528 = vsel %vm6527, %v6526, %v5593
    %vm6529 = vcmask 621568
    %v6530 = vsel %vm6529, %v6528, %v5597
    %vm6531 = vcmask 637952
    %v6532 = vsel %vm6531, %v6530, %v5601
    %vm6533 = vcmask 654336
    %v6534 = vsel %vm6533, %v6532, %v5605
    %vm6535 = vcmask 670720
    %v6536 = vsel %vm6535, %v6534, %v5609
    %vm6537 = vcmask 687104
    %v6538 = vsel %vm6537, %v6536, %v5613
    %vm6539 = vcmask 703488
    %v6540 = vsel %vm6539, %v6538, %v5617
    %vm6541 = vcmask 719872
    %v6542 = vsel %vm6541, %v6540, %v5621
    %vm6543 = vcmask 736256
    %v6544 = vsel %vm6543, %v6542, %v5625
    %vm6545 = vcmask 752640
    %v6546 = vsel %vm6545, %v6544, %v5629
    %vm6547 = vcmask 769024
    %v6548 = vsel %vm6547, %v6546, %v5633
    %vm6549 = vcmask 785408
    %v6550 = vsel %vm6549, %v6548, %v5637
    %vm6551 = vcmask 801792
    %v6552 = vsel %vm6551, %v6550, %v5641
    %vm6553 = vcmask 818176
    %v6554 = vsel %vm6553, %v6552, %v5645
    %vm6555 = vcmask 834560
    %v6556 = vsel %vm6555, %v6554, %v5649
    %vm6557 = vcmask 850944
    %v6558 = vsel %vm6557, %v6556, %v5653
    %vm6559 = vcmask 867328
    %v6560 = vsel %vm6559, %v6558, %v5657
    %vm6561 = vcmask 883712
    %v6562 = vsel %vm6561, %v6560, %v5661
    %vm6563 = vcmask 900096
    %v6564 = vsel %vm6563, %v6562, %v5665
    %vm6565 = vcmask 916480
    %v6566 = vsel %vm6565, %v6564, %v5669
    %vm6567 = vcmask 932864
    %v6568 = vsel %vm6567, %v6566, %v5673
    %vm6569 = vcmask 949248
    %v6570 = vsel %vm6569, %v6568, %v5677
    %vm6571 = vcmask 965632
    %v6572 = vsel %vm6571, %v6570, %v5681
    %vm6573 = vcmask 982016
    %v6574 = vsel %vm6573, %v6572, %v5685
    %vm6575 = vcmask 998400
    %v6576 = vsel %vm6575, %v6574, %v5689
    %vm6577 = vcmask 1014784
    %v6578 = vsel %vm6577, %v6576, %v5693
    %vm6579 = vcmask 1031168
    %v6580 = vsel %vm6579, %v6578, %v5697
    %v6581 = vsel %vm6455, %v2311, %v5701
    %v6582 = vsel %vm6457, %v6581, %v5705
    %v6583 = vsel %vm6459, %v6582, %v5709
    %v6584 = vsel %vm6461, %v6583, %v5713
    %v6585 = vsel %vm6463, %v6584, %v5717
    %v6586 = vsel %vm6465, %v6585, %v5721
    %v6587 = vsel %vm6467, %v6586, %v5725
    %v6588 = vsel %vm6469, %v6587, %v5729
    %v6589 = vsel %vm6471, %v6588, %v5733
    %v6590 = vsel %vm6473, %v6589, %v5737
    %v6591 = vsel %vm6475, %v6590, %v5741
    %v6592 = vsel %vm6477, %v6591, %v5745
    %v6593 = vsel %vm6479, %v6592, %v5749
    %v6594 = vsel %vm6481, %v6593, %v5753
    %v6595 = vsel %vm6483, %v6594, %v5757
    %v6596 = vsel %vm6485, %v6595, %v5761
    %v6597 = vsel %vm6487, %v6596, %v5765
    %v6598 = vsel %vm6489, %v6597, %v5769
    %v6599 = vsel %vm6491, %v6598, %v5773
    %v6600 = vsel %vm6493, %v6599, %v5777
    %v6601 = vsel %vm6495, %v6600, %v5781
    %v6602 = vsel %vm6497, %v6601, %v5785
    %v6603 = vsel %vm6499, %v6602, %v5789
    %v6604 = vsel %vm6501, %v6603, %v5793
    %v6605 = vsel %vm6503, %v6604, %v5797
    %v6606 = vsel %vm6505, %v6605, %v5801
    %v6607 = vsel %vm6507, %v6606, %v5805
    %v6608 = vsel %vm6509, %v6607, %v5809
    %v6609 = vsel %vm6511, %v6608, %v5813
    %v6610 = vsel %vm6513, %v6609, %v5817
    %v6611 = vsel %vm6515, %v6610, %v5821
    %v6612 = vsel %vm6517, %v6611, %v5825
    %v6613 = vsel %vm6519, %v6612, %v5829
    %v6614 = vsel %vm6521, %v6613, %v5833
    %v6615 = vsel %vm6523, %v6614, %v5837
    %v6616 = vsel %vm6525, %v6615, %v5841
    %v6617 = vsel %vm6527, %v6616, %v5845
    %v6618 = vsel %vm6529, %v6617, %v5849
    %v6619 = vsel %vm6531, %v6618, %v5853
    %v6620 = vsel %vm6533, %v6619, %v5857
    %v6621 = vsel %vm6535, %v6620, %v5861
    %v6622 = vsel %vm6537, %v6621, %v5865
    %v6623 = vsel %vm6539, %v6622, %v5869
    %v6624 = vsel %vm6541, %v6623, %v5873
    %v6625 = vsel %vm6543, %v6624, %v5877
    %v6626 = vsel %vm6545, %v6625, %v5881
    %v6627 = vsel %vm6547, %v6626, %v5885
    %v6628 = vsel %vm6549, %v6627, %v5889
    %v6629 = vsel %vm6551, %v6628, %v5893
    %v6630 = vsel %vm6553, %v6629, %v5897
    %v6631 = vsel %vm6555, %v6630, %v5901
    %v6632 = vsel %vm6557, %v6631, %v5905
    %v6633 = vsel %vm6559, %v6632, %v5909
    %v6634 = vsel %vm6561, %v6633, %v5913
    %v6635 = vsel %vm6563, %v6634, %v5917
    %v6636 = vsel %vm6565, %v6635, %v5921
    %v6637 = vsel %vm6567, %v6636, %v5925
    %v6638 = vsel %vm6569, %v6637, %v5929
    %v6639 = vsel %vm6571, %v6638, %v5933
    %v6640 = vsel %vm6573, %v6639, %v5937
    %v6641 = vsel %vm6575, %v6640, %v5941
    %v6642 = vsel %vm6577, %v6641, %v5945
    %v6643 = vsel %vm6579, %v6642, %v5949
    %v6644 = vsel %vm6455, %v3399, %v5953
    %v6645 = vsel %vm6457, %v6644, %v5957
    %v6646 = vsel %vm6459, %v6645, %v5961
    %v6647 = vsel %vm6461, %v6646, %v5965
    %v6648 = vsel %vm6463, %v6647, %v5969
    %v6649 = vsel %vm6465, %v6648, %v5973
    %v6650 = vsel %vm6467, %v6649, %v5977
    %v6651 = vsel %vm6469, %v6650, %v5981
    %v6652 = vsel %vm6471, %v6651, %v5985
    %v6653 = vsel %vm6473, %v6652, %v5989
    %v6654 = vsel %vm6475, %v6653, %v5993
    %v6655 = vsel %vm6477, %v6654, %v5997
    %v6656 = vsel %vm6479, %v6655, %v6001
    %v6657 = vsel %vm6481, %v6656, %v6005
    %v6658 = vsel %vm6483, %v6657, %v6009
    %v6659 = vsel %vm6485, %v6658, %v6013
    %v6660 = vsel %vm6487, %v6659, %v6017
    %v6661 = vsel %vm6489, %v6660, %v6021
    %v6662 = vsel %vm6491, %v6661, %v6025
    %v6663 = vsel %vm6493, %v6662, %v6029
    %v6664 = vsel %vm6495, %v6663, %v6033
    %v6665 = vsel %vm6497, %v6664, %v6037
    %v6666 = vsel %vm6499, %v6665, %v6041
    %v6667 = vsel %vm6501, %v6666, %v6045
    %v6668 = vsel %vm6503, %v6667, %v6049
    %v6669 = vsel %vm6505, %v6668, %v6053
    %v6670 = vsel %vm6507, %v6669, %v6057
    %v6671 = vsel %vm6509, %v6670, %v6061
    %v6672 = vsel %vm6511, %v6671, %v6065
    %v6673 = vsel %vm6513, %v6672, %v6069
    %v6674 = vsel %vm6515, %v6673, %v6073
    %v6675 = vsel %vm6517, %v6674, %v6077
    %v6676 = vsel %vm6519, %v6675, %v6081
    %v6677 = vsel %vm6521, %v6676, %v6085
    %v6678 = vsel %vm6523, %v6677, %v6089
    %v6679 = vsel %vm6525, %v6678, %v6093
    %v6680 = vsel %vm6527, %v6679, %v6097
    %v6681 = vsel %vm6529, %v6680, %v6101
    %v6682 = vsel %vm6531, %v6681, %v6105
    %v6683 = vsel %vm6533, %v6682, %v6109
    %v6684 = vsel %vm6535, %v6683, %v6113
    %v6685 = vsel %vm6537, %v6684, %v6117
    %v6686 = vsel %vm6539, %v6685, %v6121
    %v6687 = vsel %vm6541, %v6686, %v6125
    %v6688 = vsel %vm6543, %v6687, %v6129
    %v6689 = vsel %vm6545, %v6688, %v6133
    %v6690 = vsel %vm6547, %v6689, %v6137
    %v6691 = vsel %vm6549, %v6690, %v6141
    %v6692 = vsel %vm6551, %v6691, %v6145
    %v6693 = vsel %vm6553, %v6692, %v6149
    %v6694 = vsel %vm6555, %v6693, %v6153
    %v6695 = vsel %vm6557, %v6694, %v6157
    %v6696 = vsel %vm6559, %v6695, %v6161
    %v6697 = vsel %vm6561, %v6696, %v6165
    %v6698 = vsel %vm6563, %v6697, %v6169
    %v6699 = vsel %vm6565, %v6698, %v6173
    %v6700 = vsel %vm6567, %v6699, %v6177
    %v6701 = vsel %vm6569, %v6700, %v6181
    %v6702 = vsel %vm6571, %v6701, %v6185
    %v6703 = vsel %vm6573, %v6702, %v6189
    %v6704 = vsel %vm6575, %v6703, %v6193
    %v6705 = vsel %vm6577, %v6704, %v6197
    %v6706 = vsel %vm6579, %v6705, %v6201
    %v6707 = vsel %vm6455, %v4487, %v6205
    %v6708 = vsel %vm6457, %v6707, %v6209
    %v6709 = vsel %vm6459, %v6708, %v6213
    %v6710 = vsel %vm6461, %v6709, %v6217
    %v6711 = vsel %vm6463, %v6710, %v6221
    %v6712 = vsel %vm6465, %v6711, %v6225
    %v6713 = vsel %vm6467, %v6712, %v6229
    %v6714 = vsel %vm6469, %v6713, %v6233
    %v6715 = vsel %vm6471, %v6714, %v6237
    %v6716 = vsel %vm6473, %v6715, %v6241
    %v6717 = vsel %vm6475, %v6716, %v6245
    %v6718 = vsel %vm6477, %v6717, %v6249
    %v6719 = vsel %vm6479, %v6718, %v6253
    %v6720 = vsel %vm6481, %v6719, %v6257
    %v6721 = vsel %vm6483, %v6720, %v6261
    %v6722 = vsel %vm6485, %v6721, %v6265
    %v6723 = vsel %vm6487, %v6722, %v6269
    %v6724 = vsel %vm6489, %v6723, %v6273
    %v6725 = vsel %vm6491, %v6724, %v6277
    %v6726 = vsel %vm6493, %v6725, %v6281
    %v6727 = vsel %vm6495, %v6726, %v6285
    %v6728 = vsel %vm6497, %v6727, %v6289
    %v6729 = vsel %vm6499, %v6728, %v6293
    %v6730 = vsel %vm6501, %v6729, %v6297
    %v6731 = vsel %vm6503, %v6730, %v6301
    %v6732 = vsel %vm6505, %v6731, %v6305
    %v6733 = vsel %vm6507, %v6732, %v6309
    %v6734 = vsel %vm6509, %v6733, %v6313
    %v6735 = vsel %vm6511, %v6734, %v6317
    %v6736 = vsel %vm6513, %v6735, %v6321
    %v6737 = vsel %vm6515, %v6736, %v6325
    %v6738 = vsel %vm6517, %v6737, %v6329
    %v6739 = vsel %vm6519, %v6738, %v6333
    %v6740 = vsel %vm6521, %v6739, %v6337
    %v6741 = vsel %vm6523, %v6740, %v6341
    %v6742 = vsel %vm6525, %v6741, %v6345
    %v6743 = vsel %vm6527, %v6742, %v6349
    %v6744 = vsel %vm6529, %v6743, %v6353
    %v6745 = vsel %vm6531, %v6744, %v6357
    %v6746 = vsel %vm6533, %v6745, %v6361
    %v6747 = vsel %vm6535, %v6746, %v6365
    %v6748 = vsel %vm6537, %v6747, %v6369
    %v6749 = vsel %vm6539, %v6748, %v6373
    %v6750 = vsel %vm6541, %v6749, %v6377
    %v6751 = vsel %vm6543, %v6750, %v6381
    %v6752 = vsel %vm6545, %v6751, %v6385
    %v6753 = vsel %vm6547, %v6752, %v6389
    %v6754 = vsel %vm6549, %v6753, %v6393
    %v6755 = vsel %vm6551, %v6754, %v6397
    %v6756 = vsel %vm6553, %v6755, %v6401
    %v6757 = vsel %vm6555, %v6756, %v6405
    %v6758 = vsel %vm6557, %v6757, %v6409
    %v6759 = vsel %vm6559, %v6758, %v6413
    %v6760 = vsel %vm6561, %v6759, %v6417
    %v6761 = vsel %vm6563, %v6760, %v6421
    %v6762 = vsel %vm6565, %v6761, %v6425
    %v6763 = vsel %vm6567, %v6762, %v6429
    %v6764 = vsel %vm6569, %v6763, %v6433
    %v6765 = vsel %vm6571, %v6764, %v6437
    %v6766 = vsel %vm6573, %v6765, %v6441
    %v6767 = vsel %vm6575, %v6766, %v6445
    %v6768 = vsel %vm6577, %v6767, %v6449
    %v6769 = vsel %vm6579, %v6768, %v6453
    %6770 = vst [vmem:[#allocation5] sm:$0xff] %v6580
    %6771 = vst [vmem:[#allocation5 + $0x8] sm:$0xff] %v6643
    %6772 = vst [vmem:[#allocation5 + $0x10] sm:$0xff] %v6706
    %6773 = vst [vmem:[#allocation5 + $0x18] sm:$0xff] %v6769
    // Predicated region
    $region10: #{tpu_custom_call.1} parent=1 // pred_check
      _
    $region11: #{tpu_custom_call.1} parent=1 // pred_check_branch
      %6775 = sbr.rel (0) target = $region13
    $region12: #{tpu_custom_call.1} parent=1 // pred_region
      %s6777 = ssub.s32 512, 512
      %6778 = vsyncadd [#allocation4], %s6777
      %s6780 = sshll.u32 [#allocation5], 4
      %s6781 = int_to_ptr.vmem [resolvable:$true] %s6780
      %6783 = dma.vmem_to_hbm [thread:$0]  %s6781, 512, %s1, [#allocation4]
    $region13: #{tpu_custom_call.1} parent=1 // pred_fallthru
      _
    // Predicated region
    $region14: #{tpu_custom_call.1} parent=1 // pred_check
      _
    $region15: #{tpu_custom_call.1} parent=1 // pred_check_branch
      %6785 = sbr.rel (0) target = $region17
    $region16: #{tpu_custom_call.1} parent=1 // pred_region
      %6786 = dma.done [#allocation4], 512
    $region17: #{tpu_custom_call.1} parent=1 // pred_fallthru
      _
    %6787 = vsyncpa [#allocation3], 1
    %6788 = vsyncpa [#allocation4], 1

</llo_original>
